<compile_context>
chip_gen: v6e
topology: v6e:2x2x1
jax: 0.10.0
libtpu: 0.0.40
codegen_flags: <defaults>
</compile_context>

<pallas_src>
import functools

import jax
import jax.numpy as jnp
from jax.experimental import pallas as pl
from jax.experimental.pallas import tpu as pltpu


# ----------------------------- fused kernel --------------------------------
def _fused_forward_kernel(x_ref, w1_ref, b1_ref, w2_ref, b2_ref,
                          w3_ref, b3_ref, wfc_ref, bfc_ref, o_ref, im2_ref,
                          *, L, num_valid):
    # x_ref:   (1, Cin_p, Nb*L)  Nb lane-concatenated samples; channels on
    #                            sublanes, (length x batch) on lanes.
    # w*_ref:  (Cout, K*Cin)     flattened conv taps (f32).
    # b*_ref:  (Cout, 1)
    # wfc_ref: (C3*L, HP)        fc1 weight, bf16, HP = 128 (zero padded).
    # bfc_ref: (1, HP)           f32
    # o_ref:   (1, Nb, HP)       softmax probabilities (padded lanes = 0).
    # im2_ref: (K1*Cin_p, Nb*L)  f32 VMEM scratch for the im2col slabs.
    NbL = x_ref.shape[2]
    Nb = NbL // L
    HP = o_ref.shape[2]

    # Lane index within a sample, hoisted once and reused for every tap mask.
    lane_in_sample = jax.lax.broadcasted_iota(jnp.int32, (1, NbL), 1) % L

    def shifted(v, delta):
        # y[:, n*L + l] = v[:, n*L + l + delta] if 0 <= l+delta < L else 0
        # ('same' padding, applied independently per lane-packed sample).
        if delta == 0:
            return v
        rolled = pltpu.roll(v, (-delta) % NbL, axis=1)       # XLU lane rotate
        if delta > 0:
            m = lane_in_sample < (L - delta)
        else:
            m = lane_in_sample >= (-delta)
        return jnp.where(m, rolled, 0.0)

    def conv_relu(v, w_ref_, b_ref_):
        # v: (Cin, Nb*L) -> (Cout, Nb*L); one im2col matmul per layer, with
        # the shifted taps staged through the VMEM scratch (bounds vregs).
        cin = v.shape[0]
        ksize = w_ref_.shape[1] // cin
        pad = (ksize - 1) // 2
        for k in range(ksize):
            im2_ref[k * cin:(k + 1) * cin, :] = shifted(v, k - pad)
        h = jnp.dot(w_ref_[...], im2_ref[0:ksize * cin, :],
                    preferred_element_type=jnp.float32)       # (Cout, Nb*L)
        return jnp.maximum(h + b_ref_[...], 0.0)

    x = x_ref[0]                                    # (Cin_p, Nb*L)
    a1 = conv_relu(x, w1_ref, b1_ref)               # (8,  Nb*L)
    a2 = conv_relu(a1, w2_ref, b2_ref)              # (16, Nb*L)
    a3 = conv_relu(a2, w3_ref, b3_ref)              # (32, Nb*L)

    # fc1: PyTorch's x.view(B, -1) flattens (C, L) channel-major, so sample
    # n's flat row is [a3[0, nL:(n+1)L] | a3[1, nL:(n+1)L] | ...].  Re-layout
    # in 8-channel groups and contract each (Nb, 8L) block against its
    # (8L, HP) weight slab: 4 pipelined K=1024 MXU matmuls (bf16 x bf16 ->
    # f32) instead of 32 serialized M=1 dots.
    c3 = a3.shape[0]
    group = 8
    y = bfc_ref[...]                                # (1, HP), broadcasts to Nb
    for g0 in range(0, c3, group):
        cols = []
        for c in range(g0, g0 + group):
            row = a3[c:c + 1, :]                    # (1, Nb*L)
            cols.append(jnp.concatenate(
                [row[:, n * L:(n + 1) * L] for n in range(Nb)], axis=0))
        blk = jnp.concatenate(cols, axis=1)         # (Nb, group*L)
        y = y + jnp.dot(blk.astype(wfc_ref.dtype),
                        wfc_ref[g0 * L:(g0 + group) * L, :],
                        preferred_element_type=jnp.float32)
    y = jnp.maximum(y, 0.0)                         # relu, (Nb, HP)

    # Softmax over the first num_valid lanes.  Padded lanes hold relu(0)=0,
    # never exceeding the row max, so only their exp contribution is zeroed.
    m = jnp.max(y, axis=-1, keepdims=True)
    e = jnp.exp(y - m)
    lane_hp = jax.lax.broadcasted_iota(jnp.int32, (1, HP), 1)
    e = jnp.where(lane_hp < num_valid, e, 0.0)
    s = jnp.sum(e, axis=-1, keepdims=True)
    o_ref[0] = e * pl.reciprocal(s, approx=True)    # EUP reciprocal


# ------------------------------ forward -------------------------------------
@functools.partial(jax.jit, static_argnames=("num_out", "block_batch"))
def simple1dconvnet_forward(x_ncl, params, *, num_out, block_batch=2):
    # x_ncl: (N, C_in, L) as in PyTorch.
    N, cin, L = x_ncl.shape
    Nb = block_batch if N % block_batch == 0 else 1   # samples per grid step
    cin_p = ((cin + 7) // 8) * 8                      # 23 -> 24 (sublanes)

    # Pad channels, then lane-concatenate Nb samples per grid step:
    # xp[g, c, n*L + l] = x[g*Nb + n, c, l].
    xp = jnp.pad(x_ncl, ((0, 0), (0, cin_p - cin), (0, 0)))
    xp = xp.reshape(N // Nb, Nb, cin_p, L).transpose(0, 2, 1, 3)
    xp = xp.reshape(N // Nb, cin_p, Nb * L)

    w1f, b1c = params["w1f"], params["b1c"]
    w2f, b2c = params["w2f"], params["b2c"]
    w3f, b3c = params["w3f"], params["b3c"]
    wfc, fbc = params["wfc2d"], params["fbc"]
    HP = wfc.shape[1]
    assert w1f.shape[1] % cin_p == 0

    kernel = functools.partial(_fused_forward_kernel, L=L, num_valid=num_out)
    im2_rows = max(w1f.shape[1], w2f.shape[1], w3f.shape[1])

    out = pl.pallas_call(
        kernel,
        out_shape=jax.ShapeDtypeStruct((N // Nb, Nb, HP), jnp.float32),
        grid=(N // Nb,),
        in_specs=[
            pl.BlockSpec((1, cin_p, Nb * L), lambda g: (g, 0, 0)),
            pl.BlockSpec(w1f.shape, lambda g: (0, 0)),
            pl.BlockSpec(b1c.shape, lambda g: (0, 0)),
            pl.BlockSpec(w2f.shape, lambda g: (0, 0)),
            pl.BlockSpec(b2c.shape, lambda g: (0, 0)),
            pl.BlockSpec(w3f.shape, lambda g: (0, 0)),
            pl.BlockSpec(b3c.shape, lambda g: (0, 0)),
            pl.BlockSpec(wfc.shape, lambda g: (0, 0)),
            pl.BlockSpec(fbc.shape, lambda g: (0, 0)),
        ],
        out_specs=pl.BlockSpec((1, Nb, HP), lambda g: (g, 0, 0)),
        scratch_shapes=[pltpu.VMEM((im2_rows, Nb * L), jnp.float32)],
        compiler_params=pltpu.CompilerParams(
            dimension_semantics=("parallel",),
            vmem_limit_bytes=32 * 1024 * 1024,
        ),
    )(xp, w1f, b1c, w2f, b2c, w3f, b3c, wfc, fbc)

    return out.reshape(N, HP)[:, :num_out]


# --------------------- one-time weight pre-formatting ----------------------
def prepare_params(raw, L, lane=128, sub=8):
    """Reformat PyTorch-layout params once (outside the forward)."""
    w1, b1 = raw["w1"], raw["b1"]          # (C1, Cin, K), (C1,)
    w2, b2 = raw["w2"], raw["b2"]
    w3, b3 = raw["w3"], raw["b3"]
    fw1, fb1 = raw["fw1"], raw["fb1"]      # (H, C3*L), (H,)

    def flat_conv_w(w, cin_pad):
        cout, cin, k = w.shape
        wp = jnp.pad(w, ((0, 0), (0, cin_pad - cin), (0, 0)))
        # im2col row index is k*cin_pad + ci  ->  (Cout, K*Cin_pad)
        return jnp.transpose(wp, (0, 2, 1)).reshape(cout, k * cin_pad)

    c1, cin, _ = w1.shape
    c2 = w2.shape[0]
    c3 = w3.shape[0]
    cin_p = ((cin + sub - 1) // sub) * sub

    H = fw1.shape[0]
    HP = ((H + lane - 1) // lane) * lane
    assert fw1.shape[1] == c3 * L

    # fc1 weight: (H, C3*L) -> (C3*L, HP) bf16 (zero-padded output lanes).
    # bf16 halves the dominant HBM stream; matmuls accumulate in f32.
    wfc2d = jnp.transpose(jnp.pad(fw1, ((0, HP - H), (0, 0))))
    wfc2d = wfc2d.astype(jnp.bfloat16)                      # (C3*L, HP)
    fbc = jnp.pad(fb1, (0, HP - H)).reshape(1, HP)          # f32

    return {
        "w1f": flat_conv_w(w1, cin_p), "b1c": b1.reshape(c1, 1),
        "w2f": flat_conv_w(w2, c1),    "b2c": b2.reshape(c2, 1),
        "w3f": flat_conv_w(w3, c2),    "b3c": b3.reshape(c3, 1),
        "wfc2d": wfc2d, "fbc": fbc,
    }


# ----------------------------- initialization -------------------------------
def init_raw_params(key, in_c, c1, c2, c3, L, hidden):
    ks = jax.random.split(key, 8)

    def conv_init(kw, kb, cout, cin, ksz):
        bound = 1.0 / jnp.sqrt(jnp.float32(cin * ksz))
        w = jax.random.uniform(kw, (cout, cin, ksz), jnp.float32, -bound, bound)
        b = jax.random.uniform(kb, (cout,), jnp.float32, -bound, bound)
        return w, b

    w1, b1 = conv_init(ks[0], ks[1], c1, in_c, 11)
    w2, b2 = conv_init(ks[2], ks[3], c2, c1, 11)
    w3, b3 = conv_init(ks[4], ks[5], c3, c2, 3)
    fan_in = c3 * L
    bound = 1.0 / jnp.sqrt(jnp.float32(fan_in))
    fw1 = jax.random.uniform(ks[6], (hidden, fan_in), jnp.float32, -bound, bound)
    fb1 = jax.random.uniform(ks[7], (hidden,), jnp.float32, -bound, bound)
    return {"w1": w1, "b1": b1, "w2": w2, "b2": b2, "w3": w3, "b3": b3,
            "fw1": fw1, "fb1": fb1}


# ------------------------- pure-JAX reference (check) -----------------------
def _reference_forward(x, raw):
    hp = jax.lax.Precision.HIGHEST

    def conv1d_same(v, w, b):
        K = w.shape[2]
        pad = (K - 1) // 2
        L = v.shape[2]
        vp = jnp.pad(v, ((0, 0), (0, 0), (pad, pad)))
        out = jnp.zeros((v.shape[0], w.shape[0], L), jnp.float32)
        for k in range(K):
            out = out + jnp.einsum("ncl,oc->nol", vp[:, :, k:k + L],
                                   w[:, :, k], precision=hp)
        return jax.nn.relu(out + b[None, :, None])

    h = conv1d_same(x, raw["w1"], raw["b1"])
    h = conv1d_same(h, raw["w2"], raw["b2"])
    h = conv1d_same(h, raw["w3"], raw["b3"])
    flat = h.reshape(h.shape[0], -1)                     # NCL-order flatten
    y = jnp.dot(flat, raw["fw1"].T, precision=hp) + raw["fb1"]
    return jax.nn.softmax(jax.nn.relu(y), axis=1)


# --------------------------------- main --------------------------------------
if __name__ == "__main__":
    # Small shapes consistent with the module (signal_length shrunk 1000->128).
    N, in_c, L = 2, 23, 128
    c1, c2, c3 = 8, 16, 32
    hidden = 100

    key = jax.random.PRNGKey(0)
    kx, kp = jax.random.split(key)
    x = jax.random.normal(kx, (N, in_c, L), dtype=jnp.float32)

    raw = init_raw_params(kp, in_c, c1, c2, c3, L, hidden)
    params = prepare_params(raw, L)            # one-time, outside the forward

    out = simple1dconvnet_forward(x, params, num_out=hidden)
    out = jax.block_until_ready(out)

    assert out.shape == (N, hidden), out.shape
    # softmax rows sum to 1 (approx reciprocal -> slightly looser tolerance)
    assert bool(jnp.allclose(jnp.sum(out, axis=1), 1.0, atol=5e-3))
    # matches a high-precision pure-JAX reference (bf16 fc1 weight in-kernel)
    ref = _reference_forward(x, raw)
    assert bool(jnp.allclose(out, ref, atol=2e-3)), \
        float(jnp.max(jnp.abs(out - ref)))
    print("KERNEL_OK")
</pallas_src>

<mosaic_0001>
module attributes {stable_mosaic.version = 11 : i64} {
  func.func @_fused_forward_kernel(%arg0: i32, %arg1: memref<1x24x256xf32, #tpu.memory_space<vmem>>, %arg2: memref<8x264xf32, #tpu.memory_space<vmem>>, %arg3: memref<8x1xf32, #tpu.memory_space<vmem>>, %arg4: memref<16x88xf32, #tpu.memory_space<vmem>>, %arg5: memref<16x1xf32, #tpu.memory_space<vmem>>, %arg6: memref<32x48xf32, #tpu.memory_space<vmem>>, %arg7: memref<32x1xf32, #tpu.memory_space<vmem>>, %arg8: memref<4096x128xbf16, #tpu.memory_space<vmem>>, %arg9: memref<1x128xf32, #tpu.memory_space<vmem>>, %arg10: memref<1x2x128xf32, #tpu.memory_space<vmem>>, %arg11: memref<264x256xf32, #tpu.memory_space<vmem>>) attributes {dimension_semantics = [#tpu.dimension_semantics<parallel>], iteration_bounds = array<i64: 1>, scalar_prefetch = 0 : i64, scratch_operands = 1 : i64, tpu.core_type = #tpu.core_type<tc>, window_params = [{transform_indices = @transform_0, window_bounds = array<i64: 1, 24, 256>}, {pipeline_mode = #tpu.pipeline_mode<synchronous>, transform_indices = @transform_1, window_bounds = array<i64: 8, 264>}, {pipeline_mode = #tpu.pipeline_mode<synchronous>, transform_indices = @transform_2, window_bounds = array<i64: 8, 1>}, {pipeline_mode = #tpu.pipeline_mode<synchronous>, transform_indices = @transform_3, window_bounds = array<i64: 16, 88>}, {pipeline_mode = #tpu.pipeline_mode<synchronous>, transform_indices = @transform_4, window_bounds = array<i64: 16, 1>}, {pipeline_mode = #tpu.pipeline_mode<synchronous>, transform_indices = @transform_5, window_bounds = array<i64: 32, 48>}, {pipeline_mode = #tpu.pipeline_mode<synchronous>, transform_indices = @transform_6, window_bounds = array<i64: 32, 1>}, {pipeline_mode = #tpu.pipeline_mode<synchronous>, transform_indices = @transform_7, window_bounds = array<i64: 4096, 128>}, {pipeline_mode = #tpu.pipeline_mode<synchronous>, transform_indices = @transform_8, window_bounds = array<i64: 1, 128>}, {transform_indices = @transform_9, window_bounds = array<i64: 1, 2, 128>}]} {
    %0 = tpu.iota {dimensions = array<i32: 1>} : vector<1x256xi32>
    %c128_i32 = arith.constant 128 : i32
    %c0_i32 = arith.constant 0 : i32
    %1 = arith.cmpi eq, %c128_i32, %c0_i32 : i32
    %c1_i32 = arith.constant 1 : i32
    %2 = arith.select %1, %c1_i32, %c128_i32 : i32
    %3 = vector.broadcast %2 : i32 to vector<1x256xi32>
    %4 = arith.remsi %0, %3 : vector<1x256xi32>
    %c0_i32_0 = arith.constant 0 : i32
    %5 = vector.broadcast %c0_i32_0 : i32 to vector<1x256xi32>
    %6 = arith.cmpi ne, %4, %5 : vector<1x256xi32>
    %c0_i32_1 = arith.constant 0 : i32
    %7 = vector.broadcast %c0_i32_1 : i32 to vector<1x256xi32>
    %8 = arith.cmpi slt, %4, %7 : vector<1x256xi32>
    %c0_i32_2 = arith.constant 0 : i32
    %9 = arith.cmpi slt, %2, %c0_i32_2 : i32
    %10 = vector.broadcast %9 : i1 to vector<1x256xi1>
    %11 = vector.broadcast %10 : vector<1x256xi1> to vector<1x256xi1>
    %12 = arith.xori %8, %11 : vector<1x256xi1>
    %13 = arith.andi %12, %6 : vector<1x256xi1>
    %14 = vector.broadcast %2 : i32 to vector<1x256xi32>
    %15 = arith.addi %4, %14 : vector<1x256xi32>
    %16 = arith.select %13, %15, %4 : vector<1x256xi1>, vector<1x256xi32>
    %c0 = arith.constant 0 : index
    %c0_3 = arith.constant 0 : index
    %c0_4 = arith.constant 0 : index
    %17 = vector.load %arg1[%c0, %c0_3, %c0_4] : memref<1x24x256xf32, #tpu.memory_space<vmem>>, vector<1x24x256xf32>
    %18 = vector.shape_cast %17 : vector<1x24x256xf32> to vector<24x256xf32>
    %c5_i32 = arith.constant 5 : i32
    %19 = tpu.dynamic_rotate %18 by %c5_i32 dim 1 : vector<24x256xf32>, i32 -> vector<24x256xf32>
    %c5_i32_5 = arith.constant 5 : i32
    %20 = vector.broadcast %c5_i32_5 : i32 to vector<1x256xi32>
    %21 = arith.cmpi sge, %16, %20 : vector<1x256xi32>
    %cst = arith.constant 0.000000e+00 : f32
    %22 = vector.shape_cast %21 : vector<1x256xi1> to vector<1x256xi1>
    %23 = vector.broadcast %22 : vector<1x256xi1> to vector<24x256xi1>
    %24 = vector.broadcast %cst : f32 to vector<24x256xf32>
    %25 = arith.select %23, %19, %24 : vector<24x256xi1>, vector<24x256xf32>
    %c0_6 = arith.constant 0 : index
    %c0_7 = arith.constant 0 : index
    %26 = vector.load %arg11[%c0_6, %c0_7] : memref<264x256xf32, #tpu.memory_space<vmem>>, vector<24x256xf32>
    tpu.vector_store %arg11[%c0_6, %c0_7], %25 {strides = array<i32>} : memref<264x256xf32, #tpu.memory_space<vmem>>, vector<24x256xf32>,
    %c4_i32 = arith.constant 4 : i32
    %27 = tpu.dynamic_rotate %18 by %c4_i32 dim 1 : vector<24x256xf32>, i32 -> vector<24x256xf32>
    %c4_i32_8 = arith.constant 4 : i32
    %28 = vector.broadcast %c4_i32_8 : i32 to vector<1x256xi32>
    %29 = arith.cmpi sge, %16, %28 : vector<1x256xi32>
    %cst_9 = arith.constant 0.000000e+00 : f32
    %30 = vector.shape_cast %29 : vector<1x256xi1> to vector<1x256xi1>
    %31 = vector.broadcast %30 : vector<1x256xi1> to vector<24x256xi1>
    %32 = vector.broadcast %cst_9 : f32 to vector<24x256xf32>
    %33 = arith.select %31, %27, %32 : vector<24x256xi1>, vector<24x256xf32>
    %c24 = arith.constant 24 : index
    %c0_10 = arith.constant 0 : index
    %34 = vector.load %arg11[%c24, %c0_10] : memref<264x256xf32, #tpu.memory_space<vmem>>, vector<24x256xf32>
    tpu.vector_store %arg11[%c24, %c0_10], %33 {strides = array<i32>} : memref<264x256xf32, #tpu.memory_space<vmem>>, vector<24x256xf32>,
    %c3_i32 = arith.constant 3 : i32
    %35 = tpu.dynamic_rotate %18 by %c3_i32 dim 1 : vector<24x256xf32>, i32 -> vector<24x256xf32>
    %c3_i32_11 = arith.constant 3 : i32
    %36 = vector.broadcast %c3_i32_11 : i32 to vector<1x256xi32>
    %37 = arith.cmpi sge, %16, %36 : vector<1x256xi32>
    %cst_12 = arith.constant 0.000000e+00 : f32
    %38 = vector.shape_cast %37 : vector<1x256xi1> to vector<1x256xi1>
    %39 = vector.broadcast %38 : vector<1x256xi1> to vector<24x256xi1>
    %40 = vector.broadcast %cst_12 : f32 to vector<24x256xf32>
    %41 = arith.select %39, %35, %40 : vector<24x256xi1>, vector<24x256xf32>
    %c48 = arith.constant 48 : index
    %c0_13 = arith.constant 0 : index
    %42 = vector.load %arg11[%c48, %c0_13] : memref<264x256xf32, #tpu.memory_space<vmem>>, vector<24x256xf32>
    tpu.vector_store %arg11[%c48, %c0_13], %41 {strides = array<i32>} : memref<264x256xf32, #tpu.memory_space<vmem>>, vector<24x256xf32>,
    %c2_i32 = arith.constant 2 : i32
    %43 = tpu.dynamic_rotate %18 by %c2_i32 dim 1 : vector<24x256xf32>, i32 -> vector<24x256xf32>
    %c2_i32_14 = arith.constant 2 : i32
    %44 = vector.broadcast %c2_i32_14 : i32 to vector<1x256xi32>
    %45 = arith.cmpi sge, %16, %44 : vector<1x256xi32>
    %cst_15 = arith.constant 0.000000e+00 : f32
    %46 = vector.shape_cast %45 : vector<1x256xi1> to vector<1x256xi1>
    %47 = vector.broadcast %46 : vector<1x256xi1> to vector<24x256xi1>
    %48 = vector.broadcast %cst_15 : f32 to vector<24x256xf32>
    %49 = arith.select %47, %43, %48 : vector<24x256xi1>, vector<24x256xf32>
    %c72 = arith.constant 72 : index
    %c0_16 = arith.constant 0 : index
    %50 = vector.load %arg11[%c72, %c0_16] : memref<264x256xf32, #tpu.memory_space<vmem>>, vector<24x256xf32>
    tpu.vector_store %arg11[%c72, %c0_16], %49 {strides = array<i32>} : memref<264x256xf32, #tpu.memory_space<vmem>>, vector<24x256xf32>,
    %c1_i32_17 = arith.constant 1 : i32
    %51 = tpu.dynamic_rotate %18 by %c1_i32_17 dim 1 : vector<24x256xf32>, i32 -> vector<24x256xf32>
    %c1_i32_18 = arith.constant 1 : i32
    %52 = vector.broadcast %c1_i32_18 : i32 to vector<1x256xi32>
    %53 = arith.cmpi sge, %16, %52 : vector<1x256xi32>
    %cst_19 = arith.constant 0.000000e+00 : f32
    %54 = vector.shape_cast %53 : vector<1x256xi1> to vector<1x256xi1>
    %55 = vector.broadcast %54 : vector<1x256xi1> to vector<24x256xi1>
    %56 = vector.broadcast %cst_19 : f32 to vector<24x256xf32>
    %57 = arith.select %55, %51, %56 : vector<24x256xi1>, vector<24x256xf32>
    %c96 = arith.constant 96 : index
    %c0_20 = arith.constant 0 : index
    %58 = vector.load %arg11[%c96, %c0_20] : memref<264x256xf32, #tpu.memory_space<vmem>>, vector<24x256xf32>
    tpu.vector_store %arg11[%c96, %c0_20], %57 {strides = array<i32>} : memref<264x256xf32, #tpu.memory_space<vmem>>, vector<24x256xf32>,
    %c120 = arith.constant 120 : index
    %c0_21 = arith.constant 0 : index
    %59 = vector.load %arg11[%c120, %c0_21] : memref<264x256xf32, #tpu.memory_space<vmem>>, vector<24x256xf32>
    tpu.vector_store %arg11[%c120, %c0_21], %18 {strides = array<i32>} : memref<264x256xf32, #tpu.memory_space<vmem>>, vector<24x256xf32>,
    %c255_i32 = arith.constant 255 : i32
    %60 = tpu.dynamic_rotate %18 by %c255_i32 dim 1 : vector<24x256xf32>, i32 -> vector<24x256xf32>
    %c127_i32 = arith.constant 127 : i32
    %61 = vector.broadcast %c127_i32 : i32 to vector<1x256xi32>
    %62 = arith.cmpi slt, %16, %61 : vector<1x256xi32>
    %cst_22 = arith.constant 0.000000e+00 : f32
    %63 = vector.shape_cast %62 : vector<1x256xi1> to vector<1x256xi1>
    %64 = vector.broadcast %63 : vector<1x256xi1> to vector<24x256xi1>
    %65 = vector.broadcast %cst_22 : f32 to vector<24x256xf32>
    %66 = arith.select %64, %60, %65 : vector<24x256xi1>, vector<24x256xf32>
    %c144 = arith.constant 144 : index
    %c0_23 = arith.constant 0 : index
    %67 = vector.load %arg11[%c144, %c0_23] : memref<264x256xf32, #tpu.memory_space<vmem>>, vector<24x256xf32>
    tpu.vector_store %arg11[%c144, %c0_23], %66 {strides = array<i32>} : memref<264x256xf32, #tpu.memory_space<vmem>>, vector<24x256xf32>,
    %c254_i32 = arith.constant 254 : i32
    %68 = tpu.dynamic_rotate %18 by %c254_i32 dim 1 : vector<24x256xf32>, i32 -> vector<24x256xf32>
    %c126_i32 = arith.constant 126 : i32
    %69 = vector.broadcast %c126_i32 : i32 to vector<1x256xi32>
    %70 = arith.cmpi slt, %16, %69 : vector<1x256xi32>
    %cst_24 = arith.constant 0.000000e+00 : f32
    %71 = vector.shape_cast %70 : vector<1x256xi1> to vector<1x256xi1>
    %72 = vector.broadcast %71 : vector<1x256xi1> to vector<24x256xi1>
    %73 = vector.broadcast %cst_24 : f32 to vector<24x256xf32>
    %74 = arith.select %72, %68, %73 : vector<24x256xi1>, vector<24x256xf32>
    %c168 = arith.constant 168 : index
    %c0_25 = arith.constant 0 : index
    %75 = vector.load %arg11[%c168, %c0_25] : memref<264x256xf32, #tpu.memory_space<vmem>>, vector<24x256xf32>
    tpu.vector_store %arg11[%c168, %c0_25], %74 {strides = array<i32>} : memref<264x256xf32, #tpu.memory_space<vmem>>, vector<24x256xf32>,
    %c253_i32 = arith.constant 253 : i32
    %76 = tpu.dynamic_rotate %18 by %c253_i32 dim 1 : vector<24x256xf32>, i32 -> vector<24x256xf32>
    %c125_i32 = arith.constant 125 : i32
    %77 = vector.broadcast %c125_i32 : i32 to vector<1x256xi32>
    %78 = arith.cmpi slt, %16, %77 : vector<1x256xi32>
    %cst_26 = arith.constant 0.000000e+00 : f32
    %79 = vector.shape_cast %78 : vector<1x256xi1> to vector<1x256xi1>
    %80 = vector.broadcast %79 : vector<1x256xi1> to vector<24x256xi1>
    %81 = vector.broadcast %cst_26 : f32 to vector<24x256xf32>
    %82 = arith.select %80, %76, %81 : vector<24x256xi1>, vector<24x256xf32>
    %c192 = arith.constant 192 : index
    %c0_27 = arith.constant 0 : index
    %83 = vector.load %arg11[%c192, %c0_27] : memref<264x256xf32, #tpu.memory_space<vmem>>, vector<24x256xf32>
    tpu.vector_store %arg11[%c192, %c0_27], %82 {strides = array<i32>} : memref<264x256xf32, #tpu.memory_space<vmem>>, vector<24x256xf32>,
    %c252_i32 = arith.constant 252 : i32
    %84 = tpu.dynamic_rotate %18 by %c252_i32 dim 1 : vector<24x256xf32>, i32 -> vector<24x256xf32>
    %c124_i32 = arith.constant 124 : i32
    %85 = vector.broadcast %c124_i32 : i32 to vector<1x256xi32>
    %86 = arith.cmpi slt, %16, %85 : vector<1x256xi32>
    %cst_28 = arith.constant 0.000000e+00 : f32
    %87 = vector.shape_cast %86 : vector<1x256xi1> to vector<1x256xi1>
    %88 = vector.broadcast %87 : vector<1x256xi1> to vector<24x256xi1>
    %89 = vector.broadcast %cst_28 : f32 to vector<24x256xf32>
    %90 = arith.select %88, %84, %89 : vector<24x256xi1>, vector<24x256xf32>
    %c216 = arith.constant 216 : index
    %c0_29 = arith.constant 0 : index
    %91 = vector.load %arg11[%c216, %c0_29] : memref<264x256xf32, #tpu.memory_space<vmem>>, vector<24x256xf32>
    tpu.vector_store %arg11[%c216, %c0_29], %90 {strides = array<i32>} : memref<264x256xf32, #tpu.memory_space<vmem>>, vector<24x256xf32>,
    %c251_i32 = arith.constant 251 : i32
    %92 = tpu.dynamic_rotate %18 by %c251_i32 dim 1 : vector<24x256xf32>, i32 -> vector<24x256xf32>
    %c123_i32 = arith.constant 123 : i32
    %93 = vector.broadcast %c123_i32 : i32 to vector<1x256xi32>
    %94 = arith.cmpi slt, %16, %93 : vector<1x256xi32>
    %cst_30 = arith.constant 0.000000e+00 : f32
    %95 = vector.shape_cast %94 : vector<1x256xi1> to vector<1x256xi1>
    %96 = vector.broadcast %95 : vector<1x256xi1> to vector<24x256xi1>
    %97 = vector.broadcast %cst_30 : f32 to vector<24x256xf32>
    %98 = arith.select %96, %92, %97 : vector<24x256xi1>, vector<24x256xf32>
    %c240 = arith.constant 240 : index
    %c0_31 = arith.constant 0 : index
    %99 = vector.load %arg11[%c240, %c0_31] : memref<264x256xf32, #tpu.memory_space<vmem>>, vector<24x256xf32>
    tpu.vector_store %arg11[%c240, %c0_31], %98 {strides = array<i32>} : memref<264x256xf32, #tpu.memory_space<vmem>>, vector<24x256xf32>,
    %c0_32 = arith.constant 0 : index
    %c0_33 = arith.constant 0 : index
    %100 = vector.load %arg2[%c0_32, %c0_33] : memref<8x264xf32, #tpu.memory_space<vmem>>, vector<8x264xf32>
    %c0_34 = arith.constant 0 : index
    %c0_35 = arith.constant 0 : index
    %101 = vector.load %arg11[%c0_34, %c0_35] : memref<264x256xf32, #tpu.memory_space<vmem>>, vector<264x256xf32>
    %cst_36 = arith.constant dense<0.000000e+00> : vector<8x256xf32>
    %102 = tpu.matmul %100, %101, %cst_36 {dimension_numbers = #tpu.dot_dimension_numbers<[1], [0], [0], [1], [0, 0, 1, 1], [], []>} : vector<8x264xf32>, vector<264x256xf32>, vector<8x256xf32> -> vector<8x256xf32>
    %c0_37 = arith.constant 0 : index
    %c0_38 = arith.constant 0 : index
    %103 = vector.load %arg3[%c0_37, %c0_38] : memref<8x1xf32, #tpu.memory_space<vmem>>, vector<8x1xf32>
    %104 = vector.broadcast %103 : vector<8x1xf32> to vector<8x256xf32>
    %105 = arith.addf %102, %104 : vector<8x256xf32>
    %cst_39 = arith.constant 0.000000e+00 : f32
    %106 = vector.broadcast %cst_39 : f32 to vector<8x256xf32>
    %107 = arith.maximumf %105, %106 : vector<8x256xf32>
    %c5_i32_40 = arith.constant 5 : i32
    %108 = tpu.dynamic_rotate %107 by %c5_i32_40 dim 1 : vector<8x256xf32>, i32 -> vector<8x256xf32>
    %c5_i32_41 = arith.constant 5 : i32
    %109 = vector.broadcast %c5_i32_41 : i32 to vector<1x256xi32>
    %110 = arith.cmpi sge, %16, %109 : vector<1x256xi32>
    %cst_42 = arith.constant 0.000000e+00 : f32
    %111 = vector.shape_cast %110 : vector<1x256xi1> to vector<1x256xi1>
    %112 = vector.broadcast %111 : vector<1x256xi1> to vector<8x256xi1>
    %113 = vector.broadcast %cst_42 : f32 to vector<8x256xf32>
    %114 = arith.select %112, %108, %113 : vector<8x256xi1>, vector<8x256xf32>
    %c0_43 = arith.constant 0 : index
    %c0_44 = arith.constant 0 : index
    %115 = vector.load %arg11[%c0_43, %c0_44] : memref<264x256xf32, #tpu.memory_space<vmem>>, vector<8x256xf32>
    tpu.vector_store %arg11[%c0_43, %c0_44], %114 {strides = array<i32>} : memref<264x256xf32, #tpu.memory_space<vmem>>, vector<8x256xf32>,
    %c4_i32_45 = arith.constant 4 : i32
    %116 = tpu.dynamic_rotate %107 by %c4_i32_45 dim 1 : vector<8x256xf32>, i32 -> vector<8x256xf32>
    %c4_i32_46 = arith.constant 4 : i32
    %117 = vector.broadcast %c4_i32_46 : i32 to vector<1x256xi32>
    %118 = arith.cmpi sge, %16, %117 : vector<1x256xi32>
    %cst_47 = arith.constant 0.000000e+00 : f32
    %119 = vector.shape_cast %118 : vector<1x256xi1> to vector<1x256xi1>
    %120 = vector.broadcast %119 : vector<1x256xi1> to vector<8x256xi1>
    %121 = vector.broadcast %cst_47 : f32 to vector<8x256xf32>
    %122 = arith.select %120, %116, %121 : vector<8x256xi1>, vector<8x256xf32>
    %c8 = arith.constant 8 : index
    %c0_48 = arith.constant 0 : index
    %123 = vector.load %arg11[%c8, %c0_48] : memref<264x256xf32, #tpu.memory_space<vmem>>, vector<8x256xf32>
    tpu.vector_store %arg11[%c8, %c0_48], %122 {strides = array<i32>} : memref<264x256xf32, #tpu.memory_space<vmem>>, vector<8x256xf32>,
    %c3_i32_49 = arith.constant 3 : i32
    %124 = tpu.dynamic_rotate %107 by %c3_i32_49 dim 1 : vector<8x256xf32>, i32 -> vector<8x256xf32>
    %c3_i32_50 = arith.constant 3 : i32
    %125 = vector.broadcast %c3_i32_50 : i32 to vector<1x256xi32>
    %126 = arith.cmpi sge, %16, %125 : vector<1x256xi32>
    %cst_51 = arith.constant 0.000000e+00 : f32
    %127 = vector.shape_cast %126 : vector<1x256xi1> to vector<1x256xi1>
    %128 = vector.broadcast %127 : vector<1x256xi1> to vector<8x256xi1>
    %129 = vector.broadcast %cst_51 : f32 to vector<8x256xf32>
    %130 = arith.select %128, %124, %129 : vector<8x256xi1>, vector<8x256xf32>
    %c16 = arith.constant 16 : index
    %c0_52 = arith.constant 0 : index
    %131 = vector.load %arg11[%c16, %c0_52] : memref<264x256xf32, #tpu.memory_space<vmem>>, vector<8x256xf32>
    tpu.vector_store %arg11[%c16, %c0_52], %130 {strides = array<i32>} : memref<264x256xf32, #tpu.memory_space<vmem>>, vector<8x256xf32>,
    %c2_i32_53 = arith.constant 2 : i32
    %132 = tpu.dynamic_rotate %107 by %c2_i32_53 dim 1 : vector<8x256xf32>, i32 -> vector<8x256xf32>
    %c2_i32_54 = arith.constant 2 : i32
    %133 = vector.broadcast %c2_i32_54 : i32 to vector<1x256xi32>
    %134 = arith.cmpi sge, %16, %133 : vector<1x256xi32>
    %cst_55 = arith.constant 0.000000e+00 : f32
    %135 = vector.shape_cast %134 : vector<1x256xi1> to vector<1x256xi1>
    %136 = vector.broadcast %135 : vector<1x256xi1> to vector<8x256xi1>
    %137 = vector.broadcast %cst_55 : f32 to vector<8x256xf32>
    %138 = arith.select %136, %132, %137 : vector<8x256xi1>, vector<8x256xf32>
    %c24_56 = arith.constant 24 : index
    %c0_57 = arith.constant 0 : index
    %139 = vector.load %arg11[%c24_56, %c0_57] : memref<264x256xf32, #tpu.memory_space<vmem>>, vector<8x256xf32>
    tpu.vector_store %arg11[%c24_56, %c0_57], %138 {strides = array<i32>} : memref<264x256xf32, #tpu.memory_space<vmem>>, vector<8x256xf32>,
    %c1_i32_58 = arith.constant 1 : i32
    %140 = tpu.dynamic_rotate %107 by %c1_i32_58 dim 1 : vector<8x256xf32>, i32 -> vector<8x256xf32>
    %c1_i32_59 = arith.constant 1 : i32
    %141 = vector.broadcast %c1_i32_59 : i32 to vector<1x256xi32>
    %142 = arith.cmpi sge, %16, %141 : vector<1x256xi32>
    %cst_60 = arith.constant 0.000000e+00 : f32
    %143 = vector.shape_cast %142 : vector<1x256xi1> to vector<1x256xi1>
    %144 = vector.broadcast %143 : vector<1x256xi1> to vector<8x256xi1>
    %145 = vector.broadcast %cst_60 : f32 to vector<8x256xf32>
    %146 = arith.select %144, %140, %145 : vector<8x256xi1>, vector<8x256xf32>
    %c32 = arith.constant 32 : index
    %c0_61 = arith.constant 0 : index
    %147 = vector.load %arg11[%c32, %c0_61] : memref<264x256xf32, #tpu.memory_space<vmem>>, vector<8x256xf32>
    tpu.vector_store %arg11[%c32, %c0_61], %146 {strides = array<i32>} : memref<264x256xf32, #tpu.memory_space<vmem>>, vector<8x256xf32>,
    %c40 = arith.constant 40 : index
    %c0_62 = arith.constant 0 : index
    %148 = vector.load %arg11[%c40, %c0_62] : memref<264x256xf32, #tpu.memory_space<vmem>>, vector<8x256xf32>
    tpu.vector_store %arg11[%c40, %c0_62], %107 {strides = array<i32>} : memref<264x256xf32, #tpu.memory_space<vmem>>, vector<8x256xf32>,
    %c255_i32_63 = arith.constant 255 : i32
    %149 = tpu.dynamic_rotate %107 by %c255_i32_63 dim 1 : vector<8x256xf32>, i32 -> vector<8x256xf32>
    %c127_i32_64 = arith.constant 127 : i32
    %150 = vector.broadcast %c127_i32_64 : i32 to vector<1x256xi32>
    %151 = arith.cmpi slt, %16, %150 : vector<1x256xi32>
    %cst_65 = arith.constant 0.000000e+00 : f32
    %152 = vector.shape_cast %151 : vector<1x256xi1> to vector<1x256xi1>
    %153 = vector.broadcast %152 : vector<1x256xi1> to vector<8x256xi1>
    %154 = vector.broadcast %cst_65 : f32 to vector<8x256xf32>
    %155 = arith.select %153, %149, %154 : vector<8x256xi1>, vector<8x256xf32>
    %c48_66 = arith.constant 48 : index
    %c0_67 = arith.constant 0 : index
    %156 = vector.load %arg11[%c48_66, %c0_67] : memref<264x256xf32, #tpu.memory_space<vmem>>, vector<8x256xf32>
    tpu.vector_store %arg11[%c48_66, %c0_67], %155 {strides = array<i32>} : memref<264x256xf32, #tpu.memory_space<vmem>>, vector<8x256xf32>,
    %c254_i32_68 = arith.constant 254 : i32
    %157 = tpu.dynamic_rotate %107 by %c254_i32_68 dim 1 : vector<8x256xf32>, i32 -> vector<8x256xf32>
    %c126_i32_69 = arith.constant 126 : i32
    %158 = vector.broadcast %c126_i32_69 : i32 to vector<1x256xi32>
    %159 = arith.cmpi slt, %16, %158 : vector<1x256xi32>
    %cst_70 = arith.constant 0.000000e+00 : f32
    %160 = vector.shape_cast %159 : vector<1x256xi1> to vector<1x256xi1>
    %161 = vector.broadcast %160 : vector<1x256xi1> to vector<8x256xi1>
    %162 = vector.broadcast %cst_70 : f32 to vector<8x256xf32>
    %163 = arith.select %161, %157, %162 : vector<8x256xi1>, vector<8x256xf32>
    %c56 = arith.constant 56 : index
    %c0_71 = arith.constant 0 : index
    %164 = vector.load %arg11[%c56, %c0_71] : memref<264x256xf32, #tpu.memory_space<vmem>>, vector<8x256xf32>
    tpu.vector_store %arg11[%c56, %c0_71], %163 {strides = array<i32>} : memref<264x256xf32, #tpu.memory_space<vmem>>, vector<8x256xf32>,
    %c253_i32_72 = arith.constant 253 : i32
    %165 = tpu.dynamic_rotate %107 by %c253_i32_72 dim 1 : vector<8x256xf32>, i32 -> vector<8x256xf32>
    %c125_i32_73 = arith.constant 125 : i32
    %166 = vector.broadcast %c125_i32_73 : i32 to vector<1x256xi32>
    %167 = arith.cmpi slt, %16, %166 : vector<1x256xi32>
    %cst_74 = arith.constant 0.000000e+00 : f32
    %168 = vector.shape_cast %167 : vector<1x256xi1> to vector<1x256xi1>
    %169 = vector.broadcast %168 : vector<1x256xi1> to vector<8x256xi1>
    %170 = vector.broadcast %cst_74 : f32 to vector<8x256xf32>
    %171 = arith.select %169, %165, %170 : vector<8x256xi1>, vector<8x256xf32>
    %c64 = arith.constant 64 : index
    %c0_75 = arith.constant 0 : index
    %172 = vector.load %arg11[%c64, %c0_75] : memref<264x256xf32, #tpu.memory_space<vmem>>, vector<8x256xf32>
    tpu.vector_store %arg11[%c64, %c0_75], %171 {strides = array<i32>} : memref<264x256xf32, #tpu.memory_space<vmem>>, vector<8x256xf32>,
    %c252_i32_76 = arith.constant 252 : i32
    %173 = tpu.dynamic_rotate %107 by %c252_i32_76 dim 1 : vector<8x256xf32>, i32 -> vector<8x256xf32>
    %c124_i32_77 = arith.constant 124 : i32
    %174 = vector.broadcast %c124_i32_77 : i32 to vector<1x256xi32>
    %175 = arith.cmpi slt, %16, %174 : vector<1x256xi32>
    %cst_78 = arith.constant 0.000000e+00 : f32
    %176 = vector.shape_cast %175 : vector<1x256xi1> to vector<1x256xi1>
    %177 = vector.broadcast %176 : vector<1x256xi1> to vector<8x256xi1>
    %178 = vector.broadcast %cst_78 : f32 to vector<8x256xf32>
    %179 = arith.select %177, %173, %178 : vector<8x256xi1>, vector<8x256xf32>
    %c72_79 = arith.constant 72 : index
    %c0_80 = arith.constant 0 : index
    %180 = vector.load %arg11[%c72_79, %c0_80] : memref<264x256xf32, #tpu.memory_space<vmem>>, vector<8x256xf32>
    tpu.vector_store %arg11[%c72_79, %c0_80], %179 {strides = array<i32>} : memref<264x256xf32, #tpu.memory_space<vmem>>, vector<8x256xf32>,
    %c251_i32_81 = arith.constant 251 : i32
    %181 = tpu.dynamic_rotate %107 by %c251_i32_81 dim 1 : vector<8x256xf32>, i32 -> vector<8x256xf32>
    %c123_i32_82 = arith.constant 123 : i32
    %182 = vector.broadcast %c123_i32_82 : i32 to vector<1x256xi32>
    %183 = arith.cmpi slt, %16, %182 : vector<1x256xi32>
    %cst_83 = arith.constant 0.000000e+00 : f32
    %184 = vector.shape_cast %183 : vector<1x256xi1> to vector<1x256xi1>
    %185 = vector.broadcast %184 : vector<1x256xi1> to vector<8x256xi1>
    %186 = vector.broadcast %cst_83 : f32 to vector<8x256xf32>
    %187 = arith.select %185, %181, %186 : vector<8x256xi1>, vector<8x256xf32>
    %c80 = arith.constant 80 : index
    %c0_84 = arith.constant 0 : index
    %188 = vector.load %arg11[%c80, %c0_84] : memref<264x256xf32, #tpu.memory_space<vmem>>, vector<8x256xf32>
    tpu.vector_store %arg11[%c80, %c0_84], %187 {strides = array<i32>} : memref<264x256xf32, #tpu.memory_space<vmem>>, vector<8x256xf32>,
    %c0_85 = arith.constant 0 : index
    %c0_86 = arith.constant 0 : index
    %189 = vector.load %arg4[%c0_85, %c0_86] : memref<16x88xf32, #tpu.memory_space<vmem>>, vector<16x88xf32>
    %c0_87 = arith.constant 0 : index
    %c0_88 = arith.constant 0 : index
    %190 = vector.load %arg11[%c0_87, %c0_88] : memref<264x256xf32, #tpu.memory_space<vmem>>, vector<88x256xf32>
    %cst_89 = arith.constant dense<0.000000e+00> : vector<16x256xf32>
    %191 = tpu.matmul %189, %190, %cst_89 {dimension_numbers = #tpu.dot_dimension_numbers<[1], [0], [0], [1], [0, 0, 1, 1], [], []>} : vector<16x88xf32>, vector<88x256xf32>, vector<16x256xf32> -> vector<16x256xf32>
    %c0_90 = arith.constant 0 : index
    %c0_91 = arith.constant 0 : index
    %192 = vector.load %arg5[%c0_90, %c0_91] : memref<16x1xf32, #tpu.memory_space<vmem>>, vector<16x1xf32>
    %193 = vector.broadcast %192 : vector<16x1xf32> to vector<16x256xf32>
    %194 = arith.addf %191, %193 : vector<16x256xf32>
    %cst_92 = arith.constant 0.000000e+00 : f32
    %195 = vector.broadcast %cst_92 : f32 to vector<16x256xf32>
    %196 = arith.maximumf %194, %195 : vector<16x256xf32>
    %c1_i32_93 = arith.constant 1 : i32
    %197 = tpu.dynamic_rotate %196 by %c1_i32_93 dim 1 : vector<16x256xf32>, i32 -> vector<16x256xf32>
    %c1_i32_94 = arith.constant 1 : i32
    %198 = vector.broadcast %c1_i32_94 : i32 to vector<1x256xi32>
    %199 = arith.cmpi sge, %16, %198 : vector<1x256xi32>
    %cst_95 = arith.constant 0.000000e+00 : f32
    %200 = vector.shape_cast %199 : vector<1x256xi1> to vector<1x256xi1>
    %201 = vector.broadcast %200 : vector<1x256xi1> to vector<16x256xi1>
    %202 = vector.broadcast %cst_95 : f32 to vector<16x256xf32>
    %203 = arith.select %201, %197, %202 : vector<16x256xi1>, vector<16x256xf32>
    %c0_96 = arith.constant 0 : index
    %c0_97 = arith.constant 0 : index
    %204 = vector.load %arg11[%c0_96, %c0_97] : memref<264x256xf32, #tpu.memory_space<vmem>>, vector<16x256xf32>
    tpu.vector_store %arg11[%c0_96, %c0_97], %203 {strides = array<i32>} : memref<264x256xf32, #tpu.memory_space<vmem>>, vector<16x256xf32>,
    %c16_98 = arith.constant 16 : index
    %c0_99 = arith.constant 0 : index
    %205 = vector.load %arg11[%c16_98, %c0_99] : memref<264x256xf32, #tpu.memory_space<vmem>>, vector<16x256xf32>
    tpu.vector_store %arg11[%c16_98, %c0_99], %196 {strides = array<i32>} : memref<264x256xf32, #tpu.memory_space<vmem>>, vector<16x256xf32>,
    %c255_i32_100 = arith.constant 255 : i32
    %206 = tpu.dynamic_rotate %196 by %c255_i32_100 dim 1 : vector<16x256xf32>, i32 -> vector<16x256xf32>
    %c127_i32_101 = arith.constant 127 : i32
    %207 = vector.broadcast %c127_i32_101 : i32 to vector<1x256xi32>
    %208 = arith.cmpi slt, %16, %207 : vector<1x256xi32>
    %cst_102 = arith.constant 0.000000e+00 : f32
    %209 = vector.shape_cast %208 : vector<1x256xi1> to vector<1x256xi1>
    %210 = vector.broadcast %209 : vector<1x256xi1> to vector<16x256xi1>
    %211 = vector.broadcast %cst_102 : f32 to vector<16x256xf32>
    %212 = arith.select %210, %206, %211 : vector<16x256xi1>, vector<16x256xf32>
    %c32_103 = arith.constant 32 : index
    %c0_104 = arith.constant 0 : index
    %213 = vector.load %arg11[%c32_103, %c0_104] : memref<264x256xf32, #tpu.memory_space<vmem>>, vector<16x256xf32>
    tpu.vector_store %arg11[%c32_103, %c0_104], %212 {strides = array<i32>} : memref<264x256xf32, #tpu.memory_space<vmem>>, vector<16x256xf32>,
    %c0_105 = arith.constant 0 : index
    %c0_106 = arith.constant 0 : index
    %214 = vector.load %arg6[%c0_105, %c0_106] : memref<32x48xf32, #tpu.memory_space<vmem>>, vector<32x48xf32>
    %c0_107 = arith.constant 0 : index
    %c0_108 = arith.constant 0 : index
    %215 = vector.load %arg11[%c0_107, %c0_108] : memref<264x256xf32, #tpu.memory_space<vmem>>, vector<48x256xf32>
    %cst_109 = arith.constant dense<0.000000e+00> : vector<32x256xf32>
    %216 = tpu.matmul %214, %215, %cst_109 {dimension_numbers = #tpu.dot_dimension_numbers<[1], [0], [0], [1], [0, 0, 1, 1], [], []>} : vector<32x48xf32>, vector<48x256xf32>, vector<32x256xf32> -> vector<32x256xf32>
    %c0_110 = arith.constant 0 : index
    %c0_111 = arith.constant 0 : index
    %217 = vector.load %arg7[%c0_110, %c0_111] : memref<32x1xf32, #tpu.memory_space<vmem>>, vector<32x1xf32>
    %218 = vector.broadcast %217 : vector<32x1xf32> to vector<32x256xf32>
    %219 = arith.addf %216, %218 : vector<32x256xf32>
    %cst_112 = arith.constant 0.000000e+00 : f32
    %220 = vector.broadcast %cst_112 : f32 to vector<32x256xf32>
    %221 = arith.maximumf %219, %220 : vector<32x256xf32>
    %c0_113 = arith.constant 0 : index
    %c0_114 = arith.constant 0 : index
    %222 = vector.load %arg9[%c0_113, %c0_114] : memref<1x128xf32, #tpu.memory_space<vmem>>, vector<1x128xf32>
    %223 = vector.extract_strided_slice %221 {offsets = [0, 0], sizes = [1, 256], strides = [1, 1]} : vector<32x256xf32> to vector<1x256xf32>
    %224 = vector.extract_strided_slice %223 {offsets = [0, 0], sizes = [1, 128], strides = [1, 1]} : vector<1x256xf32> to vector<1x128xf32>
    %225 = vector.extract_strided_slice %223 {offsets = [0, 128], sizes = [1, 128], strides = [1, 1]} : vector<1x256xf32> to vector<1x128xf32>
    %226 = tpu.concatenate %224, %225 in 0 : vector<1x128xf32>, vector<1x128xf32> -> vector<2x128xf32>
    %227 = vector.extract_strided_slice %221 {offsets = [1, 0], sizes = [1, 256], strides = [1, 1]} : vector<32x256xf32> to vector<1x256xf32>
    %228 = vector.extract_strided_slice %227 {offsets = [0, 0], sizes = [1, 128], strides = [1, 1]} : vector<1x256xf32> to vector<1x128xf32>
    %229 = vector.extract_strided_slice %227 {offsets = [0, 128], sizes = [1, 128], strides = [1, 1]} : vector<1x256xf32> to vector<1x128xf32>
    %230 = tpu.concatenate %228, %229 in 0 : vector<1x128xf32>, vector<1x128xf32> -> vector<2x128xf32>
    %231 = vector.extract_strided_slice %221 {offsets = [2, 0], sizes = [1, 256], strides = [1, 1]} : vector<32x256xf32> to vector<1x256xf32>
    %232 = vector.extract_strided_slice %231 {offsets = [0, 0], sizes = [1, 128], strides = [1, 1]} : vector<1x256xf32> to vector<1x128xf32>
    %233 = vector.extract_strided_slice %231 {offsets = [0, 128], sizes = [1, 128], strides = [1, 1]} : vector<1x256xf32> to vector<1x128xf32>
    %234 = tpu.concatenate %232, %233 in 0 : vector<1x128xf32>, vector<1x128xf32> -> vector<2x128xf32>
    %235 = vector.extract_strided_slice %221 {offsets = [3, 0], sizes = [1, 256], strides = [1, 1]} : vector<32x256xf32> to vector<1x256xf32>
    %236 = vector.extract_strided_slice %235 {offsets = [0, 0], sizes = [1, 128], strides = [1, 1]} : vector<1x256xf32> to vector<1x128xf32>
    %237 = vector.extract_strided_slice %235 {offsets = [0, 128], sizes = [1, 128], strides = [1, 1]} : vector<1x256xf32> to vector<1x128xf32>
    %238 = tpu.concatenate %236, %237 in 0 : vector<1x128xf32>, vector<1x128xf32> -> vector<2x128xf32>
    %239 = vector.extract_strided_slice %221 {offsets = [4, 0], sizes = [1, 256], strides = [1, 1]} : vector<32x256xf32> to vector<1x256xf32>
    %240 = vector.extract_strided_slice %239 {offsets = [0, 0], sizes = [1, 128], strides = [1, 1]} : vector<1x256xf32> to vector<1x128xf32>
    %241 = vector.extract_strided_slice %239 {offsets = [0, 128], sizes = [1, 128], strides = [1, 1]} : vector<1x256xf32> to vector<1x128xf32>
    %242 = tpu.concatenate %240, %241 in 0 : vector<1x128xf32>, vector<1x128xf32> -> vector<2x128xf32>
    %243 = vector.extract_strided_slice %221 {offsets = [5, 0], sizes = [1, 256], strides = [1, 1]} : vector<32x256xf32> to vector<1x256xf32>
    %244 = vector.extract_strided_slice %243 {offsets = [0, 0], sizes = [1, 128], strides = [1, 1]} : vector<1x256xf32> to vector<1x128xf32>
    %245 = vector.extract_strided_slice %243 {offsets = [0, 128], sizes = [1, 128], strides = [1, 1]} : vector<1x256xf32> to vector<1x128xf32>
    %246 = tpu.concatenate %244, %245 in 0 : vector<1x128xf32>, vector<1x128xf32> -> vector<2x128xf32>
    %247 = vector.extract_strided_slice %221 {offsets = [6, 0], sizes = [1, 256], strides = [1, 1]} : vector<32x256xf32> to vector<1x256xf32>
    %248 = vector.extract_strided_slice %247 {offsets = [0, 0], sizes = [1, 128], strides = [1, 1]} : vector<1x256xf32> to vector<1x128xf32>
    %249 = vector.extract_strided_slice %247 {offsets = [0, 128], sizes = [1, 128], strides = [1, 1]} : vector<1x256xf32> to vector<1x128xf32>
    %250 = tpu.concatenate %248, %249 in 0 : vector<1x128xf32>, vector<1x128xf32> -> vector<2x128xf32>
    %251 = vector.extract_strided_slice %221 {offsets = [7, 0], sizes = [1, 256], strides = [1, 1]} : vector<32x256xf32> to vector<1x256xf32>
    %252 = vector.extract_strided_slice %251 {offsets = [0, 0], sizes = [1, 128], strides = [1, 1]} : vector<1x256xf32> to vector<1x128xf32>
    %253 = vector.extract_strided_slice %251 {offsets = [0, 128], sizes = [1, 128], strides = [1, 1]} : vector<1x256xf32> to vector<1x128xf32>
    %254 = tpu.concatenate %252, %253 in 0 : vector<1x128xf32>, vector<1x128xf32> -> vector<2x128xf32>
    %255 = tpu.concatenate %226, %230, %234, %238, %242, %246, %250, %254 in 1 : vector<2x128xf32>, vector<2x128xf32>, vector<2x128xf32>, vector<2x128xf32>, vector<2x128xf32>, vector<2x128xf32>, vector<2x128xf32>, vector<2x128xf32> -> vector<2x1024xf32>
    %256 = arith.truncf %255 : vector<2x1024xf32> to vector<2x1024xbf16>
    %c0_115 = arith.constant 0 : index
    %c0_116 = arith.constant 0 : index
    %257 = vector.load %arg8[%c0_115, %c0_116] : memref<4096x128xbf16, #tpu.memory_space<vmem>>, vector<1024x128xbf16>
    %cst_117 = arith.constant dense<0.000000e+00> : vector<2x128xf32>
    %258 = tpu.matmul %256, %257, %cst_117 {dimension_numbers = #tpu.dot_dimension_numbers<[1], [0], [0], [1], [0, 0, 1, 1], [], []>} : vector<2x1024xbf16>, vector<1024x128xbf16>, vector<2x128xf32> -> vector<2x128xf32>
    %259 = vector.broadcast %222 : vector<1x128xf32> to vector<2x128xf32>
    %260 = arith.addf %259, %258 : vector<2x128xf32>
    %261 = vector.extract_strided_slice %221 {offsets = [8, 0], sizes = [1, 256], strides = [1, 1]} : vector<32x256xf32> to vector<1x256xf32>
    %262 = vector.extract_strided_slice %261 {offsets = [0, 0], sizes = [1, 128], strides = [1, 1]} : vector<1x256xf32> to vector<1x128xf32>
    %263 = vector.extract_strided_slice %261 {offsets = [0, 128], sizes = [1, 128], strides = [1, 1]} : vector<1x256xf32> to vector<1x128xf32>
    %264 = tpu.concatenate %262, %263 in 0 : vector<1x128xf32>, vector<1x128xf32> -> vector<2x128xf32>
    %265 = vector.extract_strided_slice %221 {offsets = [9, 0], sizes = [1, 256], strides = [1, 1]} : vector<32x256xf32> to vector<1x256xf32>
    %266 = vector.extract_strided_slice %265 {offsets = [0, 0], sizes = [1, 128], strides = [1, 1]} : vector<1x256xf32> to vector<1x128xf32>
    %267 = vector.extract_strided_slice %265 {offsets = [0, 128], sizes = [1, 128], strides = [1, 1]} : vector<1x256xf32> to vector<1x128xf32>
    %268 = tpu.concatenate %266, %267 in 0 : vector<1x128xf32>, vector<1x128xf32> -> vector<2x128xf32>
    %269 = vector.extract_strided_slice %221 {offsets = [10, 0], sizes = [1, 256], strides = [1, 1]} : vector<32x256xf32> to vector<1x256xf32>
    %270 = vector.extract_strided_slice %269 {offsets = [0, 0], sizes = [1, 128], strides = [1, 1]} : vector<1x256xf32> to vector<1x128xf32>
    %271 = vector.extract_strided_slice %269 {offsets = [0, 128], sizes = [1, 128], strides = [1, 1]} : vector<1x256xf32> to vector<1x128xf32>
    %272 = tpu.concatenate %270, %271 in 0 : vector<1x128xf32>, vector<1x128xf32> -> vector<2x128xf32>
    %273 = vector.extract_strided_slice %221 {offsets = [11, 0], sizes = [1, 256], strides = [1, 1]} : vector<32x256xf32> to vector<1x256xf32>
    %274 = vector.extract_strided_slice %273 {offsets = [0, 0], sizes = [1, 128], strides = [1, 1]} : vector<1x256xf32> to vector<1x128xf32>
    %275 = vector.extract_strided_slice %273 {offsets = [0, 128], sizes = [1, 128], strides = [1, 1]} : vector<1x256xf32> to vector<1x128xf32>
    %276 = tpu.concatenate %274, %275 in 0 : vector<1x128xf32>, vector<1x128xf32> -> vector<2x128xf32>
    %277 = vector.extract_strided_slice %221 {offsets = [12, 0], sizes = [1, 256], strides = [1, 1]} : vector<32x256xf32> to vector<1x256xf32>
    %278 = vector.extract_strided_slice %277 {offsets = [0, 0], sizes = [1, 128], strides = [1, 1]} : vector<1x256xf32> to vector<1x128xf32>
    %279 = vector.extract_strided_slice %277 {offsets = [0, 128], sizes = [1, 128], strides = [1, 1]} : vector<1x256xf32> to vector<1x128xf32>
    %280 = tpu.concatenate %278, %279 in 0 : vector<1x128xf32>, vector<1x128xf32> -> vector<2x128xf32>
    %281 = vector.extract_strided_slice %221 {offsets = [13, 0], sizes = [1, 256], strides = [1, 1]} : vector<32x256xf32> to vector<1x256xf32>
    %282 = vector.extract_strided_slice %281 {offsets = [0, 0], sizes = [1, 128], strides = [1, 1]} : vector<1x256xf32> to vector<1x128xf32>
    %283 = vector.extract_strided_slice %281 {offsets = [0, 128], sizes = [1, 128], strides = [1, 1]} : vector<1x256xf32> to vector<1x128xf32>
    %284 = tpu.concatenate %282, %283 in 0 : vector<1x128xf32>, vector<1x128xf32> -> vector<2x128xf32>
    %285 = vector.extract_strided_slice %221 {offsets = [14, 0], sizes = [1, 256], strides = [1, 1]} : vector<32x256xf32> to vector<1x256xf32>
    %286 = vector.extract_strided_slice %285 {offsets = [0, 0], sizes = [1, 128], strides = [1, 1]} : vector<1x256xf32> to vector<1x128xf32>
    %287 = vector.extract_strided_slice %285 {offsets = [0, 128], sizes = [1, 128], strides = [1, 1]} : vector<1x256xf32> to vector<1x128xf32>
    %288 = tpu.concatenate %286, %287 in 0 : vector<1x128xf32>, vector<1x128xf32> -> vector<2x128xf32>
    %289 = vector.extract_strided_slice %221 {offsets = [15, 0], sizes = [1, 256], strides = [1, 1]} : vector<32x256xf32> to vector<1x256xf32>
    %290 = vector.extract_strided_slice %289 {offsets = [0, 0], sizes = [1, 128], strides = [1, 1]} : vector<1x256xf32> to vector<1x128xf32>
    %291 = vector.extract_strided_slice %289 {offsets = [0, 128], sizes = [1, 128], strides = [1, 1]} : vector<1x256xf32> to vector<1x128xf32>
    %292 = tpu.concatenate %290, %291 in 0 : vector<1x128xf32>, vector<1x128xf32> -> vector<2x128xf32>
    %293 = tpu.concatenate %264, %268, %272, %276, %280, %284, %288, %292 in 1 : vector<2x128xf32>, vector<2x128xf32>, vector<2x128xf32>, vector<2x128xf32>, vector<2x128xf32>, vector<2x128xf32>, vector<2x128xf32>, vector<2x128xf32> -> vector<2x1024xf32>
    %294 = arith.truncf %293 : vector<2x1024xf32> to vector<2x1024xbf16>
    %c1024 = arith.constant 1024 : index
    %c0_118 = arith.constant 0 : index
    %295 = vector.load %arg8[%c1024, %c0_118] : memref<4096x128xbf16, #tpu.memory_space<vmem>>, vector<1024x128xbf16>
    %cst_119 = arith.constant dense<0.000000e+00> : vector<2x128xf32>
    %296 = tpu.matmul %294, %295, %cst_119 {dimension_numbers = #tpu.dot_dimension_numbers<[1], [0], [0], [1], [0, 0, 1, 1], [], []>} : vector<2x1024xbf16>, vector<1024x128xbf16>, vector<2x128xf32> -> vector<2x128xf32>
    %297 = arith.addf %260, %296 : vector<2x128xf32>
    %298 = vector.extract_strided_slice %221 {offsets = [16, 0], sizes = [1, 256], strides = [1, 1]} : vector<32x256xf32> to vector<1x256xf32>
    %299 = vector.extract_strided_slice %298 {offsets = [0, 0], sizes = [1, 128], strides = [1, 1]} : vector<1x256xf32> to vector<1x128xf32>
    %300 = vector.extract_strided_slice %298 {offsets = [0, 128], sizes = [1, 128], strides = [1, 1]} : vector<1x256xf32> to vector<1x128xf32>
    %301 = tpu.concatenate %299, %300 in 0 : vector<1x128xf32>, vector<1x128xf32> -> vector<2x128xf32>
    %302 = vector.extract_strided_slice %221 {offsets = [17, 0], sizes = [1, 256], strides = [1, 1]} : vector<32x256xf32> to vector<1x256xf32>
    %303 = vector.extract_strided_slice %302 {offsets = [0, 0], sizes = [1, 128], strides = [1, 1]} : vector<1x256xf32> to vector<1x128xf32>
    %304 = vector.extract_strided_slice %302 {offsets = [0, 128], sizes = [1, 128], strides = [1, 1]} : vector<1x256xf32> to vector<1x128xf32>
    %305 = tpu.concatenate %303, %304 in 0 : vector<1x128xf32>, vector<1x128xf32> -> vector<2x128xf32>
    %306 = vector.extract_strided_slice %221 {offsets = [18, 0], sizes = [1, 256], strides = [1, 1]} : vector<32x256xf32> to vector<1x256xf32>
    %307 = vector.extract_strided_slice %306 {offsets = [0, 0], sizes = [1, 128], strides = [1, 1]} : vector<1x256xf32> to vector<1x128xf32>
    %308 = vector.extract_strided_slice %306 {offsets = [0, 128], sizes = [1, 128], strides = [1, 1]} : vector<1x256xf32> to vector<1x128xf32>
    %309 = tpu.concatenate %307, %308 in 0 : vector<1x128xf32>, vector<1x128xf32> -> vector<2x128xf32>
    %310 = vector.extract_strided_slice %221 {offsets = [19, 0], sizes = [1, 256], strides = [1, 1]} : vector<32x256xf32> to vector<1x256xf32>
    %311 = vector.extract_strided_slice %310 {offsets = [0, 0], sizes = [1, 128], strides = [1, 1]} : vector<1x256xf32> to vector<1x128xf32>
    %312 = vector.extract_strided_slice %310 {offsets = [0, 128], sizes = [1, 128], strides = [1, 1]} : vector<1x256xf32> to vector<1x128xf32>
    %313 = tpu.concatenate %311, %312 in 0 : vector<1x128xf32>, vector<1x128xf32> -> vector<2x128xf32>
    %314 = vector.extract_strided_slice %221 {offsets = [20, 0], sizes = [1, 256], strides = [1, 1]} : vector<32x256xf32> to vector<1x256xf32>
    %315 = vector.extract_strided_slice %314 {offsets = [0, 0], sizes = [1, 128], strides = [1, 1]} : vector<1x256xf32> to vector<1x128xf32>
    %316 = vector.extract_strided_slice %314 {offsets = [0, 128], sizes = [1, 128], strides = [1, 1]} : vector<1x256xf32> to vector<1x128xf32>
    %317 = tpu.concatenate %315, %316 in 0 : vector<1x128xf32>, vector<1x128xf32> -> vector<2x128xf32>
    %318 = vector.extract_strided_slice %221 {offsets = [21, 0], sizes = [1, 256], strides = [1, 1]} : vector<32x256xf32> to vector<1x256xf32>
    %319 = vector.extract_strided_slice %318 {offsets = [0, 0], sizes = [1, 128], strides = [1, 1]} : vector<1x256xf32> to vector<1x128xf32>
    %320 = vector.extract_strided_slice %318 {offsets = [0, 128], sizes = [1, 128], strides = [1, 1]} : vector<1x256xf32> to vector<1x128xf32>
    %321 = tpu.concatenate %319, %320 in 0 : vector<1x128xf32>, vector<1x128xf32> -> vector<2x128xf32>
    %322 = vector.extract_strided_slice %221 {offsets = [22, 0], sizes = [1, 256], strides = [1, 1]} : vector<32x256xf32> to vector<1x256xf32>
    %323 = vector.extract_strided_slice %322 {offsets = [0, 0], sizes = [1, 128], strides = [1, 1]} : vector<1x256xf32> to vector<1x128xf32>
    %324 = vector.extract_strided_slice %322 {offsets = [0, 128], sizes = [1, 128], strides = [1, 1]} : vector<1x256xf32> to vector<1x128xf32>
    %325 = tpu.concatenate %323, %324 in 0 : vector<1x128xf32>, vector<1x128xf32> -> vector<2x128xf32>
    %326 = vector.extract_strided_slice %221 {offsets = [23, 0], sizes = [1, 256], strides = [1, 1]} : vector<32x256xf32> to vector<1x256xf32>
    %327 = vector.extract_strided_slice %326 {offsets = [0, 0], sizes = [1, 128], strides = [1, 1]} : vector<1x256xf32> to vector<1x128xf32>
    %328 = vector.extract_strided_slice %326 {offsets = [0, 128], sizes = [1, 128], strides = [1, 1]} : vector<1x256xf32> to vector<1x128xf32>
    %329 = tpu.concatenate %327, %328 in 0 : vector<1x128xf32>, vector<1x128xf32> -> vector<2x128xf32>
    %330 = tpu.concatenate %301, %305, %309, %313, %317, %321, %325, %329 in 1 : vector<2x128xf32>, vector<2x128xf32>, vector<2x128xf32>, vector<2x128xf32>, vector<2x128xf32>, vector<2x128xf32>, vector<2x128xf32>, vector<2x128xf32> -> vector<2x1024xf32>
    %331 = arith.truncf %330 : vector<2x1024xf32> to vector<2x1024xbf16>
    %c2048 = arith.constant 2048 : index
    %c0_120 = arith.constant 0 : index
    %332 = vector.load %arg8[%c2048, %c0_120] : memref<4096x128xbf16, #tpu.memory_space<vmem>>, vector<1024x128xbf16>
    %cst_121 = arith.constant dense<0.000000e+00> : vector<2x128xf32>
    %333 = tpu.matmul %331, %332, %cst_121 {dimension_numbers = #tpu.dot_dimension_numbers<[1], [0], [0], [1], [0, 0, 1, 1], [], []>} : vector<2x1024xbf16>, vector<1024x128xbf16>, vector<2x128xf32> -> vector<2x128xf32>
    %334 = arith.addf %297, %333 : vector<2x128xf32>
    %335 = vector.extract_strided_slice %221 {offsets = [24, 0], sizes = [1, 256], strides = [1, 1]} : vector<32x256xf32> to vector<1x256xf32>
    %336 = vector.extract_strided_slice %335 {offsets = [0, 0], sizes = [1, 128], strides = [1, 1]} : vector<1x256xf32> to vector<1x128xf32>
    %337 = vector.extract_strided_slice %335 {offsets = [0, 128], sizes = [1, 128], strides = [1, 1]} : vector<1x256xf32> to vector<1x128xf32>
    %338 = tpu.concatenate %336, %337 in 0 : vector<1x128xf32>, vector<1x128xf32> -> vector<2x128xf32>
    %339 = vector.extract_strided_slice %221 {offsets = [25, 0], sizes = [1, 256], strides = [1, 1]} : vector<32x256xf32> to vector<1x256xf32>
    %340 = vector.extract_strided_slice %339 {offsets = [0, 0], sizes = [1, 128], strides = [1, 1]} : vector<1x256xf32> to vector<1x128xf32>
    %341 = vector.extract_strided_slice %339 {offsets = [0, 128], sizes = [1, 128], strides = [1, 1]} : vector<1x256xf32> to vector<1x128xf32>
    %342 = tpu.concatenate %340, %341 in 0 : vector<1x128xf32>, vector<1x128xf32> -> vector<2x128xf32>
    %343 = vector.extract_strided_slice %221 {offsets = [26, 0], sizes = [1, 256], strides = [1, 1]} : vector<32x256xf32> to vector<1x256xf32>
    %344 = vector.extract_strided_slice %343 {offsets = [0, 0], sizes = [1, 128], strides = [1, 1]} : vector<1x256xf32> to vector<1x128xf32>
    %345 = vector.extract_strided_slice %343 {offsets = [0, 128], sizes = [1, 128], strides = [1, 1]} : vector<1x256xf32> to vector<1x128xf32>
    %346 = tpu.concatenate %344, %345 in 0 : vector<1x128xf32>, vector<1x128xf32> -> vector<2x128xf32>
    %347 = vector.extract_strided_slice %221 {offsets = [27, 0], sizes = [1, 256], strides = [1, 1]} : vector<32x256xf32> to vector<1x256xf32>
    %348 = vector.extract_strided_slice %347 {offsets = [0, 0], sizes = [1, 128], strides = [1, 1]} : vector<1x256xf32> to vector<1x128xf32>
    %349 = vector.extract_strided_slice %347 {offsets = [0, 128], sizes = [1, 128], strides = [1, 1]} : vector<1x256xf32> to vector<1x128xf32>
    %350 = tpu.concatenate %348, %349 in 0 : vector<1x128xf32>, vector<1x128xf32> -> vector<2x128xf32>
    %351 = vector.extract_strided_slice %221 {offsets = [28, 0], sizes = [1, 256], strides = [1, 1]} : vector<32x256xf32> to vector<1x256xf32>
    %352 = vector.extract_strided_slice %351 {offsets = [0, 0], sizes = [1, 128], strides = [1, 1]} : vector<1x256xf32> to vector<1x128xf32>
    %353 = vector.extract_strided_slice %351 {offsets = [0, 128], sizes = [1, 128], strides = [1, 1]} : vector<1x256xf32> to vector<1x128xf32>
    %354 = tpu.concatenate %352, %353 in 0 : vector<1x128xf32>, vector<1x128xf32> -> vector<2x128xf32>
    %355 = vector.extract_strided_slice %221 {offsets = [29, 0], sizes = [1, 256], strides = [1, 1]} : vector<32x256xf32> to vector<1x256xf32>
    %356 = vector.extract_strided_slice %355 {offsets = [0, 0], sizes = [1, 128], strides = [1, 1]} : vector<1x256xf32> to vector<1x128xf32>
    %357 = vector.extract_strided_slice %355 {offsets = [0, 128], sizes = [1, 128], strides = [1, 1]} : vector<1x256xf32> to vector<1x128xf32>
    %358 = tpu.concatenate %356, %357 in 0 : vector<1x128xf32>, vector<1x128xf32> -> vector<2x128xf32>
    %359 = vector.extract_strided_slice %221 {offsets = [30, 0], sizes = [1, 256], strides = [1, 1]} : vector<32x256xf32> to vector<1x256xf32>
    %360 = vector.extract_strided_slice %359 {offsets = [0, 0], sizes = [1, 128], strides = [1, 1]} : vector<1x256xf32> to vector<1x128xf32>
    %361 = vector.extract_strided_slice %359 {offsets = [0, 128], sizes = [1, 128], strides = [1, 1]} : vector<1x256xf32> to vector<1x128xf32>
    %362 = tpu.concatenate %360, %361 in 0 : vector<1x128xf32>, vector<1x128xf32> -> vector<2x128xf32>
    %363 = vector.extract_strided_slice %221 {offsets = [31, 0], sizes = [1, 256], strides = [1, 1]} : vector<32x256xf32> to vector<1x256xf32>
    %364 = vector.extract_strided_slice %363 {offsets = [0, 0], sizes = [1, 128], strides = [1, 1]} : vector<1x256xf32> to vector<1x128xf32>
    %365 = vector.extract_strided_slice %363 {offsets = [0, 128], sizes = [1, 128], strides = [1, 1]} : vector<1x256xf32> to vector<1x128xf32>
    %366 = tpu.concatenate %364, %365 in 0 : vector<1x128xf32>, vector<1x128xf32> -> vector<2x128xf32>
    %367 = tpu.concatenate %338, %342, %346, %350, %354, %358, %362, %366 in 1 : vector<2x128xf32>, vector<2x128xf32>, vector<2x128xf32>, vector<2x128xf32>, vector<2x128xf32>, vector<2x128xf32>, vector<2x128xf32>, vector<2x128xf32> -> vector<2x1024xf32>
    %368 = arith.truncf %367 : vector<2x1024xf32> to vector<2x1024xbf16>
    %c3072 = arith.constant 3072 : index
    %c0_122 = arith.constant 0 : index
    %369 = vector.load %arg8[%c3072, %c0_122] : memref<4096x128xbf16, #tpu.memory_space<vmem>>, vector<1024x128xbf16>
    %cst_123 = arith.constant dense<0.000000e+00> : vector<2x128xf32>
    %370 = tpu.matmul %368, %369, %cst_123 {dimension_numbers = #tpu.dot_dimension_numbers<[1], [0], [0], [1], [0, 0, 1, 1], [], []>} : vector<2x1024xbf16>, vector<1024x128xbf16>, vector<2x128xf32> -> vector<2x128xf32>
    %371 = arith.addf %334, %370 : vector<2x128xf32>
    %cst_124 = arith.constant 0.000000e+00 : f32
    %372 = vector.broadcast %cst_124 : f32 to vector<2x128xf32>
    %373 = arith.maximumf %371, %372 : vector<2x128xf32>
    %cst_125 = arith.constant dense<0xFF800000> : vector<2xf32>
    %374 = vector.multi_reduction <maximumf>, %373, %cst_125 [1] : vector<2x128xf32> to vector<2xf32>
    %375 = vector.shape_cast %374 : vector<2xf32> to vector<2x1xf32>
    %376 = vector.broadcast %375 : vector<2x1xf32> to vector<2x128xf32>
    %377 = arith.subf %373, %376 : vector<2x128xf32>
    %378 = math.exp %377 : vector<2x128xf32>
    %379 = tpu.iota {dimensions = array<i32: 1>} : vector<1x128xi32>
    %c100_i32 = arith.constant 100 : i32
    %380 = vector.broadcast %c100_i32 : i32 to vector<1x128xi32>
    %381 = arith.cmpi slt, %379, %380 : vector<1x128xi32>
    %cst_126 = arith.constant 0.000000e+00 : f32
    %382 = vector.shape_cast %381 : vector<1x128xi1> to vector<1x128xi1>
    %383 = vector.broadcast %382 : vector<1x128xi1> to vector<2x128xi1>
    %384 = vector.broadcast %cst_126 : f32 to vector<2x128xf32>
    %385 = arith.select %383, %378, %384 : vector<2x128xi1>, vector<2x128xf32>
    %cst_127 = arith.constant dense<0.000000e+00> : vector<2xf32>
    %386 = vector.multi_reduction <add>, %385, %cst_127 [1] : vector<2x128xf32> to vector<2xf32>
    %387 = vector.shape_cast %386 : vector<2xf32> to vector<2x1xf32>
    %388 = tpu.reciprocal %387 {approx = true} : vector<2x1xf32> -> vector<2x1xf32>
    %389 = vector.broadcast %388 : vector<2x1xf32> to vector<2x128xf32>
    %390 = arith.mulf %385, %389 : vector<2x128xf32>
    %c0_128 = arith.constant 0 : index
    %c0_129 = arith.constant 0 : index
    %c0_130 = arith.constant 0 : index
    %391 = vector.load %arg10[%c0_128, %c0_129, %c0_130] : memref<1x2x128xf32, #tpu.memory_space<vmem>>, vector<1x2x128xf32>
    %392 = vector.shape_cast %391 : vector<1x2x128xf32> to vector<2x128xf32>
    %393 = vector.shape_cast %390 : vector<2x128xf32> to vector<1x2x128xf32>
    tpu.vector_store %arg10[%c0_128, %c0_129, %c0_130], %393 {strides = array<i32>} : memref<1x2x128xf32, #tpu.memory_space<vmem>>, vector<1x2x128xf32>,
    return
  }
  func.func @transform_0(%arg0: i32) -> (i32, i32, i32) {
    %c0_i32 = arith.constant 0 : i32
    %c0_i32_0 = arith.constant 0 : i32
    %c0_i32_1 = arith.constant 0 : i32
    return %arg0, %c0_i32, %c0_i32_0 : i32, i32, i32
  }
  func.func @transform_1(%arg0: i32) -> (i32, i32) {
    %c0_i32 = arith.constant 0 : i32
    %c0_i32_0 = arith.constant 0 : i32
    %c0_i32_1 = arith.constant 0 : i32
    return %c0_i32, %c0_i32_0 : i32, i32
  }
  func.func @transform_2(%arg0: i32) -> (i32, i32) {
    %c0_i32 = arith.constant 0 : i32
    %c0_i32_0 = arith.constant 0 : i32
    %c0_i32_1 = arith.constant 0 : i32
    return %c0_i32, %c0_i32_0 : i32, i32
  }
  func.func @transform_3(%arg0: i32) -> (i32, i32) {
    %c0_i32 = arith.constant 0 : i32
    %c0_i32_0 = arith.constant 0 : i32
    %c0_i32_1 = arith.constant 0 : i32
    return %c0_i32, %c0_i32_0 : i32, i32
  }
  func.func @transform_4(%arg0: i32) -> (i32, i32) {
    %c0_i32 = arith.constant 0 : i32
    %c0_i32_0 = arith.constant 0 : i32
    %c0_i32_1 = arith.constant 0 : i32
    return %c0_i32, %c0_i32_0 : i32, i32
  }
  func.func @transform_5(%arg0: i32) -> (i32, i32) {
    %c0_i32 = arith.constant 0 : i32
    %c0_i32_0 = arith.constant 0 : i32
    %c0_i32_1 = arith.constant 0 : i32
    return %c0_i32, %c0_i32_0 : i32, i32
  }
  func.func @transform_6(%arg0: i32) -> (i32, i32) {
    %c0_i32 = arith.constant 0 : i32
    %c0_i32_0 = arith.constant 0 : i32
    %c0_i32_1 = arith.constant 0 : i32
    return %c0_i32, %c0_i32_0 : i32, i32
  }
  func.func @transform_7(%arg0: i32) -> (i32, i32) {
    %c0_i32 = arith.constant 0 : i32
    %c0_i32_0 = arith.constant 0 : i32
    %c0_i32_1 = arith.constant 0 : i32
    return %c0_i32, %c0_i32_0 : i32, i32
  }
  func.func @transform_8(%arg0: i32) -> (i32, i32) {
    %c0_i32 = arith.constant 0 : i32
    %c0_i32_0 = arith.constant 0 : i32
    %c0_i32_1 = arith.constant 0 : i32
    return %c0_i32, %c0_i32_0 : i32, i32
  }
  func.func @transform_9(%arg0: i32) -> (i32, i32, i32) {
    %c0_i32 = arith.constant 0 : i32
    %c0_i32_0 = arith.constant 0 : i32
    %c0_i32_1 = arith.constant 0 : i32
    return %arg0, %c0_i32, %c0_i32_0 : i32, i32, i32
  }
}

</mosaic_0001>

<llo_original>
// kernel: simple1dconvnet_forward.1
$region0: #{simple1dconvnet_forward.1}
  #allocation0 [shape = 'u32[]', space=smem, size = 0x4, offset = 0x4, fixed_abs, tag = 'smem constant byte address 0x4 - core index']
  #allocation1 [shape = 'u32[144,128]{1,0:T(1,128)}', space=vmem, size = 0x12000, scoped, tag = 'internal scratch']
  #allocation2 [shape = 'f32[264,256]{1,0:T(8,128)}', space=vmem, size = 0x42000, scoped, tag = 'scratch operand']
  %s0 = inlined_call_operand.vmem [shape: f32[1,24,256], index: 0, kind: input, shape index: {}]
  %s1 = inlined_call_operand.vmem [shape: f32[8,264], index: 1, kind: input, shape index: {}]
  %s2 = inlined_call_operand.vmem [shape: f32[8,1], index: 2, kind: input, shape index: {}]
  %s3 = inlined_call_operand.vmem [shape: f32[16,88], index: 3, kind: input, shape index: {}]
  %s4 = inlined_call_operand.vmem [shape: f32[16,1], index: 4, kind: input, shape index: {}]
  %s5 = inlined_call_operand.vmem [shape: f32[32,48], index: 5, kind: input, shape index: {}]
  %s6 = inlined_call_operand.vmem [shape: f32[32,1], index: 6, kind: input, shape index: {}]
  %s7 = inlined_call_operand.hbm [shape: bf16[4096,128], index: 7, kind: input, shape index: {}]
  %s8 = inlined_call_operand.vmem [shape: f32[1,128], index: 8, kind: input, shape index: {}]
  %s9 = inlined_call_operand.hbm [shape: f32[1,2,128], index: 9, kind: output, shape index: {}]
  %s10 = sld [smem:[#allocation0]]
  $region50: #{simple1dconvnet_forward.1} parent=0
    _
  %s12 = ssub.s32 1, %s10
  %s13 = scalar_select 0, %s12, %s10
  $region1: #{simple1dconvnet_forward.1} parent=0
    #allocation3 [shape = 'u8[1048576]{0}', space=vmem, size = 0x100000, scoped, tag = 'input window, operand 7, single buffered']
    #allocation4 [shape = 's32[1]{0}', space=sflag, size = 0x4, scoped, tag = 'scoped memory for simple1dconvnet_forward.1']
    #allocation5 [shape = 's32[1]{0}', space=sflag, size = 0x4, scoped, tag = 'scoped memory for simple1dconvnet_forward.1']
    #allocation6 [shape = 'u8[1024]{0}', space=vmem, size = 0x400, scoped, tag = 'output window, operand 0, single buffered']
    %14 = vsyncpa [#allocation4], 0
    %15 = vsyncpa [#allocation5], 0
    // Predicated region
    $region2: #{simple1dconvnet_forward.1} parent=1 // pred_check
      _
    $region3: #{simple1dconvnet_forward.1} parent=1 // pred_check_branch
      %17 = sbr.rel (0) target = $region5
    $region4: #{simple1dconvnet_forward.1} parent=1 // pred_region
      _
    $region5: #{simple1dconvnet_forward.1} parent=1 // pred_fallthru
      _
    // Predicated region
    $region6: #{simple1dconvnet_forward.1} parent=1 // pred_check
      _
    $region7: #{simple1dconvnet_forward.1} parent=1 // pred_check_branch
      %19 = sbr.rel (0) target = $region9
    $region8: #{simple1dconvnet_forward.1} parent=1 // pred_region
      _
    $region9: #{simple1dconvnet_forward.1} parent=1 // pred_fallthru
      _
    // Predicated region
    $region10: #{simple1dconvnet_forward.1} parent=1 // pred_check
      _
    $region11: #{simple1dconvnet_forward.1} parent=1 // pred_check_branch
      %21 = sbr.rel (0) target = $region13
    $region12: #{simple1dconvnet_forward.1} parent=1 // pred_region
      _
    $region13: #{simple1dconvnet_forward.1} parent=1 // pred_fallthru
      _
    // Predicated region
    $region14: #{simple1dconvnet_forward.1} parent=1 // pred_check
      _
    $region15: #{simple1dconvnet_forward.1} parent=1 // pred_check_branch
      %23 = sbr.rel (0) target = $region17
    $region16: #{simple1dconvnet_forward.1} parent=1 // pred_region
      _
    $region17: #{simple1dconvnet_forward.1} parent=1 // pred_fallthru
      _
    // Predicated region
    $region18: #{simple1dconvnet_forward.1} parent=1 // pred_check
      _
    $region19: #{simple1dconvnet_forward.1} parent=1 // pred_check_branch
      %25 = sbr.rel (0) target = $region21
    $region20: #{simple1dconvnet_forward.1} parent=1 // pred_region
      _
    $region21: #{simple1dconvnet_forward.1} parent=1 // pred_fallthru
      _
    // Predicated region
    $region22: #{simple1dconvnet_forward.1} parent=1 // pred_check
      _
    $region23: #{simple1dconvnet_forward.1} parent=1 // pred_check_branch
      %27 = sbr.rel (0) target = $region25
    $region24: #{simple1dconvnet_forward.1} parent=1 // pred_region
      _
    $region25: #{simple1dconvnet_forward.1} parent=1 // pred_fallthru
      _
    // Predicated region
    $region26: #{simple1dconvnet_forward.1} parent=1 // pred_check
      _
    $region27: #{simple1dconvnet_forward.1} parent=1 // pred_check_branch
      %29 = sbr.rel (0) target = $region29
    $region28: #{simple1dconvnet_forward.1} parent=1 // pred_region
      _
    $region29: #{simple1dconvnet_forward.1} parent=1 // pred_fallthru
      _
    // Predicated region
    $region30: #{simple1dconvnet_forward.1} parent=1 // pred_check
      _
    $region31: #{simple1dconvnet_forward.1} parent=1 // pred_check_branch
      %31 = sbr.rel (0) target = $region33
    $region32: #{simple1dconvnet_forward.1} parent=1 // pred_region
      %s33 = ssub.s32 32768, 32768
      %34 = vsyncadd [#allocation4], %s33
      %s35 = sshll.u32 [#allocation3], 4
      %s36 = int_to_ptr.vmem [resolvable:$true] %s35
      %41 = dma.hbm_to_vmem [thread:$0]  %s7, 32768, %s36, [#allocation4], 64, 64, 4
    $region33: #{simple1dconvnet_forward.1} parent=1 // pred_fallthru
      _
    // Predicated region
    $region34: #{simple1dconvnet_forward.1} parent=1 // pred_check
      _
    $region35: #{simple1dconvnet_forward.1} parent=1 // pred_check_branch
      %43 = sbr.rel (0) target = $region37
    $region36: #{simple1dconvnet_forward.1} parent=1 // pred_region
      _
    $region37: #{simple1dconvnet_forward.1} parent=1 // pred_fallthru
      _
    // Predicated region
    $region38: #{simple1dconvnet_forward.1} parent=1 // pred_check
      _
    $region39: #{simple1dconvnet_forward.1} parent=1 // pred_check_branch
      %45 = sbr.rel (0) target = $region41
    $region40: #{simple1dconvnet_forward.1} parent=1 // pred_region
      %46 = dma.done [#allocation4], 32768
    $region41: #{simple1dconvnet_forward.1} parent=1 // pred_fallthru
      _
    %v48 = vlaneseq
    %v49 = vand.u32 %v48, 127
    %v50 = vadd.s32 %v49, 128
    %vm51 = vcmp.lt.s32.totalorder %v49, 0
    %v52 = vsub.s32 0, %v49
    %v53 = vsel %vm51, %v52, %v49
    %v54 = vshrl.u32 %v53, 7
    %v55 = vand.u32 %v53, 127
    %v56 = vsub.s32 0, %v55
    %v57 = vsel %vm51, %v56, %v55
    %vm58 = vcmp.lt.s32.totalorder %v50, 0
    %v59 = vsub.s32 0, %v50
    %v60 = vsel %vm58, %v59, %v50
    %v61 = vshrl.u32 %v60, 7
    %v62 = vand.u32 %v60, 127
    %v63 = vsub.s32 0, %v62
    %v64 = vsel %vm58, %v63, %v62
    %vm65 = vcmp.ne.s32.totalorder %v57, 0
    %vm66 = vcmp.ne.s32.totalorder %v64, 0
    %vm67 = vcmp.lt.s32.totalorder %v57, 0
    %vm68 = vcmp.lt.s32.totalorder %v64, 0
    %vm69 = vmand %vm67, %vm65
    %vm70 = vmand %vm68, %vm66
    %v71 = vadd.s32 %v57, 128
    %v72 = vadd.s32 %v64, 128
    %v73 = vsel %vm69, %v71, %v57
    %v74 = vsel %vm70, %v72, %v64
    %v75 = vld [vmem:[%s0] sm:$0xff]
    %v76 = vld [vmem:[%s0 + $0x8] sm:$0xff]
    %v77 = vld [vmem:[%s0 + $0x10] sm:$0xff]
    %v78 = vld [vmem:[%s0 + $0x18] sm:$0xff]
    %v79 = vld [vmem:[%s0 + $0x20] sm:$0xff]
    %v80 = vld [vmem:[%s0 + $0x28] sm:$0xff]
    %81 = vrot.lane.b32.xlu0 %v75, 5
    %v82 = vpop.permute.xlu0 %81
    %83 = vrot.lane.b32.xlu0 %v77, 5
    %v84 = vpop.permute.xlu0 %83
    %85 = vrot.lane.b32.xlu0 %v79, 5
    %v86 = vpop.permute.xlu0 %85
    %87 = vrot.lane.b32.xlu0 %v76, 5
    %v88 = vpop.permute.xlu0 %87
    %89 = vrot.lane.b32.xlu0 %v78, 5
    %v90 = vpop.permute.xlu0 %89
    %91 = vrot.lane.b32.xlu0 %v80, 5
    %v92 = vpop.permute.xlu0 %91
    %vm93 = vcmp.lt.s32.totalorder %v49, 5
    %v94 = vsel %vm93, %v82, %v88
    %v95 = vsel %vm93, %v84, %v90
    %v96 = vsel %vm93, %v86, %v92
    %v97 = vsel %vm93, %v88, %v82
    %v98 = vsel %vm93, %v90, %v84
    %v99 = vsel %vm93, %v92, %v86
    %vm100 = vcmp.ge.s32.totalorder %v73, 5
    %vm101 = vcmp.ge.s32.totalorder %v74, 5
    %v102 = vsel %vm100, 1, 0
    %v103 = vsel %vm101, 1, 0
    %vm104 = vcmp.eq.s32.totalorder %v102, 1
    %vm105 = vcmp.eq.s32.totalorder %v103, 1
    %v106 = vsel %vm104, %v97, 0.0
    %v107 = vsel %vm105, %v94, 0.0
    %v108 = vsel %vm104, %v98, 0.0
    %v109 = vsel %vm105, %v95, 0.0
    %v110 = vsel %vm104, %v99, 0.0
    %v111 = vsel %vm105, %v96, 0.0
    %112 = vst [vmem:[#allocation2] sm:$0xff] %v106
    %113 = vst [vmem:[#allocation2 + $0x8] sm:$0xff] %v107
    %114 = vst [vmem:[#allocation2 + $0x10] sm:$0xff] %v108
    %115 = vst [vmem:[#allocation2 + $0x18] sm:$0xff] %v109
    %116 = vst [vmem:[#allocation2 + $0x20] sm:$0xff] %v110
    %117 = vst [vmem:[#allocation2 + $0x28] sm:$0xff] %v111
    %118 = vrot.lane.b32.xlu0 %v75, 4
    %v119 = vpop.permute.xlu0 %118
    %120 = vrot.lane.b32.xlu0 %v77, 4
    %v121 = vpop.permute.xlu0 %120
    %122 = vrot.lane.b32.xlu0 %v79, 4
    %v123 = vpop.permute.xlu0 %122
    %124 = vrot.lane.b32.xlu0 %v76, 4
    %v125 = vpop.permute.xlu0 %124
    %126 = vrot.lane.b32.xlu0 %v78, 4
    %v127 = vpop.permute.xlu0 %126
    %128 = vrot.lane.b32.xlu0 %v80, 4
    %v129 = vpop.permute.xlu0 %128
    %vm130 = vcmp.lt.s32.totalorder %v49, 4
    %v131 = vsel %vm130, %v119, %v125
    %v132 = vsel %vm130, %v121, %v127
    %v133 = vsel %vm130, %v123, %v129
    %v134 = vsel %vm130, %v125, %v119
    %v135 = vsel %vm130, %v127, %v121
    %v136 = vsel %vm130, %v129, %v123
    %vm137 = vcmp.ge.s32.totalorder %v73, 4
    %vm138 = vcmp.ge.s32.totalorder %v74, 4
    %v139 = vsel %vm137, 1, 0
    %v140 = vsel %vm138, 1, 0
    %vm141 = vcmp.eq.s32.totalorder %v139, 1
    %vm142 = vcmp.eq.s32.totalorder %v140, 1
    %v143 = vsel %vm141, %v134, 0.0
    %v144 = vsel %vm142, %v131, 0.0
    %v145 = vsel %vm141, %v135, 0.0
    %v146 = vsel %vm142, %v132, 0.0
    %v147 = vsel %vm141, %v136, 0.0
    %v148 = vsel %vm142, %v133, 0.0
    %149 = vst [vmem:[#allocation2 + $0x30] sm:$0xff] %v143
    %150 = vst [vmem:[#allocation2 + $0x38] sm:$0xff] %v144
    %151 = vst [vmem:[#allocation2 + $0x40] sm:$0xff] %v145
    %152 = vst [vmem:[#allocation2 + $0x48] sm:$0xff] %v146
    %153 = vst [vmem:[#allocation2 + $0x50] sm:$0xff] %v147
    %154 = vst [vmem:[#allocation2 + $0x58] sm:$0xff] %v148
    %155 = vrot.lane.b32.xlu0 %v75, 3
    %v156 = vpop.permute.xlu0 %155
    %157 = vrot.lane.b32.xlu0 %v77, 3
    %v158 = vpop.permute.xlu0 %157
    %159 = vrot.lane.b32.xlu0 %v79, 3
    %v160 = vpop.permute.xlu0 %159
    %161 = vrot.lane.b32.xlu0 %v76, 3
    %v162 = vpop.permute.xlu0 %161
    %163 = vrot.lane.b32.xlu0 %v78, 3
    %v164 = vpop.permute.xlu0 %163
    %165 = vrot.lane.b32.xlu0 %v80, 3
    %v166 = vpop.permute.xlu0 %165
    %vm167 = vcmp.lt.s32.totalorder %v49, 3
    %v168 = vsel %vm167, %v156, %v162
    %v169 = vsel %vm167, %v158, %v164
    %v170 = vsel %vm167, %v160, %v166
    %v171 = vsel %vm167, %v162, %v156
    %v172 = vsel %vm167, %v164, %v158
    %v173 = vsel %vm167, %v166, %v160
    %vm174 = vcmp.ge.s32.totalorder %v73, 3
    %vm175 = vcmp.ge.s32.totalorder %v74, 3
    %v176 = vsel %vm174, 1, 0
    %v177 = vsel %vm175, 1, 0
    %vm178 = vcmp.eq.s32.totalorder %v176, 1
    %vm179 = vcmp.eq.s32.totalorder %v177, 1
    %v180 = vsel %vm178, %v171, 0.0
    %v181 = vsel %vm179, %v168, 0.0
    %v182 = vsel %vm178, %v172, 0.0
    %v183 = vsel %vm179, %v169, 0.0
    %v184 = vsel %vm178, %v173, 0.0
    %v185 = vsel %vm179, %v170, 0.0
    %186 = vst [vmem:[#allocation2 + $0x60] sm:$0xff] %v180
    %187 = vst [vmem:[#allocation2 + $0x68] sm:$0xff] %v181
    %188 = vst [vmem:[#allocation2 + $0x70] sm:$0xff] %v182
    %189 = vst [vmem:[#allocation2 + $0x78] sm:$0xff] %v183
    %190 = vst [vmem:[#allocation2 + $0x80] sm:$0xff] %v184
    %191 = vst [vmem:[#allocation2 + $0x88] sm:$0xff] %v185
    %192 = vrot.lane.b32.xlu0 %v75, 2
    %v193 = vpop.permute.xlu0 %192
    %194 = vrot.lane.b32.xlu0 %v77, 2
    %v195 = vpop.permute.xlu0 %194
    %196 = vrot.lane.b32.xlu0 %v79, 2
    %v197 = vpop.permute.xlu0 %196
    %198 = vrot.lane.b32.xlu0 %v76, 2
    %v199 = vpop.permute.xlu0 %198
    %200 = vrot.lane.b32.xlu0 %v78, 2
    %v201 = vpop.permute.xlu0 %200
    %202 = vrot.lane.b32.xlu0 %v80, 2
    %v203 = vpop.permute.xlu0 %202
    %vm204 = vcmp.lt.s32.totalorder %v49, 2
    %v205 = vsel %vm204, %v193, %v199
    %v206 = vsel %vm204, %v195, %v201
    %v207 = vsel %vm204, %v197, %v203
    %v208 = vsel %vm204, %v199, %v193
    %v209 = vsel %vm204, %v201, %v195
    %v210 = vsel %vm204, %v203, %v197
    %vm211 = vcmp.ge.s32.totalorder %v73, 2
    %vm212 = vcmp.ge.s32.totalorder %v74, 2
    %v213 = vsel %vm211, 1, 0
    %v214 = vsel %vm212, 1, 0
    %vm215 = vcmp.eq.s32.totalorder %v213, 1
    %vm216 = vcmp.eq.s32.totalorder %v214, 1
    %v217 = vsel %vm215, %v208, 0.0
    %v218 = vsel %vm216, %v205, 0.0
    %v219 = vsel %vm215, %v209, 0.0
    %v220 = vsel %vm216, %v206, 0.0
    %v221 = vsel %vm215, %v210, 0.0
    %v222 = vsel %vm216, %v207, 0.0
    %223 = vst [vmem:[#allocation2 + $0x90] sm:$0xff] %v217
    %224 = vst [vmem:[#allocation2 + $0x98] sm:$0xff] %v218
    %225 = vst [vmem:[#allocation2 + $0xa0] sm:$0xff] %v219
    %226 = vst [vmem:[#allocation2 + $0xa8] sm:$0xff] %v220
    %227 = vst [vmem:[#allocation2 + $0xb0] sm:$0xff] %v221
    %228 = vst [vmem:[#allocation2 + $0xb8] sm:$0xff] %v222
    %229 = vrot.lane.b32.xlu0 %v75, 1
    %v230 = vpop.permute.xlu0 %229
    %231 = vrot.lane.b32.xlu0 %v77, 1
    %v232 = vpop.permute.xlu0 %231
    %233 = vrot.lane.b32.xlu0 %v79, 1
    %v234 = vpop.permute.xlu0 %233
    %235 = vrot.lane.b32.xlu0 %v76, 1
    %v236 = vpop.permute.xlu0 %235
    %237 = vrot.lane.b32.xlu0 %v78, 1
    %v238 = vpop.permute.xlu0 %237
    %239 = vrot.lane.b32.xlu0 %v80, 1
    %v240 = vpop.permute.xlu0 %239
    %vm241 = vcmp.lt.s32.totalorder %v49, 1
    %v242 = vsel %vm241, %v230, %v236
    %v243 = vsel %vm241, %v232, %v238
    %v244 = vsel %vm241, %v234, %v240
    %v245 = vsel %vm241, %v236, %v230
    %v246 = vsel %vm241, %v238, %v232
    %v247 = vsel %vm241, %v240, %v234
    %vm248 = vcmp.ge.s32.totalorder %v73, 1
    %vm249 = vcmp.ge.s32.totalorder %v74, 1
    %v250 = vsel %vm248, 1, 0
    %v251 = vsel %vm249, 1, 0
    %vm252 = vcmp.eq.s32.totalorder %v250, 1
    %vm253 = vcmp.eq.s32.totalorder %v251, 1
    %v254 = vsel %vm252, %v245, 0.0
    %v255 = vsel %vm253, %v242, 0.0
    %v256 = vsel %vm252, %v246, 0.0
    %v257 = vsel %vm253, %v243, 0.0
    %v258 = vsel %vm252, %v247, 0.0
    %v259 = vsel %vm253, %v244, 0.0
    %260 = vst [vmem:[#allocation2 + $0xc0] sm:$0xff] %v254
    %261 = vst [vmem:[#allocation2 + $0xc8] sm:$0xff] %v255
    %262 = vst [vmem:[#allocation2 + $0xd0] sm:$0xff] %v256
    %263 = vst [vmem:[#allocation2 + $0xd8] sm:$0xff] %v257
    %264 = vst [vmem:[#allocation2 + $0xe0] sm:$0xff] %v258
    %265 = vst [vmem:[#allocation2 + $0xe8] sm:$0xff] %v259
    %266 = vst [vmem:[#allocation2 + $0xf0] sm:$0xff] %v75
    %267 = vst [vmem:[#allocation2 + $0xf8] sm:$0xff] %v76
    %268 = vst [vmem:[#allocation2 + $0x100] sm:$0xff] %v77
    %269 = vst [vmem:[#allocation2 + $0x108] sm:$0xff] %v78
    %270 = vst [vmem:[#allocation2 + $0x110] sm:$0xff] %v79
    %271 = vst [vmem:[#allocation2 + $0x118] sm:$0xff] %v80
    %272 = vrot.lane.b32.xlu0 %v75, 127
    %v273 = vpop.permute.xlu0 %272
    %274 = vrot.lane.b32.xlu0 %v77, 127
    %v275 = vpop.permute.xlu0 %274
    %276 = vrot.lane.b32.xlu0 %v79, 127
    %v277 = vpop.permute.xlu0 %276
    %278 = vrot.lane.b32.xlu0 %v76, 127
    %v279 = vpop.permute.xlu0 %278
    %280 = vrot.lane.b32.xlu0 %v78, 127
    %v281 = vpop.permute.xlu0 %280
    %282 = vrot.lane.b32.xlu0 %v80, 127
    %v283 = vpop.permute.xlu0 %282
    %vm284 = vcmp.lt.s32.totalorder %v49, 127
    %v285 = vsel %vm284, %v273, %v279
    %v286 = vsel %vm284, %v275, %v281
    %v287 = vsel %vm284, %v277, %v283
    %v288 = vsel %vm284, %v279, %v273
    %v289 = vsel %vm284, %v281, %v275
    %v290 = vsel %vm284, %v283, %v277
    %vm291 = vcmp.lt.s32.totalorder %v73, 127
    %vm292 = vcmp.lt.s32.totalorder %v74, 127
    %v293 = vsel %vm291, 1, 0
    %v294 = vsel %vm292, 1, 0
    %vm295 = vcmp.eq.s32.totalorder %v293, 1
    %vm296 = vcmp.eq.s32.totalorder %v294, 1
    %v297 = vsel %vm295, %v285, 0.0
    %v298 = vsel %vm296, %v288, 0.0
    %v299 = vsel %vm295, %v286, 0.0
    %v300 = vsel %vm296, %v289, 0.0
    %v301 = vsel %vm295, %v287, 0.0
    %v302 = vsel %vm296, %v290, 0.0
    %303 = vst [vmem:[#allocation2 + $0x120] sm:$0xff] %v297
    %304 = vst [vmem:[#allocation2 + $0x128] sm:$0xff] %v298
    %305 = vst [vmem:[#allocation2 + $0x130] sm:$0xff] %v299
    %306 = vst [vmem:[#allocation2 + $0x138] sm:$0xff] %v300
    %307 = vst [vmem:[#allocation2 + $0x140] sm:$0xff] %v301
    %308 = vst [vmem:[#allocation2 + $0x148] sm:$0xff] %v302
    %309 = vrot.lane.b32.xlu0 %v75, 126
    %v310 = vpop.permute.xlu0 %309
    %311 = vrot.lane.b32.xlu0 %v77, 126
    %v312 = vpop.permute.xlu0 %311
    %313 = vrot.lane.b32.xlu0 %v79, 126
    %v314 = vpop.permute.xlu0 %313
    %315 = vrot.lane.b32.xlu0 %v76, 126
    %v316 = vpop.permute.xlu0 %315
    %317 = vrot.lane.b32.xlu0 %v78, 126
    %v318 = vpop.permute.xlu0 %317
    %319 = vrot.lane.b32.xlu0 %v80, 126
    %v320 = vpop.permute.xlu0 %319
    %vm321 = vcmp.lt.s32.totalorder %v49, 126
    %v322 = vsel %vm321, %v310, %v316
    %v323 = vsel %vm321, %v312, %v318
    %v324 = vsel %vm321, %v314, %v320
    %v325 = vsel %vm321, %v316, %v310
    %v326 = vsel %vm321, %v318, %v312
    %v327 = vsel %vm321, %v320, %v314
    %vm328 = vcmp.lt.s32.totalorder %v73, 126
    %vm329 = vcmp.lt.s32.totalorder %v74, 126
    %v330 = vsel %vm328, 1, 0
    %v331 = vsel %vm329, 1, 0
    %vm332 = vcmp.eq.s32.totalorder %v330, 1
    %vm333 = vcmp.eq.s32.totalorder %v331, 1
    %v334 = vsel %vm332, %v322, 0.0
    %v335 = vsel %vm333, %v325, 0.0
    %v336 = vsel %vm332, %v323, 0.0
    %v337 = vsel %vm333, %v326, 0.0
    %v338 = vsel %vm332, %v324, 0.0
    %v339 = vsel %vm333, %v327, 0.0
    %340 = vst [vmem:[#allocation2 + $0x150] sm:$0xff] %v334
    %341 = vst [vmem:[#allocation2 + $0x158] sm:$0xff] %v335
    %342 = vst [vmem:[#allocation2 + $0x160] sm:$0xff] %v336
    %343 = vst [vmem:[#allocation2 + $0x168] sm:$0xff] %v337
    %344 = vst [vmem:[#allocation2 + $0x170] sm:$0xff] %v338
    %345 = vst [vmem:[#allocation2 + $0x178] sm:$0xff] %v339
    %346 = vrot.lane.b32.xlu0 %v75, 125
    %v347 = vpop.permute.xlu0 %346
    %348 = vrot.lane.b32.xlu0 %v77, 125
    %v349 = vpop.permute.xlu0 %348
    %350 = vrot.lane.b32.xlu0 %v79, 125
    %v351 = vpop.permute.xlu0 %350
    %352 = vrot.lane.b32.xlu0 %v76, 125
    %v353 = vpop.permute.xlu0 %352
    %354 = vrot.lane.b32.xlu0 %v78, 125
    %v355 = vpop.permute.xlu0 %354
    %356 = vrot.lane.b32.xlu0 %v80, 125
    %v357 = vpop.permute.xlu0 %356
    %vm358 = vcmp.lt.s32.totalorder %v49, 125
    %v359 = vsel %vm358, %v347, %v353
    %v360 = vsel %vm358, %v349, %v355
    %v361 = vsel %vm358, %v351, %v357
    %v362 = vsel %vm358, %v353, %v347
    %v363 = vsel %vm358, %v355, %v349
    %v364 = vsel %vm358, %v357, %v351
    %vm365 = vcmp.lt.s32.totalorder %v73, 125
    %vm366 = vcmp.lt.s32.totalorder %v74, 125
    %v367 = vsel %vm365, 1, 0
    %v368 = vsel %vm366, 1, 0
    %vm369 = vcmp.eq.s32.totalorder %v367, 1
    %vm370 = vcmp.eq.s32.totalorder %v368, 1
    %v371 = vsel %vm369, %v359, 0.0
    %v372 = vsel %vm370, %v362, 0.0
    %v373 = vsel %vm369, %v360, 0.0
    %v374 = vsel %vm370, %v363, 0.0
    %v375 = vsel %vm369, %v361, 0.0
    %v376 = vsel %vm370, %v364, 0.0
    %377 = vst [vmem:[#allocation2 + $0x180] sm:$0xff] %v371
    %378 = vst [vmem:[#allocation2 + $0x188] sm:$0xff] %v372
    %379 = vst [vmem:[#allocation2 + $0x190] sm:$0xff] %v373
    %380 = vst [vmem:[#allocation2 + $0x198] sm:$0xff] %v374
    %381 = vst [vmem:[#allocation2 + $0x1a0] sm:$0xff] %v375
    %382 = vst [vmem:[#allocation2 + $0x1a8] sm:$0xff] %v376
    %383 = vrot.lane.b32.xlu0 %v75, 124
    %v384 = vpop.permute.xlu0 %383
    %385 = vrot.lane.b32.xlu0 %v77, 124
    %v386 = vpop.permute.xlu0 %385
    %387 = vrot.lane.b32.xlu0 %v79, 124
    %v388 = vpop.permute.xlu0 %387
    %389 = vrot.lane.b32.xlu0 %v76, 124
    %v390 = vpop.permute.xlu0 %389
    %391 = vrot.lane.b32.xlu0 %v78, 124
    %v392 = vpop.permute.xlu0 %391
    %393 = vrot.lane.b32.xlu0 %v80, 124
    %v394 = vpop.permute.xlu0 %393
    %vm395 = vcmp.lt.s32.totalorder %v49, 124
    %v396 = vsel %vm395, %v384, %v390
    %v397 = vsel %vm395, %v386, %v392
    %v398 = vsel %vm395, %v388, %v394
    %v399 = vsel %vm395, %v390, %v384
    %v400 = vsel %vm395, %v392, %v386
    %v401 = vsel %vm395, %v394, %v388
    %vm402 = vcmp.lt.s32.totalorder %v73, 124
    %vm403 = vcmp.lt.s32.totalorder %v74, 124
    %v404 = vsel %vm402, 1, 0
    %v405 = vsel %vm403, 1, 0
    %vm406 = vcmp.eq.s32.totalorder %v404, 1
    %vm407 = vcmp.eq.s32.totalorder %v405, 1
    %v408 = vsel %vm406, %v396, 0.0
    %v409 = vsel %vm407, %v399, 0.0
    %v410 = vsel %vm406, %v397, 0.0
    %v411 = vsel %vm407, %v400, 0.0
    %v412 = vsel %vm406, %v398, 0.0
    %v413 = vsel %vm407, %v401, 0.0
    %414 = vst [vmem:[#allocation2 + $0x1b0] sm:$0xff] %v408
    %415 = vst [vmem:[#allocation2 + $0x1b8] sm:$0xff] %v409
    %416 = vst [vmem:[#allocation2 + $0x1c0] sm:$0xff] %v410
    %417 = vst [vmem:[#allocation2 + $0x1c8] sm:$0xff] %v411
    %418 = vst [vmem:[#allocation2 + $0x1d0] sm:$0xff] %v412
    %419 = vst [vmem:[#allocation2 + $0x1d8] sm:$0xff] %v413
    %420 = vrot.lane.b32.xlu0 %v75, 123
    %v421 = vpop.permute.xlu0 %420
    %422 = vrot.lane.b32.xlu0 %v77, 123
    %v423 = vpop.permute.xlu0 %422
    %424 = vrot.lane.b32.xlu0 %v79, 123
    %v425 = vpop.permute.xlu0 %424
    %426 = vrot.lane.b32.xlu0 %v76, 123
    %v427 = vpop.permute.xlu0 %426
    %428 = vrot.lane.b32.xlu0 %v78, 123
    %v429 = vpop.permute.xlu0 %428
    %430 = vrot.lane.b32.xlu0 %v80, 123
    %v431 = vpop.permute.xlu0 %430
    %vm432 = vcmp.lt.s32.totalorder %v49, 123
    %v433 = vsel %vm432, %v421, %v427
    %v434 = vsel %vm432, %v423, %v429
    %v435 = vsel %vm432, %v425, %v431
    %v436 = vsel %vm432, %v427, %v421
    %v437 = vsel %vm432, %v429, %v423
    %v438 = vsel %vm432, %v431, %v425
    %vm439 = vcmp.lt.s32.totalorder %v73, 123
    %vm440 = vcmp.lt.s32.totalorder %v74, 123
    %v441 = vsel %vm439, 1, 0
    %v442 = vsel %vm440, 1, 0
    %vm443 = vcmp.eq.s32.totalorder %v441, 1
    %vm444 = vcmp.eq.s32.totalorder %v442, 1
    %v445 = vsel %vm443, %v433, 0.0
    %v446 = vsel %vm444, %v436, 0.0
    %v447 = vsel %vm443, %v434, 0.0
    %v448 = vsel %vm444, %v437, 0.0
    %v449 = vsel %vm443, %v435, 0.0
    %v450 = vsel %vm444, %v438, 0.0
    %451 = vst [vmem:[#allocation2 + $0x1e0] sm:$0xff] %v445
    %452 = vst [vmem:[#allocation2 + $0x1e8] sm:$0xff] %v446
    %453 = vst [vmem:[#allocation2 + $0x1f0] sm:$0xff] %v447
    %454 = vst [vmem:[#allocation2 + $0x1f8] sm:$0xff] %v448
    %455 = vst [vmem:[#allocation2 + $0x200] sm:$0xff] %v449
    %456 = vst [vmem:[#allocation2 + $0x208] sm:$0xff] %v450
    %v457 = vld [vmem:[%s1] sm:$0xff]
    %v458 = vld [vmem:[%s1 + $0x8] sm:$0xff]
    %v459 = vld [vmem:[%s1 + $0x10] sm:$0xff]
    %v460 = vld [vmem:[#allocation2] sm:$0xff]
    %v461 = vld [vmem:[#allocation2 + $0x8] sm:$0xff]
    %v462 = vld [vmem:[#allocation2 + $0x10] sm:$0xff]
    %v463 = vld [vmem:[#allocation2 + $0x18] sm:$0xff]
    %v464 = vld [vmem:[#allocation2 + $0x20] sm:$0xff]
    %v465 = vld [vmem:[#allocation2 + $0x28] sm:$0xff]
    %v466 = vld [vmem:[#allocation2 + $0x30] sm:$0xff]
    %v467 = vld [vmem:[#allocation2 + $0x38] sm:$0xff]
    %v468 = vld [vmem:[#allocation2 + $0x40] sm:$0xff]
    %v469 = vld [vmem:[#allocation2 + $0x48] sm:$0xff]
    %v470 = vld [vmem:[#allocation2 + $0x50] sm:$0xff]
    %v471 = vld [vmem:[#allocation2 + $0x58] sm:$0xff]
    %v472 = vld [vmem:[#allocation2 + $0x60] sm:$0xff]
    %v473 = vld [vmem:[#allocation2 + $0x68] sm:$0xff]
    %v474 = vld [vmem:[#allocation2 + $0x70] sm:$0xff]
    %v475 = vld [vmem:[#allocation2 + $0x78] sm:$0xff]
    %v476 = vld [vmem:[#allocation2 + $0x80] sm:$0xff]
    %v477 = vld [vmem:[#allocation2 + $0x88] sm:$0xff]
    %v478 = vld [vmem:[#allocation2 + $0x90] sm:$0xff]
    %v479 = vld [vmem:[#allocation2 + $0x98] sm:$0xff]
    %v480 = vld [vmem:[#allocation2 + $0xa0] sm:$0xff]
    %v481 = vld [vmem:[#allocation2 + $0xa8] sm:$0xff]
    %v482 = vld [vmem:[#allocation2 + $0xb0] sm:$0xff]
    %v483 = vld [vmem:[#allocation2 + $0xb8] sm:$0xff]
    %v484 = vld [vmem:[#allocation2 + $0xc0] sm:$0xff]
    %v485 = vld [vmem:[#allocation2 + $0xc8] sm:$0xff]
    %v486 = vld [vmem:[#allocation2 + $0xd0] sm:$0xff]
    %v487 = vld [vmem:[#allocation2 + $0xd8] sm:$0xff]
    %v488 = vld [vmem:[#allocation2 + $0xe0] sm:$0xff]
    %v489 = vld [vmem:[#allocation2 + $0xe8] sm:$0xff]
    %v490 = vld [vmem:[#allocation2 + $0xf0] sm:$0xff]
    %v491 = vld [vmem:[#allocation2 + $0xf8] sm:$0xff]
    %v492 = vld [vmem:[#allocation2 + $0x100] sm:$0xff]
    %v493 = vld [vmem:[#allocation2 + $0x108] sm:$0xff]
    %v494 = vld [vmem:[#allocation2 + $0x110] sm:$0xff]
    %v495 = vld [vmem:[#allocation2 + $0x118] sm:$0xff]
    %v496 = vld [vmem:[#allocation2 + $0x120] sm:$0xff]
    %v497 = vld [vmem:[#allocation2 + $0x128] sm:$0xff]
    %v498 = vld [vmem:[#allocation2 + $0x130] sm:$0xff]
    %v499 = vld [vmem:[#allocation2 + $0x138] sm:$0xff]
    %v500 = vld [vmem:[#allocation2 + $0x140] sm:$0xff]
    %v501 = vld [vmem:[#allocation2 + $0x148] sm:$0xff]
    %v502 = vld [vmem:[#allocation2 + $0x150] sm:$0xff]
    %v503 = vld [vmem:[#allocation2 + $0x158] sm:$0xff]
    %v504 = vld [vmem:[#allocation2 + $0x160] sm:$0xff]
    %v505 = vld [vmem:[#allocation2 + $0x168] sm:$0xff]
    %v506 = vld [vmem:[#allocation2 + $0x170] sm:$0xff]
    %v507 = vld [vmem:[#allocation2 + $0x178] sm:$0xff]
    %v508 = vld [vmem:[#allocation2 + $0x180] sm:$0xff]
    %v509 = vld [vmem:[#allocation2 + $0x188] sm:$0xff]
    %v510 = vld [vmem:[#allocation2 + $0x190] sm:$0xff]
    %v511 = vld [vmem:[#allocation2 + $0x198] sm:$0xff]
    %v512 = vld [vmem:[#allocation2 + $0x1a0] sm:$0xff]
    %v513 = vld [vmem:[#allocation2 + $0x1a8] sm:$0xff]
    %v514 = vld [vmem:[#allocation2 + $0x1b0] sm:$0xff]
    %v515 = vld [vmem:[#allocation2 + $0x1b8] sm:$0xff]
    %v516 = vld [vmem:[#allocation2 + $0x1c0] sm:$0xff]
    %v517 = vld [vmem:[#allocation2 + $0x1c8] sm:$0xff]
    %v518 = vld [vmem:[#allocation2 + $0x1d0] sm:$0xff]
    %v519 = vld [vmem:[#allocation2 + $0x1d8] sm:$0xff]
    %v520 = vld [vmem:[#allocation2 + $0x1e0] sm:$0xff]
    %v521 = vld [vmem:[#allocation2 + $0x1e8] sm:$0xff]
    %v522 = vld [vmem:[#allocation2 + $0x1f0] sm:$0xff]
    %v523 = vld [vmem:[#allocation2 + $0x1f8] sm:$0xff]
    %v524 = vld [vmem:[#allocation2 + $0x200] sm:$0xff]
    %v525 = vld [vmem:[#allocation2 + $0x208] sm:$0xff]
    %v526 = vld [vmem:[%s2] sm:$0xff]
    %528 = vset.pattern.permute.xlu0 0
    %529 = vperm.xlu0 %528, %v526
    %v530 = vpop.permute.xlu0 %529
    %vm532 = vcmask 64512
    %v534 = vsel %vm532, %v459, 0
    %536 = vmatprep.subr.mxu0 %v491
    %537 = vmatpush1.msra.mxu0 %v490
    %538 = vmatprep.subr.mxu0 %v489
    %539 = vmatpush1.msra.mxu0 %v488
    %540 = vmatprep.subr.mxu0 %v487
    %541 = vmatpush1.msra.mxu0 %v486
    %542 = vmatprep.subr.mxu0 %v485
    %543 = vmatpush1.msra.mxu0 %v484
    %544 = vmatprep.subr.mxu0 %v483
    %545 = vmatpush1.msra.mxu0 %v482
    %546 = vmatprep.subr.mxu0 %v481
    %547 = vmatpush1.msra.mxu0 %v480
    %548 = vmatprep.subr.mxu0 %v479
    %549 = vmatpush1.msra.mxu0 %v478
    %550 = vmatprep.subr.mxu0 %v477
    %551 = vmatpush1.msra.mxu0 %v476
    %552 = vmatprep.subr.mxu0 %v475
    %553 = vmatpush1.msra.mxu0 %v474
    %554 = vmatprep.subr.mxu0 %v473
    %555 = vmatpush1.msra.mxu0 %v472
    %556 = vmatprep.subr.mxu0 %v471
    %557 = vmatpush1.msra.mxu0 %v470
    %558 = vmatprep.subr.mxu0 %v469
    %559 = vmatpush1.msra.mxu0 %v468
    %560 = vmatprep.subr.mxu0 %v467
    %561 = vmatpush1.msra.mxu0 %v466
    %562 = vmatprep.subr.mxu0 %v465
    %563 = vmatpush1.msra.mxu0 %v464
    %564 = vmatprep.subr.mxu0 %v463
    %565 = vmatpush1.msra.mxu0 %v462
    %566 = vmatprep.subr.mxu0 %v461
    %567 = vmatpush1.msra.mxu0 %v460
    %568 = vmatprep.subr.mxu0 %v523
    %569 = vmatpush2.msra.mxu0 %v522
    %570 = vmatprep.subr.mxu0 %v521
    %571 = vmatpush2.msra.mxu0 %v520
    %572 = vmatprep.subr.mxu0 %v519
    %573 = vmatpush2.msra.mxu0 %v518
    %574 = vmatprep.subr.mxu0 %v517
    %575 = vmatpush2.msra.mxu0 %v516
    %576 = vmatprep.subr.mxu0 %v515
    %577 = vmatpush2.msra.mxu0 %v514
    %578 = vmatprep.subr.mxu0 %v513
    %579 = vmatpush2.msra.mxu0 %v512
    %580 = vmatprep.subr.mxu0 %v511
    %581 = vmatpush2.msra.mxu0 %v510
    %582 = vmatprep.subr.mxu0 %v509
    %583 = vmatpush2.msra.mxu0 %v508
    %584 = vmatprep.subr.mxu0 %v507
    %585 = vmatpush2.msra.mxu0 %v506
    %586 = vmatprep.subr.mxu0 %v505
    %587 = vmatpush2.msra.mxu0 %v504
    %588 = vmatprep.subr.mxu0 %v503
    %589 = vmatpush2.msra.mxu0 %v502
    %590 = vmatprep.subr.mxu0 %v501
    %591 = vmatpush2.msra.mxu0 %v500
    %592 = vmatprep.subr.mxu0 %v499
    %593 = vmatpush2.msra.mxu0 %v498
    %594 = vmatprep.subr.mxu0 %v497
    %595 = vmatpush2.msra.mxu0 %v496
    %596 = vmatprep.subr.mxu0 %v495
    %597 = vmatpush2.msra.mxu0 %v494
    %598 = vmatprep.subr.mxu0 %v493
    %599 = vmatpush2.msra.mxu0 %v492
    %600 = vmatprep.mubr.f32.mxu0 %v458
    %601 = vmatmul.mubr.f32.gmra.mxu0 %v457
    %v602 = vpop.f32.mrf.mxu0
    %v603 = vadd.f32 %v530, %v602
    %v604 = vpop.f32.mrf.mxu0
    %v605 = vadd.f32 %v530, %v604
    %606 = vdwg.mxu0
    %607 = vmatprep.subr.mxu0 0.0
    %608 = vmatpush1.msra.mxu0 0.0
    %609 = vmatprep.subr.mxu0 0.0
    %610 = vmatpush1.msra.mxu0 0.0
    %611 = vmatprep.subr.mxu0 0.0
    %612 = vmatpush1.msra.mxu0 0.0
    %613 = vmatprep.subr.mxu0 0.0
    %614 = vmatpush1.msra.mxu0 0.0
    %615 = vmatprep.subr.mxu0 0.0
    %616 = vmatpush1.msra.mxu0 0.0
    %617 = vmatprep.subr.mxu0 0.0
    %618 = vmatpush1.msra.mxu0 0.0
    %619 = vmatprep.subr.mxu0 0.0
    %620 = vmatpush1.msra.mxu0 0.0
    %621 = vmatprep.subr.mxu0 0.0
    %622 = vmatpush1.msra.mxu0 0.0
    %623 = vmatprep.subr.mxu0 0.0
    %624 = vmatpush1.msra.mxu0 0.0
    %625 = vmatprep.subr.mxu0 0.0
    %626 = vmatpush1.msra.mxu0 0.0
    %627 = vmatprep.subr.mxu0 0.0
    %628 = vmatpush1.msra.mxu0 0.0
    %629 = vmatprep.subr.mxu0 0.0
    %630 = vmatpush1.msra.mxu0 0.0
    %631 = vmatprep.subr.mxu0 0.0
    %632 = vmatpush1.msra.mxu0 0.0
    %633 = vmatprep.subr.mxu0 0.0
    %634 = vmatpush1.msra.mxu0 0.0
    %635 = vmatprep.subr.mxu0 0.0
    %636 = vmatpush1.msra.mxu0 0.0
    %637 = vmatprep.subr.mxu0 %v525
    %638 = vmatpush1.msra.mxu0 %v524
    %639 = vmatprep.subr.mxu0 0.0
    %640 = vmatpush2.msra.mxu0 0.0
    %641 = vmatprep.subr.mxu0 0.0
    %642 = vmatpush2.msra.mxu0 0.0
    %643 = vmatprep.subr.mxu0 0.0
    %644 = vmatpush2.msra.mxu0 0.0
    %645 = vmatprep.subr.mxu0 0.0
    %646 = vmatpush2.msra.mxu0 0.0
    %647 = vmatprep.subr.mxu0 0.0
    %648 = vmatpush2.msra.mxu0 0.0
    %649 = vmatprep.subr.mxu0 0.0
    %650 = vmatpush2.msra.mxu0 0.0
    %651 = vmatprep.subr.mxu0 0.0
    %652 = vmatpush2.msra.mxu0 0.0
    %653 = vmatprep.subr.mxu0 0.0
    %654 = vmatpush2.msra.mxu0 0.0
    %655 = vmatprep.subr.mxu0 0.0
    %656 = vmatpush2.msra.mxu0 0.0
    %657 = vmatprep.subr.mxu0 0.0
    %658 = vmatpush2.msra.mxu0 0.0
    %659 = vmatprep.subr.mxu0 0.0
    %660 = vmatpush2.msra.mxu0 0.0
    %661 = vmatprep.subr.mxu0 0.0
    %662 = vmatpush2.msra.mxu0 0.0
    %663 = vmatprep.subr.mxu0 0.0
    %664 = vmatpush2.msra.mxu0 0.0
    %665 = vmatprep.subr.mxu0 0.0
    %666 = vmatpush2.msra.mxu0 0.0
    %667 = vmatprep.subr.mxu0 0.0
    %668 = vmatpush2.msra.mxu0 0.0
    %669 = vmatprep.subr.mxu0 0.0
    %670 = vmatpush2.msra.mxu0 0.0
    %671 = vmatprep.mubr.f32.mxu0 0.0
    %672 = vmatmul.mubr.f32.gmra.mxu0 %v534
    %v673 = vpop.f32.mrf.mxu0
    %v674 = vadd.f32 %v603, %v673
    %v675 = vpop.f32.mrf.mxu0
    %v676 = vadd.f32 %v605, %v675
    %677 = vdwg.mxu0
    %v678 = vmax.f32 %v674, 0.0
    %v679 = vmax.f32 %v676, 0.0
    %680 = vrot.lane.b32.xlu0 %v678, 5
    %v681 = vpop.permute.xlu0 %680
    %682 = vrot.lane.b32.xlu0 %v679, 5
    %v683 = vpop.permute.xlu0 %682
    %v684 = vsel %vm93, %v681, %v683
    %v685 = vsel %vm93, %v683, %v681
    %v686 = vsel %vm104, %v685, 0.0
    %v687 = vsel %vm105, %v684, 0.0
    %688 = vst [vmem:[#allocation2] sm:$0xff] %v686
    %689 = vst [vmem:[#allocation2 + $0x8] sm:$0xff] %v687
    %690 = vrot.lane.b32.xlu0 %v678, 4
    %v691 = vpop.permute.xlu0 %690
    %692 = vrot.lane.b32.xlu0 %v679, 4
    %v693 = vpop.permute.xlu0 %692
    %v694 = vsel %vm130, %v691, %v693
    %v695 = vsel %vm130, %v693, %v691
    %v696 = vsel %vm141, %v695, 0.0
    %v697 = vsel %vm142, %v694, 0.0
    %698 = vst [vmem:[#allocation2 + $0x10] sm:$0xff] %v696
    %699 = vst [vmem:[#allocation2 + $0x18] sm:$0xff] %v697
    %700 = vrot.lane.b32.xlu0 %v678, 3
    %v701 = vpop.permute.xlu0 %700
    %702 = vrot.lane.b32.xlu0 %v679, 3
    %v703 = vpop.permute.xlu0 %702
    %v704 = vsel %vm167, %v701, %v703
    %v705 = vsel %vm167, %v703, %v701
    %v706 = vsel %vm178, %v705, 0.0
    %v707 = vsel %vm179, %v704, 0.0
    %708 = vst [vmem:[#allocation2 + $0x20] sm:$0xff] %v706
    %709 = vst [vmem:[#allocation2 + $0x28] sm:$0xff] %v707
    %710 = vrot.lane.b32.xlu0 %v678, 2
    %v711 = vpop.permute.xlu0 %710
    %712 = vrot.lane.b32.xlu0 %v679, 2
    %v713 = vpop.permute.xlu0 %712
    %v714 = vsel %vm204, %v711, %v713
    %v715 = vsel %vm204, %v713, %v711
    %v716 = vsel %vm215, %v715, 0.0
    %v717 = vsel %vm216, %v714, 0.0
    %718 = vst [vmem:[#allocation2 + $0x30] sm:$0xff] %v716
    %719 = vst [vmem:[#allocation2 + $0x38] sm:$0xff] %v717
    %720 = vrot.lane.b32.xlu0 %v678, 1
    %v721 = vpop.permute.xlu0 %720
    %722 = vrot.lane.b32.xlu0 %v679, 1
    %v723 = vpop.permute.xlu0 %722
    %v724 = vsel %vm241, %v721, %v723
    %v725 = vsel %vm241, %v723, %v721
    %v726 = vsel %vm252, %v725, 0.0
    %v727 = vsel %vm253, %v724, 0.0
    %728 = vst [vmem:[#allocation2 + $0x40] sm:$0xff] %v726
    %729 = vst [vmem:[#allocation2 + $0x48] sm:$0xff] %v727
    %730 = vst [vmem:[#allocation2 + $0x50] sm:$0xff] %v678
    %731 = vst [vmem:[#allocation2 + $0x58] sm:$0xff] %v679
    %732 = vrot.lane.b32.xlu0 %v678, 127
    %v733 = vpop.permute.xlu0 %732
    %734 = vrot.lane.b32.xlu0 %v679, 127
    %v735 = vpop.permute.xlu0 %734
    %v736 = vsel %vm284, %v733, %v735
    %v737 = vsel %vm284, %v735, %v733
    %v738 = vsel %vm295, %v736, 0.0
    %v739 = vsel %vm296, %v737, 0.0
    %740 = vst [vmem:[#allocation2 + $0x60] sm:$0xff] %v738
    %741 = vst [vmem:[#allocation2 + $0x68] sm:$0xff] %v739
    %742 = vrot.lane.b32.xlu0 %v678, 126
    %v743 = vpop.permute.xlu0 %742
    %744 = vrot.lane.b32.xlu0 %v679, 126
    %v745 = vpop.permute.xlu0 %744
    %v746 = vsel %vm321, %v743, %v745
    %v747 = vsel %vm321, %v745, %v743
    %v748 = vsel %vm332, %v746, 0.0
    %v749 = vsel %vm333, %v747, 0.0
    %750 = vst [vmem:[#allocation2 + $0x70] sm:$0xff] %v748
    %751 = vst [vmem:[#allocation2 + $0x78] sm:$0xff] %v749
    %752 = vrot.lane.b32.xlu0 %v678, 125
    %v753 = vpop.permute.xlu0 %752
    %754 = vrot.lane.b32.xlu0 %v679, 125
    %v755 = vpop.permute.xlu0 %754
    %v756 = vsel %vm358, %v753, %v755
    %v757 = vsel %vm358, %v755, %v753
    %v758 = vsel %vm369, %v756, 0.0
    %v759 = vsel %vm370, %v757, 0.0
    %760 = vst [vmem:[#allocation2 + $0x80] sm:$0xff] %v758
    %761 = vst [vmem:[#allocation2 + $0x88] sm:$0xff] %v759
    %762 = vrot.lane.b32.xlu0 %v678, 124
    %v763 = vpop.permute.xlu0 %762
    %764 = vrot.lane.b32.xlu0 %v679, 124
    %v765 = vpop.permute.xlu0 %764
    %v766 = vsel %vm395, %v763, %v765
    %v767 = vsel %vm395, %v765, %v763
    %v768 = vsel %vm406, %v766, 0.0
    %v769 = vsel %vm407, %v767, 0.0
    %770 = vst [vmem:[#allocation2 + $0x90] sm:$0xff] %v768
    %771 = vst [vmem:[#allocation2 + $0x98] sm:$0xff] %v769
    %772 = vrot.lane.b32.xlu0 %v678, 123
    %v773 = vpop.permute.xlu0 %772
    %774 = vrot.lane.b32.xlu0 %v679, 123
    %v775 = vpop.permute.xlu0 %774
    %v776 = vsel %vm432, %v773, %v775
    %v777 = vsel %vm432, %v775, %v773
    %v778 = vsel %vm443, %v776, 0.0
    %v779 = vsel %vm444, %v777, 0.0
    %780 = vst [vmem:[#allocation2 + $0xa0] sm:$0xff] %v778
    %781 = vst [vmem:[#allocation2 + $0xa8] sm:$0xff] %v779
    %v782 = vld [vmem:[%s3] sm:$0xff]
    %v783 = vld [vmem:[%s3 + $0x8] sm:$0xff]
    %v784 = vld [vmem:[#allocation2] sm:$0xff]
    %v785 = vld [vmem:[#allocation2 + $0x8] sm:$0xff]
    %v786 = vld [vmem:[#allocation2 + $0x10] sm:$0xff]
    %v787 = vld [vmem:[#allocation2 + $0x18] sm:$0xff]
    %v788 = vld [vmem:[#allocation2 + $0x20] sm:$0xff]
    %v789 = vld [vmem:[#allocation2 + $0x28] sm:$0xff]
    %v790 = vld [vmem:[#allocation2 + $0x30] sm:$0xff]
    %v791 = vld [vmem:[#allocation2 + $0x38] sm:$0xff]
    %v792 = vld [vmem:[#allocation2 + $0x40] sm:$0xff]
    %v793 = vld [vmem:[#allocation2 + $0x48] sm:$0xff]
    %v794 = vld [vmem:[#allocation2 + $0x50] sm:$0xff]
    %v795 = vld [vmem:[#allocation2 + $0x58] sm:$0xff]
    %v796 = vld [vmem:[#allocation2 + $0x60] sm:$0xff]
    %v797 = vld [vmem:[#allocation2 + $0x68] sm:$0xff]
    %v798 = vld [vmem:[#allocation2 + $0x70] sm:$0xff]
    %v799 = vld [vmem:[#allocation2 + $0x78] sm:$0xff]
    %v800 = vld [vmem:[#allocation2 + $0x80] sm:$0xff]
    %v801 = vld [vmem:[#allocation2 + $0x88] sm:$0xff]
    %v802 = vld [vmem:[#allocation2 + $0x90] sm:$0xff]
    %v803 = vld [vmem:[#allocation2 + $0x98] sm:$0xff]
    %v804 = vld [vmem:[#allocation2 + $0xa0] sm:$0xff]
    %v805 = vld [vmem:[#allocation2 + $0xa8] sm:$0xff]
    %v806 = vld [vmem:[%s4] sm:$0xff]
    %v807 = vld [vmem:[%s4 + $0x8] sm:$0xff]
    %809 = vset.pattern.permute.xlu0 0
    %810 = vperm.xlu0 %809, %v806
    %v811 = vpop.permute.xlu0 %810
    %814 = vset.pattern.permute.xlu0 0
    %815 = vperm.xlu0 %814, %v807
    %v816 = vpop.permute.xlu0 %815
    %vm818 = vcmask 719872
    %v820 = vsel %vm818, %v782, 0
    %v823 = vsel %vm818, %v783, 0
    %825 = vmatprep.subr.mxu0 0.0
    %826 = vmatpush1.msra.mxu0 0.0
    %827 = vmatprep.subr.mxu0 0.0
    %828 = vmatpush1.msra.mxu0 0.0
    %829 = vmatprep.subr.mxu0 0.0
    %830 = vmatpush1.msra.mxu0 0.0
    %831 = vmatprep.subr.mxu0 0.0
    %832 = vmatpush1.msra.mxu0 0.0
    %833 = vmatprep.subr.mxu0 0.0
    %834 = vmatpush1.msra.mxu0 0.0
    %835 = vmatprep.subr.mxu0 %v805
    %836 = vmatpush1.msra.mxu0 %v804
    %837 = vmatprep.subr.mxu0 %v803
    %838 = vmatpush1.msra.mxu0 %v802
    %839 = vmatprep.subr.mxu0 %v801
    %840 = vmatpush1.msra.mxu0 %v800
    %841 = vmatprep.subr.mxu0 %v799
    %842 = vmatpush1.msra.mxu0 %v798
    %843 = vmatprep.subr.mxu0 %v797
    %844 = vmatpush1.msra.mxu0 %v796
    %845 = vmatprep.subr.mxu0 %v795
    %846 = vmatpush1.msra.mxu0 %v794
    %847 = vmatprep.subr.mxu0 %v793
    %848 = vmatpush1.msra.mxu0 %v792
    %849 = vmatprep.subr.mxu0 %v791
    %850 = vmatpush1.msra.mxu0 %v790
    %851 = vmatprep.subr.mxu0 %v789
    %852 = vmatpush1.msra.mxu0 %v788
    %853 = vmatprep.subr.mxu0 %v787
    %854 = vmatpush1.msra.mxu0 %v786
    %855 = vmatprep.subr.mxu0 %v785
    %856 = vmatpush1.msra.mxu0 %v784
    %857 = vmatprep.subr.mxu0 0.0
    %858 = vmatpush2.msra.mxu0 0.0
    %859 = vmatprep.subr.mxu0 0.0
    %860 = vmatpush2.msra.mxu0 0.0
    %861 = vmatprep.subr.mxu0 0.0
    %862 = vmatpush2.msra.mxu0 0.0
    %863 = vmatprep.subr.mxu0 0.0
    %864 = vmatpush2.msra.mxu0 0.0
    %865 = vmatprep.subr.mxu0 0.0
    %866 = vmatpush2.msra.mxu0 0.0
    %867 = vmatprep.subr.mxu0 0.0
    %868 = vmatpush2.msra.mxu0 0.0
    %869 = vmatprep.subr.mxu0 0.0
    %870 = vmatpush2.msra.mxu0 0.0
    %871 = vmatprep.subr.mxu0 0.0
    %872 = vmatpush2.msra.mxu0 0.0
    %873 = vmatprep.subr.mxu0 0.0
    %874 = vmatpush2.msra.mxu0 0.0
    %875 = vmatprep.subr.mxu0 0.0
    %876 = vmatpush2.msra.mxu0 0.0
    %877 = vmatprep.subr.mxu0 0.0
    %878 = vmatpush2.msra.mxu0 0.0
    %879 = vmatprep.subr.mxu0 0.0
    %880 = vmatpush2.msra.mxu0 0.0
    %881 = vmatprep.subr.mxu0 0.0
    %882 = vmatpush2.msra.mxu0 0.0
    %883 = vmatprep.subr.mxu0 0.0
    %884 = vmatpush2.msra.mxu0 0.0
    %885 = vmatprep.subr.mxu0 0.0
    %886 = vmatpush2.msra.mxu0 0.0
    %887 = vmatprep.subr.mxu0 0.0
    %888 = vmatpush2.msra.mxu0 0.0
    %889 = vmatprep.mubr.f32.mxu0 0.0
    %890 = vmatmul.mubr.f32.gmra.mxu0 %v820
    %v891 = vpop.f32.mrf.mxu0
    %v892 = vadd.f32 %v811, %v891
    %v893 = vpop.f32.mrf.mxu0
    %v894 = vadd.f32 %v811, %v893
    %895 = vmatprep.mubr.f32.mxu0 0.0
    %896 = vmatmul.mubr.f32.gmra.mxu0 %v823
    %v897 = vpop.f32.mrf.mxu0
    %v898 = vadd.f32 %v816, %v897
    %v899 = vpop.f32.mrf.mxu0
    %v900 = vadd.f32 %v816, %v899
    %901 = vdwg.mxu0
    %v902 = vmax.f32 %v892, 0.0
    %v903 = vmax.f32 %v894, 0.0
    %v904 = vmax.f32 %v898, 0.0
    %v905 = vmax.f32 %v900, 0.0
    %906 = vrot.lane.b32.xlu0 %v902, 1
    %v907 = vpop.permute.xlu0 %906
    %908 = vrot.lane.b32.xlu0 %v904, 1
    %v909 = vpop.permute.xlu0 %908
    %910 = vrot.lane.b32.xlu0 %v903, 1
    %v911 = vpop.permute.xlu0 %910
    %912 = vrot.lane.b32.xlu0 %v905, 1
    %v913 = vpop.permute.xlu0 %912
    %v914 = vsel %vm241, %v907, %v911
    %v915 = vsel %vm241, %v909, %v913
    %v916 = vsel %vm241, %v911, %v907
    %v917 = vsel %vm241, %v913, %v909
    %v918 = vsel %vm252, %v916, 0.0
    %v919 = vsel %vm253, %v914, 0.0
    %v920 = vsel %vm252, %v917, 0.0
    %v921 = vsel %vm253, %v915, 0.0
    %922 = vst [vmem:[#allocation2] sm:$0xff] %v918
    %923 = vst [vmem:[#allocation2 + $0x8] sm:$0xff] %v919
    %924 = vst [vmem:[#allocation2 + $0x10] sm:$0xff] %v920
    %925 = vst [vmem:[#allocation2 + $0x18] sm:$0xff] %v921
    %926 = vst [vmem:[#allocation2 + $0x20] sm:$0xff] %v902
    %927 = vst [vmem:[#allocation2 + $0x28] sm:$0xff] %v903
    %928 = vst [vmem:[#allocation2 + $0x30] sm:$0xff] %v904
    %929 = vst [vmem:[#allocation2 + $0x38] sm:$0xff] %v905
    %930 = vrot.lane.b32.xlu0 %v902, 127
    %v931 = vpop.permute.xlu0 %930
    %932 = vrot.lane.b32.xlu0 %v904, 127
    %v933 = vpop.permute.xlu0 %932
    %934 = vrot.lane.b32.xlu0 %v903, 127
    %v935 = vpop.permute.xlu0 %934
    %936 = vrot.lane.b32.xlu0 %v905, 127
    %v937 = vpop.permute.xlu0 %936
    %v938 = vsel %vm284, %v931, %v935
    %v939 = vsel %vm284, %v933, %v937
    %v940 = vsel %vm284, %v935, %v931
    %v941 = vsel %vm284, %v937, %v933
    %v942 = vsel %vm295, %v938, 0.0
    %v943 = vsel %vm296, %v940, 0.0
    %v944 = vsel %vm295, %v939, 0.0
    %v945 = vsel %vm296, %v941, 0.0
    %946 = vst [vmem:[#allocation2 + $0x40] sm:$0xff] %v942
    %947 = vst [vmem:[#allocation2 + $0x48] sm:$0xff] %v943
    %948 = vst [vmem:[#allocation2 + $0x50] sm:$0xff] %v944
    %949 = vst [vmem:[#allocation2 + $0x58] sm:$0xff] %v945
    %v950 = vld [vmem:[%s5] sm:$0xff]
    %v951 = vld [vmem:[%s5 + $0x8] sm:$0xff]
    %v952 = vld [vmem:[%s5 + $0x10] sm:$0xff]
    %v953 = vld [vmem:[%s5 + $0x18] sm:$0xff]
    %v954 = vld [vmem:[#allocation2] sm:$0xff]
    %v955 = vld [vmem:[#allocation2 + $0x8] sm:$0xff]
    %v956 = vld [vmem:[#allocation2 + $0x10] sm:$0xff]
    %v957 = vld [vmem:[#allocation2 + $0x18] sm:$0xff]
    %v958 = vld [vmem:[#allocation2 + $0x20] sm:$0xff]
    %v959 = vld [vmem:[#allocation2 + $0x28] sm:$0xff]
    %v960 = vld [vmem:[#allocation2 + $0x30] sm:$0xff]
    %v961 = vld [vmem:[#allocation2 + $0x38] sm:$0xff]
    %v962 = vld [vmem:[#allocation2 + $0x40] sm:$0xff]
    %v963 = vld [vmem:[#allocation2 + $0x48] sm:$0xff]
    %v964 = vld [vmem:[#allocation2 + $0x50] sm:$0xff]
    %v965 = vld [vmem:[#allocation2 + $0x58] sm:$0xff]
    %v966 = vld [vmem:[%s6] sm:$0xff]
    %v967 = vld [vmem:[%s6 + $0x8] sm:$0xff]
    %v968 = vld [vmem:[%s6 + $0x10] sm:$0xff]
    %v969 = vld [vmem:[%s6 + $0x18] sm:$0xff]
    %971 = vset.pattern.permute.xlu0 0
    %972 = vperm.xlu0 %971, %v966
    %v973 = vpop.permute.xlu0 %972
    %976 = vset.pattern.permute.xlu0 0
    %977 = vperm.xlu0 %976, %v967
    %v978 = vpop.permute.xlu0 %977
    %981 = vset.pattern.permute.xlu0 0
    %982 = vperm.xlu0 %981, %v968
    %v983 = vpop.permute.xlu0 %982
    %986 = vset.pattern.permute.xlu0 0
    %987 = vperm.xlu0 %986, %v969
    %v988 = vpop.permute.xlu0 %987
    %vm990 = vcmask 392192
    %v992 = vsel %vm990, %v950, 0
    %v995 = vsel %vm990, %v951, 0
    %v998 = vsel %vm990, %v952, 0
    %v1001 = vsel %vm990, %v953, 0
    %1003 = vmatprep.subr.mxu0 0.0
    %1004 = vmatpush1.msra.mxu0 0.0
    %1005 = vmatprep.subr.mxu0 0.0
    %1006 = vmatpush1.msra.mxu0 0.0
    %1007 = vmatprep.subr.mxu0 0.0
    %1008 = vmatpush1.msra.mxu0 0.0
    %1009 = vmatprep.subr.mxu0 0.0
    %1010 = vmatpush1.msra.mxu0 0.0
    %1011 = vmatprep.subr.mxu0 0.0
    %1012 = vmatpush1.msra.mxu0 0.0
    %1013 = vmatprep.subr.mxu0 0.0
    %1014 = vmatpush1.msra.mxu0 0.0
    %1015 = vmatprep.subr.mxu0 0.0
    %1016 = vmatpush1.msra.mxu0 0.0
    %1017 = vmatprep.subr.mxu0 0.0
    %1018 = vmatpush1.msra.mxu0 0.0
    %1019 = vmatprep.subr.mxu0 0.0
    %1020 = vmatpush1.msra.mxu0 0.0
    %1021 = vmatprep.subr.mxu0 0.0
    %1022 = vmatpush1.msra.mxu0 0.0
    %1023 = vmatprep.subr.mxu0 %v965
    %1024 = vmatpush1.msra.mxu0 %v964
    %1025 = vmatprep.subr.mxu0 %v963
    %1026 = vmatpush1.msra.mxu0 %v962
    %1027 = vmatprep.subr.mxu0 %v961
    %1028 = vmatpush1.msra.mxu0 %v960
    %1029 = vmatprep.subr.mxu0 %v959
    %1030 = vmatpush1.msra.mxu0 %v958
    %1031 = vmatprep.subr.mxu0 %v957
    %1032 = vmatpush1.msra.mxu0 %v956
    %1033 = vmatprep.subr.mxu0 %v955
    %1034 = vmatpush1.msra.mxu0 %v954
    %1035 = vmatprep.subr.mxu0 0.0
    %1036 = vmatpush2.msra.mxu0 0.0
    %1037 = vmatprep.subr.mxu0 0.0
    %1038 = vmatpush2.msra.mxu0 0.0
    %1039 = vmatprep.subr.mxu0 0.0
    %1040 = vmatpush2.msra.mxu0 0.0
    %1041 = vmatprep.subr.mxu0 0.0
    %1042 = vmatpush2.msra.mxu0 0.0
    %1043 = vmatprep.subr.mxu0 0.0
    %1044 = vmatpush2.msra.mxu0 0.0
    %1045 = vmatprep.subr.mxu0 0.0
    %1046 = vmatpush2.msra.mxu0 0.0
    %1047 = vmatprep.subr.mxu0 0.0
    %1048 = vmatpush2.msra.mxu0 0.0
    %1049 = vmatprep.subr.mxu0 0.0
    %1050 = vmatpush2.msra.mxu0 0.0
    %1051 = vmatprep.subr.mxu0 0.0
    %1052 = vmatpush2.msra.mxu0 0.0
    %1053 = vmatprep.subr.mxu0 0.0
    %1054 = vmatpush2.msra.mxu0 0.0
    %1055 = vmatprep.subr.mxu0 0.0
    %1056 = vmatpush2.msra.mxu0 0.0
    %1057 = vmatprep.subr.mxu0 0.0
    %1058 = vmatpush2.msra.mxu0 0.0
    %1059 = vmatprep.subr.mxu0 0.0
    %1060 = vmatpush2.msra.mxu0 0.0
    %1061 = vmatprep.subr.mxu0 0.0
    %1062 = vmatpush2.msra.mxu0 0.0
    %1063 = vmatprep.subr.mxu0 0.0
    %1064 = vmatpush2.msra.mxu0 0.0
    %1065 = vmatprep.subr.mxu0 0.0
    %1066 = vmatpush2.msra.mxu0 0.0
    %1067 = vmatprep.mubr.f32.mxu0 0.0
    %1068 = vmatmul.mubr.f32.gmra.mxu0 %v992
    %v1069 = vpop.f32.mrf.mxu0
    %v1070 = vadd.f32 %v973, %v1069
    %v1071 = vpop.f32.mrf.mxu0
    %v1072 = vadd.f32 %v973, %v1071
    %1073 = vmatprep.mubr.f32.mxu0 0.0
    %1074 = vmatmul.mubr.f32.gmra.mxu0 %v995
    %v1075 = vpop.f32.mrf.mxu0
    %v1076 = vadd.f32 %v978, %v1075
    %v1077 = vpop.f32.mrf.mxu0
    %v1078 = vadd.f32 %v978, %v1077
    %1079 = vmatprep.mubr.f32.mxu0 0.0
    %1080 = vmatmul.mubr.f32.gmra.mxu0 %v998
    %v1081 = vpop.f32.mrf.mxu0
    %v1082 = vadd.f32 %v983, %v1081
    %v1083 = vpop.f32.mrf.mxu0
    %v1084 = vadd.f32 %v983, %v1083
    %1085 = vmatprep.mubr.f32.mxu0 0.0
    %1086 = vmatmul.mubr.f32.gmra.mxu0 %v1001
    %v1087 = vpop.f32.mrf.mxu0
    %v1088 = vadd.f32 %v988, %v1087
    %v1089 = vpop.f32.mrf.mxu0
    %v1090 = vadd.f32 %v988, %v1089
    %1091 = vdwg.mxu0
    %v1092 = vmax.f32 %v1070, 0.0
    %v1093 = vmax.f32 %v1072, 0.0
    %v1094 = vmax.f32 %v1076, 0.0
    %v1095 = vmax.f32 %v1078, 0.0
    %v1096 = vmax.f32 %v1082, 0.0
    %v1097 = vmax.f32 %v1084, 0.0
    %v1098 = vmax.f32 %v1088, 0.0
    %v1099 = vmax.f32 %v1090, 0.0
    %v1100 = vld [vmem:[%s8] sm:$0x1]
    %v1102 = vrot.slane %v1093, 7
    %vm1104 = vcmask 1040384
    %v1105 = vsel %vm1104, %v1092, %v1102
    %v1107 = vrot.slane %v1092, 1
    %v1109 = vsel %vm1104, %v1107, %v1093
    %v1110 = vrot.slane %v1092, 2
    %v1112 = vrot.slane %v1093, 1
    %v1114 = vsel %vm1104, %v1110, %v1112
    %v1115 = vrot.slane %v1092, 3
    %v1117 = vrot.slane %v1093, 2
    %v1119 = vsel %vm1104, %v1115, %v1117
    %v1120 = vrot.slane %v1092, 4
    %v1122 = vrot.slane %v1093, 3
    %v1124 = vsel %vm1104, %v1120, %v1122
    %v1125 = vrot.slane %v1092, 5
    %v1127 = vrot.slane %v1093, 4
    %v1129 = vsel %vm1104, %v1125, %v1127
    %v1130 = vrot.slane %v1092, 6
    %v1132 = vrot.slane %v1093, 5
    %v1134 = vsel %vm1104, %v1130, %v1132
    %v1135 = vrot.slane %v1092, 7
    %v1137 = vrot.slane %v1093, 6
    %v1139 = vsel %vm1104, %v1135, %v1137
    %v1140 = vpack.c.bf16 %v1105, %v1105
    %v1141 = vpack.c.bf16 %v1109, %v1109
    %v1142 = vpack.c.bf16 %v1114, %v1114
    %v1143 = vpack.c.bf16 %v1119, %v1119
    %v1144 = vpack.c.bf16 %v1124, %v1124
    %v1145 = vpack.c.bf16 %v1129, %v1129
    %v1146 = vpack.c.bf16 %v1134, %v1134
    %v1147 = vpack.c.bf16 %v1139, %v1139
    %v1148 = vld [vmem:[#allocation3] sm:$0xf]
    %v1149 = vld [vmem:[#allocation3 + $0x4] sm:$0xf]
    %v1150 = vld [vmem:[#allocation3 + $0x8] sm:$0xf]
    %v1151 = vld [vmem:[#allocation3 + $0xc] sm:$0xf]
    %v1152 = vld [vmem:[#allocation3 + $0x10] sm:$0xf]
    %v1153 = vld [vmem:[#allocation3 + $0x14] sm:$0xf]
    %v1154 = vld [vmem:[#allocation3 + $0x18] sm:$0xf]
    %v1155 = vld [vmem:[#allocation3 + $0x1c] sm:$0xf]
    %v1156 = vld [vmem:[#allocation3 + $0x20] sm:$0xf]
    %v1157 = vld [vmem:[#allocation3 + $0x24] sm:$0xf]
    %v1158 = vld [vmem:[#allocation3 + $0x28] sm:$0xf]
    %v1159 = vld [vmem:[#allocation3 + $0x2c] sm:$0xf]
    %v1160 = vld [vmem:[#allocation3 + $0x30] sm:$0xf]
    %v1161 = vld [vmem:[#allocation3 + $0x34] sm:$0xf]
    %v1162 = vld [vmem:[#allocation3 + $0x38] sm:$0xf]
    %v1163 = vld [vmem:[#allocation3 + $0x3c] sm:$0xf]
    %v1164 = vld [vmem:[#allocation3 + $0x40] sm:$0xf]
    %v1165 = vld [vmem:[#allocation3 + $0x44] sm:$0xf]
    %v1166 = vld [vmem:[#allocation3 + $0x48] sm:$0xf]
    %v1167 = vld [vmem:[#allocation3 + $0x4c] sm:$0xf]
    %v1168 = vld [vmem:[#allocation3 + $0x50] sm:$0xf]
    %v1169 = vld [vmem:[#allocation3 + $0x54] sm:$0xf]
    %v1170 = vld [vmem:[#allocation3 + $0x58] sm:$0xf]
    %v1171 = vld [vmem:[#allocation3 + $0x5c] sm:$0xf]
    %v1172 = vld [vmem:[#allocation3 + $0x60] sm:$0xf]
    %v1173 = vld [vmem:[#allocation3 + $0x64] sm:$0xf]
    %v1174 = vld [vmem:[#allocation3 + $0x68] sm:$0xf]
    %v1175 = vld [vmem:[#allocation3 + $0x6c] sm:$0xf]
    %v1176 = vld [vmem:[#allocation3 + $0x70] sm:$0xf]
    %v1177 = vld [vmem:[#allocation3 + $0x74] sm:$0xf]
    %v1178 = vld [vmem:[#allocation3 + $0x78] sm:$0xf]
    %v1179 = vld [vmem:[#allocation3 + $0x7c] sm:$0xf]
    %v1180 = vld [vmem:[#allocation3 + $0x80] sm:$0xf]
    %v1181 = vld [vmem:[#allocation3 + $0x84] sm:$0xf]
    %v1182 = vld [vmem:[#allocation3 + $0x88] sm:$0xf]
    %v1183 = vld [vmem:[#allocation3 + $0x8c] sm:$0xf]
    %v1184 = vld [vmem:[#allocation3 + $0x90] sm:$0xf]
    %v1185 = vld [vmem:[#allocation3 + $0x94] sm:$0xf]
    %v1186 = vld [vmem:[#allocation3 + $0x98] sm:$0xf]
    %v1187 = vld [vmem:[#allocation3 + $0x9c] sm:$0xf]
    %v1188 = vld [vmem:[#allocation3 + $0xa0] sm:$0xf]
    %v1189 = vld [vmem:[#allocation3 + $0xa4] sm:$0xf]
    %v1190 = vld [vmem:[#allocation3 + $0xa8] sm:$0xf]
    %v1191 = vld [vmem:[#allocation3 + $0xac] sm:$0xf]
    %v1192 = vld [vmem:[#allocation3 + $0xb0] sm:$0xf]
    %v1193 = vld [vmem:[#allocation3 + $0xb4] sm:$0xf]
    %v1194 = vld [vmem:[#allocation3 + $0xb8] sm:$0xf]
    %v1195 = vld [vmem:[#allocation3 + $0xbc] sm:$0xf]
    %v1196 = vld [vmem:[#allocation3 + $0xc0] sm:$0xf]
    %v1197 = vld [vmem:[#allocation3 + $0xc4] sm:$0xf]
    %v1198 = vld [vmem:[#allocation3 + $0xc8] sm:$0xf]
    %v1199 = vld [vmem:[#allocation3 + $0xcc] sm:$0xf]
    %v1200 = vld [vmem:[#allocation3 + $0xd0] sm:$0xf]
    %v1201 = vld [vmem:[#allocation3 + $0xd4] sm:$0xf]
    %v1202 = vld [vmem:[#allocation3 + $0xd8] sm:$0xf]
    %v1203 = vld [vmem:[#allocation3 + $0xdc] sm:$0xf]
    %v1204 = vld [vmem:[#allocation3 + $0xe0] sm:$0xf]
    %v1205 = vld [vmem:[#allocation3 + $0xe4] sm:$0xf]
    %v1206 = vld [vmem:[#allocation3 + $0xe8] sm:$0xf]
    %v1207 = vld [vmem:[#allocation3 + $0xec] sm:$0xf]
    %v1208 = vld [vmem:[#allocation3 + $0xf0] sm:$0xf]
    %v1209 = vld [vmem:[#allocation3 + $0xf4] sm:$0xf]
    %v1210 = vld [vmem:[#allocation3 + $0xf8] sm:$0xf]
    %v1211 = vld [vmem:[#allocation3 + $0xfc] sm:$0xf]
    %v1212 = vld [vmem:[#allocation3 + $0x100] sm:$0xf]
    %v1213 = vld [vmem:[#allocation3 + $0x104] sm:$0xf]
    %v1214 = vld [vmem:[#allocation3 + $0x108] sm:$0xf]
    %v1215 = vld [vmem:[#allocation3 + $0x10c] sm:$0xf]
    %v1216 = vld [vmem:[#allocation3 + $0x110] sm:$0xf]
    %v1217 = vld [vmem:[#allocation3 + $0x114] sm:$0xf]
    %v1218 = vld [vmem:[#allocation3 + $0x118] sm:$0xf]
    %v1219 = vld [vmem:[#allocation3 + $0x11c] sm:$0xf]
    %v1220 = vld [vmem:[#allocation3 + $0x120] sm:$0xf]
    %v1221 = vld [vmem:[#allocation3 + $0x124] sm:$0xf]
    %v1222 = vld [vmem:[#allocation3 + $0x128] sm:$0xf]
    %v1223 = vld [vmem:[#allocation3 + $0x12c] sm:$0xf]
    %v1224 = vld [vmem:[#allocation3 + $0x130] sm:$0xf]
    %v1225 = vld [vmem:[#allocation3 + $0x134] sm:$0xf]
    %v1226 = vld [vmem:[#allocation3 + $0x138] sm:$0xf]
    %v1227 = vld [vmem:[#allocation3 + $0x13c] sm:$0xf]
    %v1228 = vld [vmem:[#allocation3 + $0x140] sm:$0xf]
    %v1229 = vld [vmem:[#allocation3 + $0x144] sm:$0xf]
    %v1230 = vld [vmem:[#allocation3 + $0x148] sm:$0xf]
    %v1231 = vld [vmem:[#allocation3 + $0x14c] sm:$0xf]
    %v1232 = vld [vmem:[#allocation3 + $0x150] sm:$0xf]
    %v1233 = vld [vmem:[#allocation3 + $0x154] sm:$0xf]
    %v1234 = vld [vmem:[#allocation3 + $0x158] sm:$0xf]
    %v1235 = vld [vmem:[#allocation3 + $0x15c] sm:$0xf]
    %v1236 = vld [vmem:[#allocation3 + $0x160] sm:$0xf]
    %v1237 = vld [vmem:[#allocation3 + $0x164] sm:$0xf]
    %v1238 = vld [vmem:[#allocation3 + $0x168] sm:$0xf]
    %v1239 = vld [vmem:[#allocation3 + $0x16c] sm:$0xf]
    %v1240 = vld [vmem:[#allocation3 + $0x170] sm:$0xf]
    %v1241 = vld [vmem:[#allocation3 + $0x174] sm:$0xf]
    %v1242 = vld [vmem:[#allocation3 + $0x178] sm:$0xf]
    %v1243 = vld [vmem:[#allocation3 + $0x17c] sm:$0xf]
    %v1244 = vld [vmem:[#allocation3 + $0x180] sm:$0xf]
    %v1245 = vld [vmem:[#allocation3 + $0x184] sm:$0xf]
    %v1246 = vld [vmem:[#allocation3 + $0x188] sm:$0xf]
    %v1247 = vld [vmem:[#allocation3 + $0x18c] sm:$0xf]
    %v1248 = vld [vmem:[#allocation3 + $0x190] sm:$0xf]
    %v1249 = vld [vmem:[#allocation3 + $0x194] sm:$0xf]
    %v1250 = vld [vmem:[#allocation3 + $0x198] sm:$0xf]
    %v1251 = vld [vmem:[#allocation3 + $0x19c] sm:$0xf]
    %v1252 = vld [vmem:[#allocation3 + $0x1a0] sm:$0xf]
    %v1253 = vld [vmem:[#allocation3 + $0x1a4] sm:$0xf]
    %v1254 = vld [vmem:[#allocation3 + $0x1a8] sm:$0xf]
    %v1255 = vld [vmem:[#allocation3 + $0x1ac] sm:$0xf]
    %v1256 = vld [vmem:[#allocation3 + $0x1b0] sm:$0xf]
    %v1257 = vld [vmem:[#allocation3 + $0x1b4] sm:$0xf]
    %v1258 = vld [vmem:[#allocation3 + $0x1b8] sm:$0xf]
    %v1259 = vld [vmem:[#allocation3 + $0x1bc] sm:$0xf]
    %v1260 = vld [vmem:[#allocation3 + $0x1c0] sm:$0xf]
    %v1261 = vld [vmem:[#allocation3 + $0x1c4] sm:$0xf]
    %v1262 = vld [vmem:[#allocation3 + $0x1c8] sm:$0xf]
    %v1263 = vld [vmem:[#allocation3 + $0x1cc] sm:$0xf]
    %v1264 = vld [vmem:[#allocation3 + $0x1d0] sm:$0xf]
    %v1265 = vld [vmem:[#allocation3 + $0x1d4] sm:$0xf]
    %v1266 = vld [vmem:[#allocation3 + $0x1d8] sm:$0xf]
    %v1267 = vld [vmem:[#allocation3 + $0x1dc] sm:$0xf]
    %v1268 = vld [vmem:[#allocation3 + $0x1e0] sm:$0xf]
    %v1269 = vld [vmem:[#allocation3 + $0x1e4] sm:$0xf]
    %v1270 = vld [vmem:[#allocation3 + $0x1e8] sm:$0xf]
    %v1271 = vld [vmem:[#allocation3 + $0x1ec] sm:$0xf]
    %v1272 = vld [vmem:[#allocation3 + $0x1f0] sm:$0xf]
    %v1273 = vld [vmem:[#allocation3 + $0x1f4] sm:$0xf]
    %v1274 = vld [vmem:[#allocation3 + $0x1f8] sm:$0xf]
    %v1275 = vld [vmem:[#allocation3 + $0x1fc] sm:$0xf]
    %v1404 = vunpack.c.l.b16 %v1148
    %v1405 = vunpack.c.l.b16 %v1149
    %v1406 = vunpack.c.l.b16 %v1150
    %v1407 = vunpack.c.l.b16 %v1151
    %v1408 = vunpack.c.l.b16 %v1152
    %v1409 = vunpack.c.l.b16 %v1153
    %v1410 = vunpack.c.l.b16 %v1154
    %v1411 = vunpack.c.l.b16 %v1155
    %v1412 = vunpack.c.l.b16 %v1156
    %v1413 = vunpack.c.l.b16 %v1157
    %v1414 = vunpack.c.l.b16 %v1158
    %v1415 = vunpack.c.l.b16 %v1159
    %v1416 = vunpack.c.l.b16 %v1160
    %v1417 = vunpack.c.l.b16 %v1161
    %v1418 = vunpack.c.l.b16 %v1162
    %v1419 = vunpack.c.l.b16 %v1163
    %v1420 = vunpack.c.l.b16 %v1164
    %v1421 = vunpack.c.l.b16 %v1165
    %v1422 = vunpack.c.l.b16 %v1166
    %v1423 = vunpack.c.l.b16 %v1167
    %v1424 = vunpack.c.l.b16 %v1168
    %v1425 = vunpack.c.l.b16 %v1169
    %v1426 = vunpack.c.l.b16 %v1170
    %v1427 = vunpack.c.l.b16 %v1171
    %v1428 = vunpack.c.l.b16 %v1172
    %v1429 = vunpack.c.l.b16 %v1173
    %v1430 = vunpack.c.l.b16 %v1174
    %v1431 = vunpack.c.l.b16 %v1175
    %v1432 = vunpack.c.l.b16 %v1176
    %v1433 = vunpack.c.l.b16 %v1177
    %v1434 = vunpack.c.l.b16 %v1178
    %v1435 = vunpack.c.l.b16 %v1179
    %v1436 = vunpack.c.l.b16 %v1180
    %v1437 = vunpack.c.l.b16 %v1181
    %v1438 = vunpack.c.l.b16 %v1182
    %v1439 = vunpack.c.l.b16 %v1183
    %v1440 = vunpack.c.l.b16 %v1184
    %v1441 = vunpack.c.l.b16 %v1185
    %v1442 = vunpack.c.l.b16 %v1186
    %v1443 = vunpack.c.l.b16 %v1187
    %v1444 = vunpack.c.l.b16 %v1188
    %v1445 = vunpack.c.l.b16 %v1189
    %v1446 = vunpack.c.l.b16 %v1190
    %v1447 = vunpack.c.l.b16 %v1191
    %v1448 = vunpack.c.l.b16 %v1192
    %v1449 = vunpack.c.l.b16 %v1193
    %v1450 = vunpack.c.l.b16 %v1194
    %v1451 = vunpack.c.l.b16 %v1195
    %v1452 = vunpack.c.l.b16 %v1196
    %v1453 = vunpack.c.l.b16 %v1197
    %v1454 = vunpack.c.l.b16 %v1198
    %v1455 = vunpack.c.l.b16 %v1199
    %v1456 = vunpack.c.l.b16 %v1200
    %v1457 = vunpack.c.l.b16 %v1201
    %v1458 = vunpack.c.l.b16 %v1202
    %v1459 = vunpack.c.l.b16 %v1203
    %v1460 = vunpack.c.l.b16 %v1204
    %v1461 = vunpack.c.l.b16 %v1205
    %v1462 = vunpack.c.l.b16 %v1206
    %v1463 = vunpack.c.l.b16 %v1207
    %v1464 = vunpack.c.l.b16 %v1208
    %v1465 = vunpack.c.l.b16 %v1209
    %v1466 = vunpack.c.l.b16 %v1210
    %v1467 = vunpack.c.l.b16 %v1211
    %v1468 = vunpack.c.l.b16 %v1212
    %v1469 = vunpack.c.l.b16 %v1213
    %v1470 = vunpack.c.l.b16 %v1214
    %v1471 = vunpack.c.l.b16 %v1215
    %v1472 = vunpack.c.l.b16 %v1216
    %v1473 = vunpack.c.l.b16 %v1217
    %v1474 = vunpack.c.l.b16 %v1218
    %v1475 = vunpack.c.l.b16 %v1219
    %v1476 = vunpack.c.l.b16 %v1220
    %v1477 = vunpack.c.l.b16 %v1221
    %v1478 = vunpack.c.l.b16 %v1222
    %v1479 = vunpack.c.l.b16 %v1223
    %v1480 = vunpack.c.l.b16 %v1224
    %v1481 = vunpack.c.l.b16 %v1225
    %v1482 = vunpack.c.l.b16 %v1226
    %v1483 = vunpack.c.l.b16 %v1227
    %v1484 = vunpack.c.l.b16 %v1228
    %v1485 = vunpack.c.l.b16 %v1229
    %v1486 = vunpack.c.l.b16 %v1230
    %v1487 = vunpack.c.l.b16 %v1231
    %v1488 = vunpack.c.l.b16 %v1232
    %v1489 = vunpack.c.l.b16 %v1233
    %v1490 = vunpack.c.l.b16 %v1234
    %v1491 = vunpack.c.l.b16 %v1235
    %v1492 = vunpack.c.l.b16 %v1236
    %v1493 = vunpack.c.l.b16 %v1237
    %v1494 = vunpack.c.l.b16 %v1238
    %v1495 = vunpack.c.l.b16 %v1239
    %v1496 = vunpack.c.l.b16 %v1240
    %v1497 = vunpack.c.l.b16 %v1241
    %v1498 = vunpack.c.l.b16 %v1242
    %v1499 = vunpack.c.l.b16 %v1243
    %v1500 = vunpack.c.l.b16 %v1244
    %v1501 = vunpack.c.l.b16 %v1245
    %v1502 = vunpack.c.l.b16 %v1246
    %v1503 = vunpack.c.l.b16 %v1247
    %v1504 = vunpack.c.l.b16 %v1248
    %v1505 = vunpack.c.l.b16 %v1249
    %v1506 = vunpack.c.l.b16 %v1250
    %v1507 = vunpack.c.l.b16 %v1251
    %v1508 = vunpack.c.l.b16 %v1252
    %v1509 = vunpack.c.l.b16 %v1253
    %v1510 = vunpack.c.l.b16 %v1254
    %v1511 = vunpack.c.l.b16 %v1255
    %v1512 = vunpack.c.l.b16 %v1256
    %v1513 = vunpack.c.l.b16 %v1257
    %v1514 = vunpack.c.l.b16 %v1258
    %v1515 = vunpack.c.l.b16 %v1259
    %v1516 = vunpack.c.l.b16 %v1260
    %v1517 = vunpack.c.l.b16 %v1261
    %v1518 = vunpack.c.l.b16 %v1262
    %v1519 = vunpack.c.l.b16 %v1263
    %v1520 = vunpack.c.l.b16 %v1264
    %v1521 = vunpack.c.l.b16 %v1265
    %v1522 = vunpack.c.l.b16 %v1266
    %v1523 = vunpack.c.l.b16 %v1267
    %v1524 = vunpack.c.l.b16 %v1268
    %v1525 = vunpack.c.l.b16 %v1269
    %v1526 = vunpack.c.l.b16 %v1270
    %v1527 = vunpack.c.l.b16 %v1271
    %v1528 = vunpack.c.l.b16 %v1272
    %v1529 = vunpack.c.l.b16 %v1273
    %v1530 = vunpack.c.l.b16 %v1274
    %v1531 = vunpack.c.l.b16 %v1275
    %v1532 = vpack.c.b16 %v1405, %v1404
    %v1533 = vpack.c.b16 %v1407, %v1406
    %v1534 = vpack.c.b16 %v1409, %v1408
    %v1535 = vpack.c.b16 %v1411, %v1410
    %v1536 = vpack.c.b16 %v1413, %v1412
    %v1537 = vpack.c.b16 %v1415, %v1414
    %v1538 = vpack.c.b16 %v1417, %v1416
    %v1539 = vpack.c.b16 %v1419, %v1418
    %v1540 = vpack.c.b16 %v1421, %v1420
    %v1541 = vpack.c.b16 %v1423, %v1422
    %v1542 = vpack.c.b16 %v1425, %v1424
    %v1543 = vpack.c.b16 %v1427, %v1426
    %v1544 = vpack.c.b16 %v1429, %v1428
    %v1545 = vpack.c.b16 %v1431, %v1430
    %v1546 = vpack.c.b16 %v1433, %v1432
    %v1547 = vpack.c.b16 %v1435, %v1434
    %v1548 = vpack.c.b16 %v1437, %v1436
    %v1549 = vpack.c.b16 %v1439, %v1438
    %v1550 = vpack.c.b16 %v1441, %v1440
    %v1551 = vpack.c.b16 %v1443, %v1442
    %v1552 = vpack.c.b16 %v1445, %v1444
    %v1553 = vpack.c.b16 %v1447, %v1446
    %v1554 = vpack.c.b16 %v1449, %v1448
    %v1555 = vpack.c.b16 %v1451, %v1450
    %v1556 = vpack.c.b16 %v1453, %v1452
    %v1557 = vpack.c.b16 %v1455, %v1454
    %v1558 = vpack.c.b16 %v1457, %v1456
    %v1559 = vpack.c.b16 %v1459, %v1458
    %v1560 = vpack.c.b16 %v1461, %v1460
    %v1561 = vpack.c.b16 %v1463, %v1462
    %v1562 = vpack.c.b16 %v1465, %v1464
    %v1563 = vpack.c.b16 %v1467, %v1466
    %v1564 = vpack.c.b16 %v1469, %v1468
    %v1565 = vpack.c.b16 %v1471, %v1470
    %v1566 = vpack.c.b16 %v1473, %v1472
    %v1567 = vpack.c.b16 %v1475, %v1474
    %v1568 = vpack.c.b16 %v1477, %v1476
    %v1569 = vpack.c.b16 %v1479, %v1478
    %v1570 = vpack.c.b16 %v1481, %v1480
    %v1571 = vpack.c.b16 %v1483, %v1482
    %v1572 = vpack.c.b16 %v1485, %v1484
    %v1573 = vpack.c.b16 %v1487, %v1486
    %v1574 = vpack.c.b16 %v1489, %v1488
    %v1575 = vpack.c.b16 %v1491, %v1490
    %v1576 = vpack.c.b16 %v1493, %v1492
    %v1577 = vpack.c.b16 %v1495, %v1494
    %v1578 = vpack.c.b16 %v1497, %v1496
    %v1579 = vpack.c.b16 %v1499, %v1498
    %v1580 = vpack.c.b16 %v1501, %v1500
    %v1581 = vpack.c.b16 %v1503, %v1502
    %v1582 = vpack.c.b16 %v1505, %v1504
    %v1583 = vpack.c.b16 %v1507, %v1506
    %v1584 = vpack.c.b16 %v1509, %v1508
    %v1585 = vpack.c.b16 %v1511, %v1510
    %v1586 = vpack.c.b16 %v1513, %v1512
    %v1587 = vpack.c.b16 %v1515, %v1514
    %v1588 = vpack.c.b16 %v1517, %v1516
    %v1589 = vpack.c.b16 %v1519, %v1518
    %v1590 = vpack.c.b16 %v1521, %v1520
    %v1591 = vpack.c.b16 %v1523, %v1522
    %v1592 = vpack.c.b16 %v1525, %v1524
    %v1593 = vpack.c.b16 %v1527, %v1526
    %v1594 = vpack.c.b16 %v1529, %v1528
    %v1595 = vpack.c.b16 %v1531, %v1530
    %1660 = vmatprep.subr.bf16.mxu0 0
    %1661 = vmatpush1.bf16.msra.mxu0 %v1539
    %1662 = vmatprep.subr.bf16.mxu0 0
    %1663 = vmatpush1.bf16.msra.mxu0 %v1538
    %1664 = vmatprep.subr.bf16.mxu0 0
    %1665 = vmatpush1.bf16.msra.mxu0 %v1537
    %1666 = vmatprep.subr.bf16.mxu0 0
    %1667 = vmatpush1.bf16.msra.mxu0 %v1536
    %1668 = vmatprep.subr.bf16.mxu0 0
    %1669 = vmatpush1.bf16.msra.mxu0 %v1535
    %1670 = vmatprep.subr.bf16.mxu0 0
    %1671 = vmatpush1.bf16.msra.mxu0 %v1534
    %1672 = vmatprep.subr.bf16.mxu0 0
    %1673 = vmatpush1.bf16.msra.mxu0 %v1533
    %1674 = vmatprep.subr.bf16.mxu0 0
    %1675 = vmatpush1.bf16.msra.mxu0 %v1532
    %1676 = vmatprep.subr.bf16.mxu0 0
    %1677 = vmatpush2.bf16.msra.mxu0 %v1547
    %1678 = vmatprep.subr.bf16.mxu0 0
    %1679 = vmatpush2.bf16.msra.mxu0 %v1546
    %1680 = vmatprep.subr.bf16.mxu0 0
    %1681 = vmatpush2.bf16.msra.mxu0 %v1545
    %1682 = vmatprep.subr.bf16.mxu0 0
    %1683 = vmatpush2.bf16.msra.mxu0 %v1544
    %1684 = vmatprep.subr.bf16.mxu0 0
    %1685 = vmatpush2.bf16.msra.mxu0 %v1543
    %1686 = vmatprep.subr.bf16.mxu0 0
    %1687 = vmatpush2.bf16.msra.mxu0 %v1542
    %1688 = vmatprep.subr.bf16.mxu0 0
    %1689 = vmatpush2.bf16.msra.mxu0 %v1541
    %1690 = vmatprep.subr.bf16.mxu0 0
    %1691 = vmatpush2.bf16.msra.mxu0 %v1540
    %1692 = vmatprep.mubr.bf16.mxu0 %v1141
    %1693 = vmatmul.mubr.bf16.gmra.mxu0 %v1140
    %v1694 = vpop.f32.mrf.mxu0
    %v1695 = vadd.f32 0.0, %v1694
    %v1696 = vpop.f32.mrf.mxu0
    %v1697 = vpop.f32.mrf.mxu0
    %v1698 = vpop.f32.mrf.mxu0
    %1699 = vdwg.mxu0
    %1700 = vmatprep.subr.bf16.mxu0 0
    %1701 = vmatpush1.bf16.msra.mxu0 %v1555
    %1702 = vmatprep.subr.bf16.mxu0 0
    %1703 = vmatpush1.bf16.msra.mxu0 %v1554
    %1704 = vmatprep.subr.bf16.mxu0 0
    %1705 = vmatpush1.bf16.msra.mxu0 %v1553
    %1706 = vmatprep.subr.bf16.mxu0 0
    %1707 = vmatpush1.bf16.msra.mxu0 %v1552
    %1708 = vmatprep.subr.bf16.mxu0 0
    %1709 = vmatpush1.bf16.msra.mxu0 %v1551
    %1710 = vmatprep.subr.bf16.mxu0 0
    %1711 = vmatpush1.bf16.msra.mxu0 %v1550
    %1712 = vmatprep.subr.bf16.mxu0 0
    %1713 = vmatpush1.bf16.msra.mxu0 %v1549
    %1714 = vmatprep.subr.bf16.mxu0 0
    %1715 = vmatpush1.bf16.msra.mxu0 %v1548
    %1716 = vmatprep.subr.bf16.mxu0 0
    %1717 = vmatpush2.bf16.msra.mxu0 %v1563
    %1718 = vmatprep.subr.bf16.mxu0 0
    %1719 = vmatpush2.bf16.msra.mxu0 %v1562
    %1720 = vmatprep.subr.bf16.mxu0 0
    %1721 = vmatpush2.bf16.msra.mxu0 %v1561
    %1722 = vmatprep.subr.bf16.mxu0 0
    %1723 = vmatpush2.bf16.msra.mxu0 %v1560
    %1724 = vmatprep.subr.bf16.mxu0 0
    %1725 = vmatpush2.bf16.msra.mxu0 %v1559
    %1726 = vmatprep.subr.bf16.mxu0 0
    %1727 = vmatpush2.bf16.msra.mxu0 %v1558
    %1728 = vmatprep.subr.bf16.mxu0 0
    %1729 = vmatpush2.bf16.msra.mxu0 %v1557
    %1730 = vmatprep.subr.bf16.mxu0 0
    %1731 = vmatpush2.bf16.msra.mxu0 %v1556
    %1732 = vmatprep.mubr.bf16.mxu0 %v1143
    %1733 = vmatmul.mubr.bf16.gmra.mxu0 %v1142
    %v1734 = vpop.f32.mrf.mxu0
    %v1735 = vadd.f32 %v1695, %v1734
    %v1736 = vpop.f32.mrf.mxu0
    %v1737 = vpop.f32.mrf.mxu0
    %v1738 = vpop.f32.mrf.mxu0
    %1739 = vdwg.mxu0
    %1740 = vmatprep.subr.bf16.mxu0 0
    %1741 = vmatpush1.bf16.msra.mxu0 %v1571
    %1742 = vmatprep.subr.bf16.mxu0 0
    %1743 = vmatpush1.bf16.msra.mxu0 %v1570
    %1744 = vmatprep.subr.bf16.mxu0 0
    %1745 = vmatpush1.bf16.msra.mxu0 %v1569
    %1746 = vmatprep.subr.bf16.mxu0 0
    %1747 = vmatpush1.bf16.msra.mxu0 %v1568
    %1748 = vmatprep.subr.bf16.mxu0 0
    %1749 = vmatpush1.bf16.msra.mxu0 %v1567
    %1750 = vmatprep.subr.bf16.mxu0 0
    %1751 = vmatpush1.bf16.msra.mxu0 %v1566
    %1752 = vmatprep.subr.bf16.mxu0 0
    %1753 = vmatpush1.bf16.msra.mxu0 %v1565
    %1754 = vmatprep.subr.bf16.mxu0 0
    %1755 = vmatpush1.bf16.msra.mxu0 %v1564
    %1756 = vmatprep.subr.bf16.mxu0 0
    %1757 = vmatpush2.bf16.msra.mxu0 %v1579
    %1758 = vmatprep.subr.bf16.mxu0 0
    %1759 = vmatpush2.bf16.msra.mxu0 %v1578
    %1760 = vmatprep.subr.bf16.mxu0 0
    %1761 = vmatpush2.bf16.msra.mxu0 %v1577
    %1762 = vmatprep.subr.bf16.mxu0 0
    %1763 = vmatpush2.bf16.msra.mxu0 %v1576
    %1764 = vmatprep.subr.bf16.mxu0 0
    %1765 = vmatpush2.bf16.msra.mxu0 %v1575
    %1766 = vmatprep.subr.bf16.mxu0 0
    %1767 = vmatpush2.bf16.msra.mxu0 %v1574
    %1768 = vmatprep.subr.bf16.mxu0 0
    %1769 = vmatpush2.bf16.msra.mxu0 %v1573
    %1770 = vmatprep.subr.bf16.mxu0 0
    %1771 = vmatpush2.bf16.msra.mxu0 %v1572
    %1772 = vmatprep.mubr.bf16.mxu0 %v1145
    %1773 = vmatmul.mubr.bf16.gmra.mxu0 %v1144
    %v1774 = vpop.f32.mrf.mxu0
    %v1775 = vadd.f32 %v1735, %v1774
    %v1776 = vpop.f32.mrf.mxu0
    %v1777 = vpop.f32.mrf.mxu0
    %v1778 = vpop.f32.mrf.mxu0
    %1779 = vdwg.mxu0
    %1780 = vmatprep.subr.bf16.mxu0 0
    %1781 = vmatpush1.bf16.msra.mxu0 %v1587
    %1782 = vmatprep.subr.bf16.mxu0 0
    %1783 = vmatpush1.bf16.msra.mxu0 %v1586
    %1784 = vmatprep.subr.bf16.mxu0 0
    %1785 = vmatpush1.bf16.msra.mxu0 %v1585
    %1786 = vmatprep.subr.bf16.mxu0 0
    %1787 = vmatpush1.bf16.msra.mxu0 %v1584
    %1788 = vmatprep.subr.bf16.mxu0 0
    %1789 = vmatpush1.bf16.msra.mxu0 %v1583
    %1790 = vmatprep.subr.bf16.mxu0 0
    %1791 = vmatpush1.bf16.msra.mxu0 %v1582
    %1792 = vmatprep.subr.bf16.mxu0 0
    %1793 = vmatpush1.bf16.msra.mxu0 %v1581
    %1794 = vmatprep.subr.bf16.mxu0 0
    %1795 = vmatpush1.bf16.msra.mxu0 %v1580
    %1796 = vmatprep.subr.bf16.mxu0 0
    %1797 = vmatpush2.bf16.msra.mxu0 %v1595
    %1798 = vmatprep.subr.bf16.mxu0 0
    %1799 = vmatpush2.bf16.msra.mxu0 %v1594
    %1800 = vmatprep.subr.bf16.mxu0 0
    %1801 = vmatpush2.bf16.msra.mxu0 %v1593
    %1802 = vmatprep.subr.bf16.mxu0 0
    %1803 = vmatpush2.bf16.msra.mxu0 %v1592
    %1804 = vmatprep.subr.bf16.mxu0 0
    %1805 = vmatpush2.bf16.msra.mxu0 %v1591
    %1806 = vmatprep.subr.bf16.mxu0 0
    %1807 = vmatpush2.bf16.msra.mxu0 %v1590
    %1808 = vmatprep.subr.bf16.mxu0 0
    %1809 = vmatpush2.bf16.msra.mxu0 %v1589
    %1810 = vmatprep.subr.bf16.mxu0 0
    %1811 = vmatpush2.bf16.msra.mxu0 %v1588
    %1812 = vmatprep.mubr.bf16.mxu0 %v1147
    %1813 = vmatmul.mubr.bf16.gmra.mxu0 %v1146
    %v1814 = vpop.f32.mrf.mxu0
    %v1815 = vadd.f32 %v1775, %v1814
    %v1816 = vpop.f32.mrf.mxu0
    %v1817 = vpop.f32.mrf.mxu0
    %v1818 = vpop.f32.mrf.mxu0
    %1819 = vdwg.mxu0
    %v1821 = vlaneseq
    %v1822 = vshrl.u32 %v1821, 7
    %v1823 = vsub.s32 0, %v1822
    %v1824 = vrot.slane %v1100, %v1823
    %v1826 = vadd.f32 %v1824, %v1815
    %v1828 = vrot.slane %v1095, 7
    %v1830 = vsel %vm1104, %v1094, %v1828
    %v1832 = vrot.slane %v1094, 1
    %v1834 = vsel %vm1104, %v1832, %v1095
    %v1835 = vrot.slane %v1094, 2
    %v1837 = vrot.slane %v1095, 1
    %v1839 = vsel %vm1104, %v1835, %v1837
    %v1840 = vrot.slane %v1094, 3
    %v1842 = vrot.slane %v1095, 2
    %v1844 = vsel %vm1104, %v1840, %v1842
    %v1845 = vrot.slane %v1094, 4
    %v1847 = vrot.slane %v1095, 3
    %v1849 = vsel %vm1104, %v1845, %v1847
    %v1850 = vrot.slane %v1094, 5
    %v1852 = vrot.slane %v1095, 4
    %v1854 = vsel %vm1104, %v1850, %v1852
    %v1855 = vrot.slane %v1094, 6
    %v1857 = vrot.slane %v1095, 5
    %v1859 = vsel %vm1104, %v1855, %v1857
    %v1860 = vrot.slane %v1094, 7
    %v1862 = vrot.slane %v1095, 6
    %v1864 = vsel %vm1104, %v1860, %v1862
    %v1865 = vpack.c.bf16 %v1830, %v1830
    %v1866 = vpack.c.bf16 %v1834, %v1834
    %v1867 = vpack.c.bf16 %v1839, %v1839
    %v1868 = vpack.c.bf16 %v1844, %v1844
    %v1869 = vpack.c.bf16 %v1849, %v1849
    %v1870 = vpack.c.bf16 %v1854, %v1854
    %v1871 = vpack.c.bf16 %v1859, %v1859
    %v1872 = vpack.c.bf16 %v1864, %v1864
    %v1873 = vld [vmem:[#allocation3 + $0x200] sm:$0xf]
    %v1874 = vld [vmem:[#allocation3 + $0x204] sm:$0xf]
    %v1875 = vld [vmem:[#allocation3 + $0x208] sm:$0xf]
    %v1876 = vld [vmem:[#allocation3 + $0x20c] sm:$0xf]
    %v1877 = vld [vmem:[#allocation3 + $0x210] sm:$0xf]
    %v1878 = vld [vmem:[#allocation3 + $0x214] sm:$0xf]
    %v1879 = vld [vmem:[#allocation3 + $0x218] sm:$0xf]
    %v1880 = vld [vmem:[#allocation3 + $0x21c] sm:$0xf]
    %v1881 = vld [vmem:[#allocation3 + $0x220] sm:$0xf]
    %v1882 = vld [vmem:[#allocation3 + $0x224] sm:$0xf]
    %v1883 = vld [vmem:[#allocation3 + $0x228] sm:$0xf]
    %v1884 = vld [vmem:[#allocation3 + $0x22c] sm:$0xf]
    %v1885 = vld [vmem:[#allocation3 + $0x230] sm:$0xf]
    %v1886 = vld [vmem:[#allocation3 + $0x234] sm:$0xf]
    %v1887 = vld [vmem:[#allocation3 + $0x238] sm:$0xf]
    %v1888 = vld [vmem:[#allocation3 + $0x23c] sm:$0xf]
    %v1889 = vld [vmem:[#allocation3 + $0x240] sm:$0xf]
    %v1890 = vld [vmem:[#allocation3 + $0x244] sm:$0xf]
    %v1891 = vld [vmem:[#allocation3 + $0x248] sm:$0xf]
    %v1892 = vld [vmem:[#allocation3 + $0x24c] sm:$0xf]
    %v1893 = vld [vmem:[#allocation3 + $0x250] sm:$0xf]
    %v1894 = vld [vmem:[#allocation3 + $0x254] sm:$0xf]
    %v1895 = vld [vmem:[#allocation3 + $0x258] sm:$0xf]
    %v1896 = vld [vmem:[#allocation3 + $0x25c] sm:$0xf]
    %v1897 = vld [vmem:[#allocation3 + $0x260] sm:$0xf]
    %v1898 = vld [vmem:[#allocation3 + $0x264] sm:$0xf]
    %v1899 = vld [vmem:[#allocation3 + $0x268] sm:$0xf]
    %v1900 = vld [vmem:[#allocation3 + $0x26c] sm:$0xf]
    %v1901 = vld [vmem:[#allocation3 + $0x270] sm:$0xf]
    %v1902 = vld [vmem:[#allocation3 + $0x274] sm:$0xf]
    %v1903 = vld [vmem:[#allocation3 + $0x278] sm:$0xf]
    %v1904 = vld [vmem:[#allocation3 + $0x27c] sm:$0xf]
    %v1905 = vld [vmem:[#allocation3 + $0x280] sm:$0xf]
    %v1906 = vld [vmem:[#allocation3 + $0x284] sm:$0xf]
    %v1907 = vld [vmem:[#allocation3 + $0x288] sm:$0xf]
    %v1908 = vld [vmem:[#allocation3 + $0x28c] sm:$0xf]
    %v1909 = vld [vmem:[#allocation3 + $0x290] sm:$0xf]
    %v1910 = vld [vmem:[#allocation3 + $0x294] sm:$0xf]
    %v1911 = vld [vmem:[#allocation3 + $0x298] sm:$0xf]
    %v1912 = vld [vmem:[#allocation3 + $0x29c] sm:$0xf]
    %v1913 = vld [vmem:[#allocation3 + $0x2a0] sm:$0xf]
    %v1914 = vld [vmem:[#allocation3 + $0x2a4] sm:$0xf]
    %v1915 = vld [vmem:[#allocation3 + $0x2a8] sm:$0xf]
    %v1916 = vld [vmem:[#allocation3 + $0x2ac] sm:$0xf]
    %v1917 = vld [vmem:[#allocation3 + $0x2b0] sm:$0xf]
    %v1918 = vld [vmem:[#allocation3 + $0x2b4] sm:$0xf]
    %v1919 = vld [vmem:[#allocation3 + $0x2b8] sm:$0xf]
    %v1920 = vld [vmem:[#allocation3 + $0x2bc] sm:$0xf]
    %v1921 = vld [vmem:[#allocation3 + $0x2c0] sm:$0xf]
    %v1922 = vld [vmem:[#allocation3 + $0x2c4] sm:$0xf]
    %v1923 = vld [vmem:[#allocation3 + $0x2c8] sm:$0xf]
    %v1924 = vld [vmem:[#allocation3 + $0x2cc] sm:$0xf]
    %v1925 = vld [vmem:[#allocation3 + $0x2d0] sm:$0xf]
    %v1926 = vld [vmem:[#allocation3 + $0x2d4] sm:$0xf]
    %v1927 = vld [vmem:[#allocation3 + $0x2d8] sm:$0xf]
    %v1928 = vld [vmem:[#allocation3 + $0x2dc] sm:$0xf]
    %v1929 = vld [vmem:[#allocation3 + $0x2e0] sm:$0xf]
    %v1930 = vld [vmem:[#allocation3 + $0x2e4] sm:$0xf]
    %v1931 = vld [vmem:[#allocation3 + $0x2e8] sm:$0xf]
    %v1932 = vld [vmem:[#allocation3 + $0x2ec] sm:$0xf]
    %v1933 = vld [vmem:[#allocation3 + $0x2f0] sm:$0xf]
    %v1934 = vld [vmem:[#allocation3 + $0x2f4] sm:$0xf]
    %v1935 = vld [vmem:[#allocation3 + $0x2f8] sm:$0xf]
    %v1936 = vld [vmem:[#allocation3 + $0x2fc] sm:$0xf]
    %v1937 = vld [vmem:[#allocation3 + $0x300] sm:$0xf]
    %v1938 = vld [vmem:[#allocation3 + $0x304] sm:$0xf]
    %v1939 = vld [vmem:[#allocation3 + $0x308] sm:$0xf]
    %v1940 = vld [vmem:[#allocation3 + $0x30c] sm:$0xf]
    %v1941 = vld [vmem:[#allocation3 + $0x310] sm:$0xf]
    %v1942 = vld [vmem:[#allocation3 + $0x314] sm:$0xf]
    %v1943 = vld [vmem:[#allocation3 + $0x318] sm:$0xf]
    %v1944 = vld [vmem:[#allocation3 + $0x31c] sm:$0xf]
    %v1945 = vld [vmem:[#allocation3 + $0x320] sm:$0xf]
    %v1946 = vld [vmem:[#allocation3 + $0x324] sm:$0xf]
    %v1947 = vld [vmem:[#allocation3 + $0x328] sm:$0xf]
    %v1948 = vld [vmem:[#allocation3 + $0x32c] sm:$0xf]
    %v1949 = vld [vmem:[#allocation3 + $0x330] sm:$0xf]
    %v1950 = vld [vmem:[#allocation3 + $0x334] sm:$0xf]
    %v1951 = vld [vmem:[#allocation3 + $0x338] sm:$0xf]
    %v1952 = vld [vmem:[#allocation3 + $0x33c] sm:$0xf]
    %v1953 = vld [vmem:[#allocation3 + $0x340] sm:$0xf]
    %v1954 = vld [vmem:[#allocation3 + $0x344] sm:$0xf]
    %v1955 = vld [vmem:[#allocation3 + $0x348] sm:$0xf]
    %v1956 = vld [vmem:[#allocation3 + $0x34c] sm:$0xf]
    %v1957 = vld [vmem:[#allocation3 + $0x350] sm:$0xf]
    %v1958 = vld [vmem:[#allocation3 + $0x354] sm:$0xf]
    %v1959 = vld [vmem:[#allocation3 + $0x358] sm:$0xf]
    %v1960 = vld [vmem:[#allocation3 + $0x35c] sm:$0xf]
    %v1961 = vld [vmem:[#allocation3 + $0x360] sm:$0xf]
    %v1962 = vld [vmem:[#allocation3 + $0x364] sm:$0xf]
    %v1963 = vld [vmem:[#allocation3 + $0x368] sm:$0xf]
    %v1964 = vld [vmem:[#allocation3 + $0x36c] sm:$0xf]
    %v1965 = vld [vmem:[#allocation3 + $0x370] sm:$0xf]
    %v1966 = vld [vmem:[#allocation3 + $0x374] sm:$0xf]
    %v1967 = vld [vmem:[#allocation3 + $0x378] sm:$0xf]
    %v1968 = vld [vmem:[#allocation3 + $0x37c] sm:$0xf]
    %v1969 = vld [vmem:[#allocation3 + $0x380] sm:$0xf]
    %v1970 = vld [vmem:[#allocation3 + $0x384] sm:$0xf]
    %v1971 = vld [vmem:[#allocation3 + $0x388] sm:$0xf]
    %v1972 = vld [vmem:[#allocation3 + $0x38c] sm:$0xf]
    %v1973 = vld [vmem:[#allocation3 + $0x390] sm:$0xf]
    %v1974 = vld [vmem:[#allocation3 + $0x394] sm:$0xf]
    %v1975 = vld [vmem:[#allocation3 + $0x398] sm:$0xf]
    %v1976 = vld [vmem:[#allocation3 + $0x39c] sm:$0xf]
    %v1977 = vld [vmem:[#allocation3 + $0x3a0] sm:$0xf]
    %v1978 = vld [vmem:[#allocation3 + $0x3a4] sm:$0xf]
    %v1979 = vld [vmem:[#allocation3 + $0x3a8] sm:$0xf]
    %v1980 = vld [vmem:[#allocation3 + $0x3ac] sm:$0xf]
    %v1981 = vld [vmem:[#allocation3 + $0x3b0] sm:$0xf]
    %v1982 = vld [vmem:[#allocation3 + $0x3b4] sm:$0xf]
    %v1983 = vld [vmem:[#allocation3 + $0x3b8] sm:$0xf]
    %v1984 = vld [vmem:[#allocation3 + $0x3bc] sm:$0xf]
    %v1985 = vld [vmem:[#allocation3 + $0x3c0] sm:$0xf]
    %v1986 = vld [vmem:[#allocation3 + $0x3c4] sm:$0xf]
    %v1987 = vld [vmem:[#allocation3 + $0x3c8] sm:$0xf]
    %v1988 = vld [vmem:[#allocation3 + $0x3cc] sm:$0xf]
    %v1989 = vld [vmem:[#allocation3 + $0x3d0] sm:$0xf]
    %v1990 = vld [vmem:[#allocation3 + $0x3d4] sm:$0xf]
    %v1991 = vld [vmem:[#allocation3 + $0x3d8] sm:$0xf]
    %v1992 = vld [vmem:[#allocation3 + $0x3dc] sm:$0xf]
    %v1993 = vld [vmem:[#allocation3 + $0x3e0] sm:$0xf]
    %v1994 = vld [vmem:[#allocation3 + $0x3e4] sm:$0xf]
    %v1995 = vld [vmem:[#allocation3 + $0x3e8] sm:$0xf]
    %v1996 = vld [vmem:[#allocation3 + $0x3ec] sm:$0xf]
    %v1997 = vld [vmem:[#allocation3 + $0x3f0] sm:$0xf]
    %v1998 = vld [vmem:[#allocation3 + $0x3f4] sm:$0xf]
    %v1999 = vld [vmem:[#allocation3 + $0x3f8] sm:$0xf]
    %v2000 = vld [vmem:[#allocation3 + $0x3fc] sm:$0xf]
    %v2129 = vunpack.c.l.b16 %v1873
    %v2130 = vunpack.c.l.b16 %v1874
    %v2131 = vunpack.c.l.b16 %v1875
    %v2132 = vunpack.c.l.b16 %v1876
    %v2133 = vunpack.c.l.b16 %v1877
    %v2134 = vunpack.c.l.b16 %v1878
    %v2135 = vunpack.c.l.b16 %v1879
    %v2136 = vunpack.c.l.b16 %v1880
    %v2137 = vunpack.c.l.b16 %v1881
    %v2138 = vunpack.c.l.b16 %v1882
    %v2139 = vunpack.c.l.b16 %v1883
    %v2140 = vunpack.c.l.b16 %v1884
    %v2141 = vunpack.c.l.b16 %v1885
    %v2142 = vunpack.c.l.b16 %v1886
    %v2143 = vunpack.c.l.b16 %v1887
    %v2144 = vunpack.c.l.b16 %v1888
    %v2145 = vunpack.c.l.b16 %v1889
    %v2146 = vunpack.c.l.b16 %v1890
    %v2147 = vunpack.c.l.b16 %v1891
    %v2148 = vunpack.c.l.b16 %v1892
    %v2149 = vunpack.c.l.b16 %v1893
    %v2150 = vunpack.c.l.b16 %v1894
    %v2151 = vunpack.c.l.b16 %v1895
    %v2152 = vunpack.c.l.b16 %v1896
    %v2153 = vunpack.c.l.b16 %v1897
    %v2154 = vunpack.c.l.b16 %v1898
    %v2155 = vunpack.c.l.b16 %v1899
    %v2156 = vunpack.c.l.b16 %v1900
    %v2157 = vunpack.c.l.b16 %v1901
    %v2158 = vunpack.c.l.b16 %v1902
    %v2159 = vunpack.c.l.b16 %v1903
    %v2160 = vunpack.c.l.b16 %v1904
    %v2161 = vunpack.c.l.b16 %v1905
    %v2162 = vunpack.c.l.b16 %v1906
    %v2163 = vunpack.c.l.b16 %v1907
    %v2164 = vunpack.c.l.b16 %v1908
    %v2165 = vunpack.c.l.b16 %v1909
    %v2166 = vunpack.c.l.b16 %v1910
    %v2167 = vunpack.c.l.b16 %v1911
    %v2168 = vunpack.c.l.b16 %v1912
    %v2169 = vunpack.c.l.b16 %v1913
    %v2170 = vunpack.c.l.b16 %v1914
    %v2171 = vunpack.c.l.b16 %v1915
    %v2172 = vunpack.c.l.b16 %v1916
    %v2173 = vunpack.c.l.b16 %v1917
    %v2174 = vunpack.c.l.b16 %v1918
    %v2175 = vunpack.c.l.b16 %v1919
    %v2176 = vunpack.c.l.b16 %v1920
    %v2177 = vunpack.c.l.b16 %v1921
    %v2178 = vunpack.c.l.b16 %v1922
    %v2179 = vunpack.c.l.b16 %v1923
    %v2180 = vunpack.c.l.b16 %v1924
    %v2181 = vunpack.c.l.b16 %v1925
    %v2182 = vunpack.c.l.b16 %v1926
    %v2183 = vunpack.c.l.b16 %v1927
    %v2184 = vunpack.c.l.b16 %v1928
    %v2185 = vunpack.c.l.b16 %v1929
    %v2186 = vunpack.c.l.b16 %v1930
    %v2187 = vunpack.c.l.b16 %v1931
    %v2188 = vunpack.c.l.b16 %v1932
    %v2189 = vunpack.c.l.b16 %v1933
    %v2190 = vunpack.c.l.b16 %v1934
    %v2191 = vunpack.c.l.b16 %v1935
    %v2192 = vunpack.c.l.b16 %v1936
    %v2193 = vunpack.c.l.b16 %v1937
    %v2194 = vunpack.c.l.b16 %v1938
    %v2195 = vunpack.c.l.b16 %v1939
    %v2196 = vunpack.c.l.b16 %v1940
    %v2197 = vunpack.c.l.b16 %v1941
    %v2198 = vunpack.c.l.b16 %v1942
    %v2199 = vunpack.c.l.b16 %v1943
    %v2200 = vunpack.c.l.b16 %v1944
    %v2201 = vunpack.c.l.b16 %v1945
    %v2202 = vunpack.c.l.b16 %v1946
    %v2203 = vunpack.c.l.b16 %v1947
    %v2204 = vunpack.c.l.b16 %v1948
    %v2205 = vunpack.c.l.b16 %v1949
    %v2206 = vunpack.c.l.b16 %v1950
    %v2207 = vunpack.c.l.b16 %v1951
    %v2208 = vunpack.c.l.b16 %v1952
    %v2209 = vunpack.c.l.b16 %v1953
    %v2210 = vunpack.c.l.b16 %v1954
    %v2211 = vunpack.c.l.b16 %v1955
    %v2212 = vunpack.c.l.b16 %v1956
    %v2213 = vunpack.c.l.b16 %v1957
    %v2214 = vunpack.c.l.b16 %v1958
    %v2215 = vunpack.c.l.b16 %v1959
    %v2216 = vunpack.c.l.b16 %v1960
    %v2217 = vunpack.c.l.b16 %v1961
    %v2218 = vunpack.c.l.b16 %v1962
    %v2219 = vunpack.c.l.b16 %v1963
    %v2220 = vunpack.c.l.b16 %v1964
    %v2221 = vunpack.c.l.b16 %v1965
    %v2222 = vunpack.c.l.b16 %v1966
    %v2223 = vunpack.c.l.b16 %v1967
    %v2224 = vunpack.c.l.b16 %v1968
    %v2225 = vunpack.c.l.b16 %v1969
    %v2226 = vunpack.c.l.b16 %v1970
    %v2227 = vunpack.c.l.b16 %v1971
    %v2228 = vunpack.c.l.b16 %v1972
    %v2229 = vunpack.c.l.b16 %v1973
    %v2230 = vunpack.c.l.b16 %v1974
    %v2231 = vunpack.c.l.b16 %v1975
    %v2232 = vunpack.c.l.b16 %v1976
    %v2233 = vunpack.c.l.b16 %v1977
    %v2234 = vunpack.c.l.b16 %v1978
    %v2235 = vunpack.c.l.b16 %v1979
    %v2236 = vunpack.c.l.b16 %v1980
    %v2237 = vunpack.c.l.b16 %v1981
    %v2238 = vunpack.c.l.b16 %v1982
    %v2239 = vunpack.c.l.b16 %v1983
    %v2240 = vunpack.c.l.b16 %v1984
    %v2241 = vunpack.c.l.b16 %v1985
    %v2242 = vunpack.c.l.b16 %v1986
    %v2243 = vunpack.c.l.b16 %v1987
    %v2244 = vunpack.c.l.b16 %v1988
    %v2245 = vunpack.c.l.b16 %v1989
    %v2246 = vunpack.c.l.b16 %v1990
    %v2247 = vunpack.c.l.b16 %v1991
    %v2248 = vunpack.c.l.b16 %v1992
    %v2249 = vunpack.c.l.b16 %v1993
    %v2250 = vunpack.c.l.b16 %v1994
    %v2251 = vunpack.c.l.b16 %v1995
    %v2252 = vunpack.c.l.b16 %v1996
    %v2253 = vunpack.c.l.b16 %v1997
    %v2254 = vunpack.c.l.b16 %v1998
    %v2255 = vunpack.c.l.b16 %v1999
    %v2256 = vunpack.c.l.b16 %v2000
    %v2257 = vpack.c.b16 %v2130, %v2129
    %v2258 = vpack.c.b16 %v2132, %v2131
    %v2259 = vpack.c.b16 %v2134, %v2133
    %v2260 = vpack.c.b16 %v2136, %v2135
    %v2261 = vpack.c.b16 %v2138, %v2137
    %v2262 = vpack.c.b16 %v2140, %v2139
    %v2263 = vpack.c.b16 %v2142, %v2141
    %v2264 = vpack.c.b16 %v2144, %v2143
    %v2265 = vpack.c.b16 %v2146, %v2145
    %v2266 = vpack.c.b16 %v2148, %v2147
    %v2267 = vpack.c.b16 %v2150, %v2149
    %v2268 = vpack.c.b16 %v2152, %v2151
    %v2269 = vpack.c.b16 %v2154, %v2153
    %v2270 = vpack.c.b16 %v2156, %v2155
    %v2271 = vpack.c.b16 %v2158, %v2157
    %v2272 = vpack.c.b16 %v2160, %v2159
    %v2273 = vpack.c.b16 %v2162, %v2161
    %v2274 = vpack.c.b16 %v2164, %v2163
    %v2275 = vpack.c.b16 %v2166, %v2165
    %v2276 = vpack.c.b16 %v2168, %v2167
    %v2277 = vpack.c.b16 %v2170, %v2169
    %v2278 = vpack.c.b16 %v2172, %v2171
    %v2279 = vpack.c.b16 %v2174, %v2173
    %v2280 = vpack.c.b16 %v2176, %v2175
    %v2281 = vpack.c.b16 %v2178, %v2177
    %v2282 = vpack.c.b16 %v2180, %v2179
    %v2283 = vpack.c.b16 %v2182, %v2181
    %v2284 = vpack.c.b16 %v2184, %v2183
    %v2285 = vpack.c.b16 %v2186, %v2185
    %v2286 = vpack.c.b16 %v2188, %v2187
    %v2287 = vpack.c.b16 %v2190, %v2189
    %v2288 = vpack.c.b16 %v2192, %v2191
    %v2289 = vpack.c.b16 %v2194, %v2193
    %v2290 = vpack.c.b16 %v2196, %v2195
    %v2291 = vpack.c.b16 %v2198, %v2197
    %v2292 = vpack.c.b16 %v2200, %v2199
    %v2293 = vpack.c.b16 %v2202, %v2201
    %v2294 = vpack.c.b16 %v2204, %v2203
    %v2295 = vpack.c.b16 %v2206, %v2205
    %v2296 = vpack.c.b16 %v2208, %v2207
    %v2297 = vpack.c.b16 %v2210, %v2209
    %v2298 = vpack.c.b16 %v2212, %v2211
    %v2299 = vpack.c.b16 %v2214, %v2213
    %v2300 = vpack.c.b16 %v2216, %v2215
    %v2301 = vpack.c.b16 %v2218, %v2217
    %v2302 = vpack.c.b16 %v2220, %v2219
    %v2303 = vpack.c.b16 %v2222, %v2221
    %v2304 = vpack.c.b16 %v2224, %v2223
    %v2305 = vpack.c.b16 %v2226, %v2225
    %v2306 = vpack.c.b16 %v2228, %v2227
    %v2307 = vpack.c.b16 %v2230, %v2229
    %v2308 = vpack.c.b16 %v2232, %v2231
    %v2309 = vpack.c.b16 %v2234, %v2233
    %v2310 = vpack.c.b16 %v2236, %v2235
    %v2311 = vpack.c.b16 %v2238, %v2237
    %v2312 = vpack.c.b16 %v2240, %v2239
    %v2313 = vpack.c.b16 %v2242, %v2241
    %v2314 = vpack.c.b16 %v2244, %v2243
    %v2315 = vpack.c.b16 %v2246, %v2245
    %v2316 = vpack.c.b16 %v2248, %v2247
    %v2317 = vpack.c.b16 %v2250, %v2249
    %v2318 = vpack.c.b16 %v2252, %v2251
    %v2319 = vpack.c.b16 %v2254, %v2253
    %v2320 = vpack.c.b16 %v2256, %v2255
    %2385 = vmatprep.subr.bf16.mxu0 0
    %2386 = vmatpush1.bf16.msra.mxu0 %v2264
    %2387 = vmatprep.subr.bf16.mxu0 0
    %2388 = vmatpush1.bf16.msra.mxu0 %v2263
    %2389 = vmatprep.subr.bf16.mxu0 0
    %2390 = vmatpush1.bf16.msra.mxu0 %v2262
    %2391 = vmatprep.subr.bf16.mxu0 0
    %2392 = vmatpush1.bf16.msra.mxu0 %v2261
    %2393 = vmatprep.subr.bf16.mxu0 0
    %2394 = vmatpush1.bf16.msra.mxu0 %v2260
    %2395 = vmatprep.subr.bf16.mxu0 0
    %2396 = vmatpush1.bf16.msra.mxu0 %v2259
    %2397 = vmatprep.subr.bf16.mxu0 0
    %2398 = vmatpush1.bf16.msra.mxu0 %v2258
    %2399 = vmatprep.subr.bf16.mxu0 0
    %2400 = vmatpush1.bf16.msra.mxu0 %v2257
    %2401 = vmatprep.subr.bf16.mxu0 0
    %2402 = vmatpush2.bf16.msra.mxu0 %v2272
    %2403 = vmatprep.subr.bf16.mxu0 0
    %2404 = vmatpush2.bf16.msra.mxu0 %v2271
    %2405 = vmatprep.subr.bf16.mxu0 0
    %2406 = vmatpush2.bf16.msra.mxu0 %v2270
    %2407 = vmatprep.subr.bf16.mxu0 0
    %2408 = vmatpush2.bf16.msra.mxu0 %v2269
    %2409 = vmatprep.subr.bf16.mxu0 0
    %2410 = vmatpush2.bf16.msra.mxu0 %v2268
    %2411 = vmatprep.subr.bf16.mxu0 0
    %2412 = vmatpush2.bf16.msra.mxu0 %v2267
    %2413 = vmatprep.subr.bf16.mxu0 0
    %2414 = vmatpush2.bf16.msra.mxu0 %v2266
    %2415 = vmatprep.subr.bf16.mxu0 0
    %2416 = vmatpush2.bf16.msra.mxu0 %v2265
    %2417 = vmatprep.mubr.bf16.mxu0 %v1866
    %2418 = vmatmul.mubr.bf16.gmra.mxu0 %v1865
    %v2419 = vpop.f32.mrf.mxu0
    %v2420 = vadd.f32 0.0, %v2419
    %v2421 = vpop.f32.mrf.mxu0
    %v2422 = vpop.f32.mrf.mxu0
    %v2423 = vpop.f32.mrf.mxu0
    %2424 = vdwg.mxu0
    %2425 = vmatprep.subr.bf16.mxu0 0
    %2426 = vmatpush1.bf16.msra.mxu0 %v2280
    %2427 = vmatprep.subr.bf16.mxu0 0
    %2428 = vmatpush1.bf16.msra.mxu0 %v2279
    %2429 = vmatprep.subr.bf16.mxu0 0
    %2430 = vmatpush1.bf16.msra.mxu0 %v2278
    %2431 = vmatprep.subr.bf16.mxu0 0
    %2432 = vmatpush1.bf16.msra.mxu0 %v2277
    %2433 = vmatprep.subr.bf16.mxu0 0
    %2434 = vmatpush1.bf16.msra.mxu0 %v2276
    %2435 = vmatprep.subr.bf16.mxu0 0
    %2436 = vmatpush1.bf16.msra.mxu0 %v2275
    %2437 = vmatprep.subr.bf16.mxu0 0
    %2438 = vmatpush1.bf16.msra.mxu0 %v2274
    %2439 = vmatprep.subr.bf16.mxu0 0
    %2440 = vmatpush1.bf16.msra.mxu0 %v2273
    %2441 = vmatprep.subr.bf16.mxu0 0
    %2442 = vmatpush2.bf16.msra.mxu0 %v2288
    %2443 = vmatprep.subr.bf16.mxu0 0
    %2444 = vmatpush2.bf16.msra.mxu0 %v2287
    %2445 = vmatprep.subr.bf16.mxu0 0
    %2446 = vmatpush2.bf16.msra.mxu0 %v2286
    %2447 = vmatprep.subr.bf16.mxu0 0
    %2448 = vmatpush2.bf16.msra.mxu0 %v2285
    %2449 = vmatprep.subr.bf16.mxu0 0
    %2450 = vmatpush2.bf16.msra.mxu0 %v2284
    %2451 = vmatprep.subr.bf16.mxu0 0
    %2452 = vmatpush2.bf16.msra.mxu0 %v2283
    %2453 = vmatprep.subr.bf16.mxu0 0
    %2454 = vmatpush2.bf16.msra.mxu0 %v2282
    %2455 = vmatprep.subr.bf16.mxu0 0
    %2456 = vmatpush2.bf16.msra.mxu0 %v2281
    %2457 = vmatprep.mubr.bf16.mxu0 %v1868
    %2458 = vmatmul.mubr.bf16.gmra.mxu0 %v1867
    %v2459 = vpop.f32.mrf.mxu0
    %v2460 = vadd.f32 %v2420, %v2459
    %v2461 = vpop.f32.mrf.mxu0
    %v2462 = vpop.f32.mrf.mxu0
    %v2463 = vpop.f32.mrf.mxu0
    %2464 = vdwg.mxu0
    %2465 = vmatprep.subr.bf16.mxu0 0
    %2466 = vmatpush1.bf16.msra.mxu0 %v2296
    %2467 = vmatprep.subr.bf16.mxu0 0
    %2468 = vmatpush1.bf16.msra.mxu0 %v2295
    %2469 = vmatprep.subr.bf16.mxu0 0
    %2470 = vmatpush1.bf16.msra.mxu0 %v2294
    %2471 = vmatprep.subr.bf16.mxu0 0
    %2472 = vmatpush1.bf16.msra.mxu0 %v2293
    %2473 = vmatprep.subr.bf16.mxu0 0
    %2474 = vmatpush1.bf16.msra.mxu0 %v2292
    %2475 = vmatprep.subr.bf16.mxu0 0
    %2476 = vmatpush1.bf16.msra.mxu0 %v2291
    %2477 = vmatprep.subr.bf16.mxu0 0
    %2478 = vmatpush1.bf16.msra.mxu0 %v2290
    %2479 = vmatprep.subr.bf16.mxu0 0
    %2480 = vmatpush1.bf16.msra.mxu0 %v2289
    %2481 = vmatprep.subr.bf16.mxu0 0
    %2482 = vmatpush2.bf16.msra.mxu0 %v2304
    %2483 = vmatprep.subr.bf16.mxu0 0
    %2484 = vmatpush2.bf16.msra.mxu0 %v2303
    %2485 = vmatprep.subr.bf16.mxu0 0
    %2486 = vmatpush2.bf16.msra.mxu0 %v2302
    %2487 = vmatprep.subr.bf16.mxu0 0
    %2488 = vmatpush2.bf16.msra.mxu0 %v2301
    %2489 = vmatprep.subr.bf16.mxu0 0
    %2490 = vmatpush2.bf16.msra.mxu0 %v2300
    %2491 = vmatprep.subr.bf16.mxu0 0
    %2492 = vmatpush2.bf16.msra.mxu0 %v2299
    %2493 = vmatprep.subr.bf16.mxu0 0
    %2494 = vmatpush2.bf16.msra.mxu0 %v2298
    %2495 = vmatprep.subr.bf16.mxu0 0
    %2496 = vmatpush2.bf16.msra.mxu0 %v2297
    %2497 = vmatprep.mubr.bf16.mxu0 %v1870
    %2498 = vmatmul.mubr.bf16.gmra.mxu0 %v1869
    %v2499 = vpop.f32.mrf.mxu0
    %v2500 = vadd.f32 %v2460, %v2499
    %v2501 = vpop.f32.mrf.mxu0
    %v2502 = vpop.f32.mrf.mxu0
    %v2503 = vpop.f32.mrf.mxu0
    %2504 = vdwg.mxu0
    %2505 = vmatprep.subr.bf16.mxu0 0
    %2506 = vmatpush1.bf16.msra.mxu0 %v2312
    %2507 = vmatprep.subr.bf16.mxu0 0
    %2508 = vmatpush1.bf16.msra.mxu0 %v2311
    %2509 = vmatprep.subr.bf16.mxu0 0
    %2510 = vmatpush1.bf16.msra.mxu0 %v2310
    %2511 = vmatprep.subr.bf16.mxu0 0
    %2512 = vmatpush1.bf16.msra.mxu0 %v2309
    %2513 = vmatprep.subr.bf16.mxu0 0
    %2514 = vmatpush1.bf16.msra.mxu0 %v2308
    %2515 = vmatprep.subr.bf16.mxu0 0
    %2516 = vmatpush1.bf16.msra.mxu0 %v2307
    %2517 = vmatprep.subr.bf16.mxu0 0
    %2518 = vmatpush1.bf16.msra.mxu0 %v2306
    %2519 = vmatprep.subr.bf16.mxu0 0
    %2520 = vmatpush1.bf16.msra.mxu0 %v2305
    %2521 = vmatprep.subr.bf16.mxu0 0
    %2522 = vmatpush2.bf16.msra.mxu0 %v2320
    %2523 = vmatprep.subr.bf16.mxu0 0
    %2524 = vmatpush2.bf16.msra.mxu0 %v2319
    %2525 = vmatprep.subr.bf16.mxu0 0
    %2526 = vmatpush2.bf16.msra.mxu0 %v2318
    %2527 = vmatprep.subr.bf16.mxu0 0
    %2528 = vmatpush2.bf16.msra.mxu0 %v2317
    %2529 = vmatprep.subr.bf16.mxu0 0
    %2530 = vmatpush2.bf16.msra.mxu0 %v2316
    %2531 = vmatprep.subr.bf16.mxu0 0
    %2532 = vmatpush2.bf16.msra.mxu0 %v2315
    %2533 = vmatprep.subr.bf16.mxu0 0
    %2534 = vmatpush2.bf16.msra.mxu0 %v2314
    %2535 = vmatprep.subr.bf16.mxu0 0
    %2536 = vmatpush2.bf16.msra.mxu0 %v2313
    %2537 = vmatprep.mubr.bf16.mxu0 %v1872
    %2538 = vmatmul.mubr.bf16.gmra.mxu0 %v1871
    %v2539 = vpop.f32.mrf.mxu0
    %v2540 = vadd.f32 %v2500, %v2539
    %v2541 = vpop.f32.mrf.mxu0
    %v2542 = vpop.f32.mrf.mxu0
    %v2543 = vpop.f32.mrf.mxu0
    %2544 = vdwg.mxu0
    %v2545 = vadd.f32 %v1826, %v2540
    %v2547 = vrot.slane %v1097, 7
    %v2549 = vsel %vm1104, %v1096, %v2547
    %v2551 = vrot.slane %v1096, 1
    %v2553 = vsel %vm1104, %v2551, %v1097
    %v2554 = vrot.slane %v1096, 2
    %v2556 = vrot.slane %v1097, 1
    %v2558 = vsel %vm1104, %v2554, %v2556
    %v2559 = vrot.slane %v1096, 3
    %v2561 = vrot.slane %v1097, 2
    %v2563 = vsel %vm1104, %v2559, %v2561
    %v2564 = vrot.slane %v1096, 4
    %v2566 = vrot.slane %v1097, 3
    %v2568 = vsel %vm1104, %v2564, %v2566
    %v2569 = vrot.slane %v1096, 5
    %v2571 = vrot.slane %v1097, 4
    %v2573 = vsel %vm1104, %v2569, %v2571
    %v2574 = vrot.slane %v1096, 6
    %v2576 = vrot.slane %v1097, 5
    %v2578 = vsel %vm1104, %v2574, %v2576
    %v2579 = vrot.slane %v1096, 7
    %v2581 = vrot.slane %v1097, 6
    %v2583 = vsel %vm1104, %v2579, %v2581
    %v2584 = vpack.c.bf16 %v2549, %v2549
    %v2585 = vpack.c.bf16 %v2553, %v2553
    %v2586 = vpack.c.bf16 %v2558, %v2558
    %v2587 = vpack.c.bf16 %v2563, %v2563
    %v2588 = vpack.c.bf16 %v2568, %v2568
    %v2589 = vpack.c.bf16 %v2573, %v2573
    %v2590 = vpack.c.bf16 %v2578, %v2578
    %v2591 = vpack.c.bf16 %v2583, %v2583
    %v2592 = vld [vmem:[#allocation3 + $0x400] sm:$0xf]
    %v2593 = vld [vmem:[#allocation3 + $0x404] sm:$0xf]
    %v2594 = vld [vmem:[#allocation3 + $0x408] sm:$0xf]
    %v2595 = vld [vmem:[#allocation3 + $0x40c] sm:$0xf]
    %v2596 = vld [vmem:[#allocation3 + $0x410] sm:$0xf]
    %v2597 = vld [vmem:[#allocation3 + $0x414] sm:$0xf]
    %v2598 = vld [vmem:[#allocation3 + $0x418] sm:$0xf]
    %v2599 = vld [vmem:[#allocation3 + $0x41c] sm:$0xf]
    %v2600 = vld [vmem:[#allocation3 + $0x420] sm:$0xf]
    %v2601 = vld [vmem:[#allocation3 + $0x424] sm:$0xf]
    %v2602 = vld [vmem:[#allocation3 + $0x428] sm:$0xf]
    %v2603 = vld [vmem:[#allocation3 + $0x42c] sm:$0xf]
    %v2604 = vld [vmem:[#allocation3 + $0x430] sm:$0xf]
    %v2605 = vld [vmem:[#allocation3 + $0x434] sm:$0xf]
    %v2606 = vld [vmem:[#allocation3 + $0x438] sm:$0xf]
    %v2607 = vld [vmem:[#allocation3 + $0x43c] sm:$0xf]
    %v2608 = vld [vmem:[#allocation3 + $0x440] sm:$0xf]
    %v2609 = vld [vmem:[#allocation3 + $0x444] sm:$0xf]
    %v2610 = vld [vmem:[#allocation3 + $0x448] sm:$0xf]
    %v2611 = vld [vmem:[#allocation3 + $0x44c] sm:$0xf]
    %v2612 = vld [vmem:[#allocation3 + $0x450] sm:$0xf]
    %v2613 = vld [vmem:[#allocation3 + $0x454] sm:$0xf]
    %v2614 = vld [vmem:[#allocation3 + $0x458] sm:$0xf]
    %v2615 = vld [vmem:[#allocation3 + $0x45c] sm:$0xf]
    %v2616 = vld [vmem:[#allocation3 + $0x460] sm:$0xf]
    %v2617 = vld [vmem:[#allocation3 + $0x464] sm:$0xf]
    %v2618 = vld [vmem:[#allocation3 + $0x468] sm:$0xf]
    %v2619 = vld [vmem:[#allocation3 + $0x46c] sm:$0xf]
    %v2620 = vld [vmem:[#allocation3 + $0x470] sm:$0xf]
    %v2621 = vld [vmem:[#allocation3 + $0x474] sm:$0xf]
    %v2622 = vld [vmem:[#allocation3 + $0x478] sm:$0xf]
    %v2623 = vld [vmem:[#allocation3 + $0x47c] sm:$0xf]
    %v2624 = vld [vmem:[#allocation3 + $0x480] sm:$0xf]
    %v2625 = vld [vmem:[#allocation3 + $0x484] sm:$0xf]
    %v2626 = vld [vmem:[#allocation3 + $0x488] sm:$0xf]
    %v2627 = vld [vmem:[#allocation3 + $0x48c] sm:$0xf]
    %v2628 = vld [vmem:[#allocation3 + $0x490] sm:$0xf]
    %v2629 = vld [vmem:[#allocation3 + $0x494] sm:$0xf]
    %v2630 = vld [vmem:[#allocation3 + $0x498] sm:$0xf]
    %v2631 = vld [vmem:[#allocation3 + $0x49c] sm:$0xf]
    %v2632 = vld [vmem:[#allocation3 + $0x4a0] sm:$0xf]
    %v2633 = vld [vmem:[#allocation3 + $0x4a4] sm:$0xf]
    %v2634 = vld [vmem:[#allocation3 + $0x4a8] sm:$0xf]
    %v2635 = vld [vmem:[#allocation3 + $0x4ac] sm:$0xf]
    %v2636 = vld [vmem:[#allocation3 + $0x4b0] sm:$0xf]
    %v2637 = vld [vmem:[#allocation3 + $0x4b4] sm:$0xf]
    %v2638 = vld [vmem:[#allocation3 + $0x4b8] sm:$0xf]
    %v2639 = vld [vmem:[#allocation3 + $0x4bc] sm:$0xf]
    %v2640 = vld [vmem:[#allocation3 + $0x4c0] sm:$0xf]
    %v2641 = vld [vmem:[#allocation3 + $0x4c4] sm:$0xf]
    %v2642 = vld [vmem:[#allocation3 + $0x4c8] sm:$0xf]
    %v2643 = vld [vmem:[#allocation3 + $0x4cc] sm:$0xf]
    %v2644 = vld [vmem:[#allocation3 + $0x4d0] sm:$0xf]
    %v2645 = vld [vmem:[#allocation3 + $0x4d4] sm:$0xf]
    %v2646 = vld [vmem:[#allocation3 + $0x4d8] sm:$0xf]
    %v2647 = vld [vmem:[#allocation3 + $0x4dc] sm:$0xf]
    %v2648 = vld [vmem:[#allocation3 + $0x4e0] sm:$0xf]
    %v2649 = vld [vmem:[#allocation3 + $0x4e4] sm:$0xf]
    %v2650 = vld [vmem:[#allocation3 + $0x4e8] sm:$0xf]
    %v2651 = vld [vmem:[#allocation3 + $0x4ec] sm:$0xf]
    %v2652 = vld [vmem:[#allocation3 + $0x4f0] sm:$0xf]
    %v2653 = vld [vmem:[#allocation3 + $0x4f4] sm:$0xf]
    %v2654 = vld [vmem:[#allocation3 + $0x4f8] sm:$0xf]
    %v2655 = vld [vmem:[#allocation3 + $0x4fc] sm:$0xf]
    %v2656 = vld [vmem:[#allocation3 + $0x500] sm:$0xf]
    %v2657 = vld [vmem:[#allocation3 + $0x504] sm:$0xf]
    %v2658 = vld [vmem:[#allocation3 + $0x508] sm:$0xf]
    %v2659 = vld [vmem:[#allocation3 + $0x50c] sm:$0xf]
    %v2660 = vld [vmem:[#allocation3 + $0x510] sm:$0xf]
    %v2661 = vld [vmem:[#allocation3 + $0x514] sm:$0xf]
    %v2662 = vld [vmem:[#allocation3 + $0x518] sm:$0xf]
    %v2663 = vld [vmem:[#allocation3 + $0x51c] sm:$0xf]
    %v2664 = vld [vmem:[#allocation3 + $0x520] sm:$0xf]
    %v2665 = vld [vmem:[#allocation3 + $0x524] sm:$0xf]
    %v2666 = vld [vmem:[#allocation3 + $0x528] sm:$0xf]
    %v2667 = vld [vmem:[#allocation3 + $0x52c] sm:$0xf]
    %v2668 = vld [vmem:[#allocation3 + $0x530] sm:$0xf]
    %v2669 = vld [vmem:[#allocation3 + $0x534] sm:$0xf]
    %v2670 = vld [vmem:[#allocation3 + $0x538] sm:$0xf]
    %v2671 = vld [vmem:[#allocation3 + $0x53c] sm:$0xf]
    %v2672 = vld [vmem:[#allocation3 + $0x540] sm:$0xf]
    %v2673 = vld [vmem:[#allocation3 + $0x544] sm:$0xf]
    %v2674 = vld [vmem:[#allocation3 + $0x548] sm:$0xf]
    %v2675 = vld [vmem:[#allocation3 + $0x54c] sm:$0xf]
    %v2676 = vld [vmem:[#allocation3 + $0x550] sm:$0xf]
    %v2677 = vld [vmem:[#allocation3 + $0x554] sm:$0xf]
    %v2678 = vld [vmem:[#allocation3 + $0x558] sm:$0xf]
    %v2679 = vld [vmem:[#allocation3 + $0x55c] sm:$0xf]
    %v2680 = vld [vmem:[#allocation3 + $0x560] sm:$0xf]
    %v2681 = vld [vmem:[#allocation3 + $0x564] sm:$0xf]
    %v2682 = vld [vmem:[#allocation3 + $0x568] sm:$0xf]
    %v2683 = vld [vmem:[#allocation3 + $0x56c] sm:$0xf]
    %v2684 = vld [vmem:[#allocation3 + $0x570] sm:$0xf]
    %v2685 = vld [vmem:[#allocation3 + $0x574] sm:$0xf]
    %v2686 = vld [vmem:[#allocation3 + $0x578] sm:$0xf]
    %v2687 = vld [vmem:[#allocation3 + $0x57c] sm:$0xf]
    %v2688 = vld [vmem:[#allocation3 + $0x580] sm:$0xf]
    %v2689 = vld [vmem:[#allocation3 + $0x584] sm:$0xf]
    %v2690 = vld [vmem:[#allocation3 + $0x588] sm:$0xf]
    %v2691 = vld [vmem:[#allocation3 + $0x58c] sm:$0xf]
    %v2692 = vld [vmem:[#allocation3 + $0x590] sm:$0xf]
    %v2693 = vld [vmem:[#allocation3 + $0x594] sm:$0xf]
    %v2694 = vld [vmem:[#allocation3 + $0x598] sm:$0xf]
    %v2695 = vld [vmem:[#allocation3 + $0x59c] sm:$0xf]
    %v2696 = vld [vmem:[#allocation3 + $0x5a0] sm:$0xf]
    %v2697 = vld [vmem:[#allocation3 + $0x5a4] sm:$0xf]
    %v2698 = vld [vmem:[#allocation3 + $0x5a8] sm:$0xf]
    %v2699 = vld [vmem:[#allocation3 + $0x5ac] sm:$0xf]
    %v2700 = vld [vmem:[#allocation3 + $0x5b0] sm:$0xf]
    %v2701 = vld [vmem:[#allocation3 + $0x5b4] sm:$0xf]
    %v2702 = vld [vmem:[#allocation3 + $0x5b8] sm:$0xf]
    %v2703 = vld [vmem:[#allocation3 + $0x5bc] sm:$0xf]
    %v2704 = vld [vmem:[#allocation3 + $0x5c0] sm:$0xf]
    %v2705 = vld [vmem:[#allocation3 + $0x5c4] sm:$0xf]
    %v2706 = vld [vmem:[#allocation3 + $0x5c8] sm:$0xf]
    %v2707 = vld [vmem:[#allocation3 + $0x5cc] sm:$0xf]
    %v2708 = vld [vmem:[#allocation3 + $0x5d0] sm:$0xf]
    %v2709 = vld [vmem:[#allocation3 + $0x5d4] sm:$0xf]
    %v2710 = vld [vmem:[#allocation3 + $0x5d8] sm:$0xf]
    %v2711 = vld [vmem:[#allocation3 + $0x5dc] sm:$0xf]
    %v2712 = vld [vmem:[#allocation3 + $0x5e0] sm:$0xf]
    %v2713 = vld [vmem:[#allocation3 + $0x5e4] sm:$0xf]
    %v2714 = vld [vmem:[#allocation3 + $0x5e8] sm:$0xf]
    %v2715 = vld [vmem:[#allocation3 + $0x5ec] sm:$0xf]
    %v2716 = vld [vmem:[#allocation3 + $0x5f0] sm:$0xf]
    %v2717 = vld [vmem:[#allocation3 + $0x5f4] sm:$0xf]
    %v2718 = vld [vmem:[#allocation3 + $0x5f8] sm:$0xf]
    %v2719 = vld [vmem:[#allocation3 + $0x5fc] sm:$0xf]
    %v2848 = vunpack.c.l.b16 %v2592
    %v2849 = vunpack.c.l.b16 %v2593
    %v2850 = vunpack.c.l.b16 %v2594
    %v2851 = vunpack.c.l.b16 %v2595
    %v2852 = vunpack.c.l.b16 %v2596
    %v2853 = vunpack.c.l.b16 %v2597
    %v2854 = vunpack.c.l.b16 %v2598
    %v2855 = vunpack.c.l.b16 %v2599
    %v2856 = vunpack.c.l.b16 %v2600
    %v2857 = vunpack.c.l.b16 %v2601
    %v2858 = vunpack.c.l.b16 %v2602
    %v2859 = vunpack.c.l.b16 %v2603
    %v2860 = vunpack.c.l.b16 %v2604
    %v2861 = vunpack.c.l.b16 %v2605
    %v2862 = vunpack.c.l.b16 %v2606
    %v2863 = vunpack.c.l.b16 %v2607
    %v2864 = vunpack.c.l.b16 %v2608
    %v2865 = vunpack.c.l.b16 %v2609
    %v2866 = vunpack.c.l.b16 %v2610
    %v2867 = vunpack.c.l.b16 %v2611
    %v2868 = vunpack.c.l.b16 %v2612
    %v2869 = vunpack.c.l.b16 %v2613
    %v2870 = vunpack.c.l.b16 %v2614
    %v2871 = vunpack.c.l.b16 %v2615
    %v2872 = vunpack.c.l.b16 %v2616
    %v2873 = vunpack.c.l.b16 %v2617
    %v2874 = vunpack.c.l.b16 %v2618
    %v2875 = vunpack.c.l.b16 %v2619
    %v2876 = vunpack.c.l.b16 %v2620
    %v2877 = vunpack.c.l.b16 %v2621
    %v2878 = vunpack.c.l.b16 %v2622
    %v2879 = vunpack.c.l.b16 %v2623
    %v2880 = vunpack.c.l.b16 %v2624
    %v2881 = vunpack.c.l.b16 %v2625
    %v2882 = vunpack.c.l.b16 %v2626
    %v2883 = vunpack.c.l.b16 %v2627
    %v2884 = vunpack.c.l.b16 %v2628
    %v2885 = vunpack.c.l.b16 %v2629
    %v2886 = vunpack.c.l.b16 %v2630
    %v2887 = vunpack.c.l.b16 %v2631
    %v2888 = vunpack.c.l.b16 %v2632
    %v2889 = vunpack.c.l.b16 %v2633
    %v2890 = vunpack.c.l.b16 %v2634
    %v2891 = vunpack.c.l.b16 %v2635
    %v2892 = vunpack.c.l.b16 %v2636
    %v2893 = vunpack.c.l.b16 %v2637
    %v2894 = vunpack.c.l.b16 %v2638
    %v2895 = vunpack.c.l.b16 %v2639
    %v2896 = vunpack.c.l.b16 %v2640
    %v2897 = vunpack.c.l.b16 %v2641
    %v2898 = vunpack.c.l.b16 %v2642
    %v2899 = vunpack.c.l.b16 %v2643
    %v2900 = vunpack.c.l.b16 %v2644
    %v2901 = vunpack.c.l.b16 %v2645
    %v2902 = vunpack.c.l.b16 %v2646
    %v2903 = vunpack.c.l.b16 %v2647
    %v2904 = vunpack.c.l.b16 %v2648
    %v2905 = vunpack.c.l.b16 %v2649
    %v2906 = vunpack.c.l.b16 %v2650
    %v2907 = vunpack.c.l.b16 %v2651
    %v2908 = vunpack.c.l.b16 %v2652
    %v2909 = vunpack.c.l.b16 %v2653
    %v2910 = vunpack.c.l.b16 %v2654
    %v2911 = vunpack.c.l.b16 %v2655
    %v2912 = vunpack.c.l.b16 %v2656
    %v2913 = vunpack.c.l.b16 %v2657
    %v2914 = vunpack.c.l.b16 %v2658
    %v2915 = vunpack.c.l.b16 %v2659
    %v2916 = vunpack.c.l.b16 %v2660
    %v2917 = vunpack.c.l.b16 %v2661
    %v2918 = vunpack.c.l.b16 %v2662
    %v2919 = vunpack.c.l.b16 %v2663
    %v2920 = vunpack.c.l.b16 %v2664
    %v2921 = vunpack.c.l.b16 %v2665
    %v2922 = vunpack.c.l.b16 %v2666
    %v2923 = vunpack.c.l.b16 %v2667
    %v2924 = vunpack.c.l.b16 %v2668
    %v2925 = vunpack.c.l.b16 %v2669
    %v2926 = vunpack.c.l.b16 %v2670
    %v2927 = vunpack.c.l.b16 %v2671
    %v2928 = vunpack.c.l.b16 %v2672
    %v2929 = vunpack.c.l.b16 %v2673
    %v2930 = vunpack.c.l.b16 %v2674
    %v2931 = vunpack.c.l.b16 %v2675
    %v2932 = vunpack.c.l.b16 %v2676
    %v2933 = vunpack.c.l.b16 %v2677
    %v2934 = vunpack.c.l.b16 %v2678
    %v2935 = vunpack.c.l.b16 %v2679
    %v2936 = vunpack.c.l.b16 %v2680
    %v2937 = vunpack.c.l.b16 %v2681
    %v2938 = vunpack.c.l.b16 %v2682
    %v2939 = vunpack.c.l.b16 %v2683
    %v2940 = vunpack.c.l.b16 %v2684
    %v2941 = vunpack.c.l.b16 %v2685
    %v2942 = vunpack.c.l.b16 %v2686
    %v2943 = vunpack.c.l.b16 %v2687
    %v2944 = vunpack.c.l.b16 %v2688
    %v2945 = vunpack.c.l.b16 %v2689
    %v2946 = vunpack.c.l.b16 %v2690
    %v2947 = vunpack.c.l.b16 %v2691
    %v2948 = vunpack.c.l.b16 %v2692
    %v2949 = vunpack.c.l.b16 %v2693
    %v2950 = vunpack.c.l.b16 %v2694
    %v2951 = vunpack.c.l.b16 %v2695
    %v2952 = vunpack.c.l.b16 %v2696
    %v2953 = vunpack.c.l.b16 %v2697
    %v2954 = vunpack.c.l.b16 %v2698
    %v2955 = vunpack.c.l.b16 %v2699
    %v2956 = vunpack.c.l.b16 %v2700
    %v2957 = vunpack.c.l.b16 %v2701
    %v2958 = vunpack.c.l.b16 %v2702
    %v2959 = vunpack.c.l.b16 %v2703
    %v2960 = vunpack.c.l.b16 %v2704
    %v2961 = vunpack.c.l.b16 %v2705
    %v2962 = vunpack.c.l.b16 %v2706
    %v2963 = vunpack.c.l.b16 %v2707
    %v2964 = vunpack.c.l.b16 %v2708
    %v2965 = vunpack.c.l.b16 %v2709
    %v2966 = vunpack.c.l.b16 %v2710
    %v2967 = vunpack.c.l.b16 %v2711
    %v2968 = vunpack.c.l.b16 %v2712
    %v2969 = vunpack.c.l.b16 %v2713
    %v2970 = vunpack.c.l.b16 %v2714
    %v2971 = vunpack.c.l.b16 %v2715
    %v2972 = vunpack.c.l.b16 %v2716
    %v2973 = vunpack.c.l.b16 %v2717
    %v2974 = vunpack.c.l.b16 %v2718
    %v2975 = vunpack.c.l.b16 %v2719
    %v2976 = vpack.c.b16 %v2849, %v2848
    %v2977 = vpack.c.b16 %v2851, %v2850
    %v2978 = vpack.c.b16 %v2853, %v2852
    %v2979 = vpack.c.b16 %v2855, %v2854
    %v2980 = vpack.c.b16 %v2857, %v2856
    %v2981 = vpack.c.b16 %v2859, %v2858
    %v2982 = vpack.c.b16 %v2861, %v2860
    %v2983 = vpack.c.b16 %v2863, %v2862
    %v2984 = vpack.c.b16 %v2865, %v2864
    %v2985 = vpack.c.b16 %v2867, %v2866
    %v2986 = vpack.c.b16 %v2869, %v2868
    %v2987 = vpack.c.b16 %v2871, %v2870
    %v2988 = vpack.c.b16 %v2873, %v2872
    %v2989 = vpack.c.b16 %v2875, %v2874
    %v2990 = vpack.c.b16 %v2877, %v2876
    %v2991 = vpack.c.b16 %v2879, %v2878
    %v2992 = vpack.c.b16 %v2881, %v2880
    %v2993 = vpack.c.b16 %v2883, %v2882
    %v2994 = vpack.c.b16 %v2885, %v2884
    %v2995 = vpack.c.b16 %v2887, %v2886
    %v2996 = vpack.c.b16 %v2889, %v2888
    %v2997 = vpack.c.b16 %v2891, %v2890
    %v2998 = vpack.c.b16 %v2893, %v2892
    %v2999 = vpack.c.b16 %v2895, %v2894
    %v3000 = vpack.c.b16 %v2897, %v2896
    %v3001 = vpack.c.b16 %v2899, %v2898
    %v3002 = vpack.c.b16 %v2901, %v2900
    %v3003 = vpack.c.b16 %v2903, %v2902
    %v3004 = vpack.c.b16 %v2905, %v2904
    %v3005 = vpack.c.b16 %v2907, %v2906
    %v3006 = vpack.c.b16 %v2909, %v2908
    %v3007 = vpack.c.b16 %v2911, %v2910
    %v3008 = vpack.c.b16 %v2913, %v2912
    %v3009 = vpack.c.b16 %v2915, %v2914
    %v3010 = vpack.c.b16 %v2917, %v2916
    %v3011 = vpack.c.b16 %v2919, %v2918
    %v3012 = vpack.c.b16 %v2921, %v2920
    %v3013 = vpack.c.b16 %v2923, %v2922
    %v3014 = vpack.c.b16 %v2925, %v2924
    %v3015 = vpack.c.b16 %v2927, %v2926
    %v3016 = vpack.c.b16 %v2929, %v2928
    %v3017 = vpack.c.b16 %v2931, %v2930
    %v3018 = vpack.c.b16 %v2933, %v2932
    %v3019 = vpack.c.b16 %v2935, %v2934
    %v3020 = vpack.c.b16 %v2937, %v2936
    %v3021 = vpack.c.b16 %v2939, %v2938
    %v3022 = vpack.c.b16 %v2941, %v2940
    %v3023 = vpack.c.b16 %v2943, %v2942
    %v3024 = vpack.c.b16 %v2945, %v2944
    %v3025 = vpack.c.b16 %v2947, %v2946
    %v3026 = vpack.c.b16 %v2949, %v2948
    %v3027 = vpack.c.b16 %v2951, %v2950
    %v3028 = vpack.c.b16 %v2953, %v2952
    %v3029 = vpack.c.b16 %v2955, %v2954
    %v3030 = vpack.c.b16 %v2957, %v2956
    %v3031 = vpack.c.b16 %v2959, %v2958
    %v3032 = vpack.c.b16 %v2961, %v2960
    %v3033 = vpack.c.b16 %v2963, %v2962
    %v3034 = vpack.c.b16 %v2965, %v2964
    %v3035 = vpack.c.b16 %v2967, %v2966
    %v3036 = vpack.c.b16 %v2969, %v2968
    %v3037 = vpack.c.b16 %v2971, %v2970
    %v3038 = vpack.c.b16 %v2973, %v2972
    %v3039 = vpack.c.b16 %v2975, %v2974
    %3104 = vmatprep.subr.bf16.mxu0 0
    %3105 = vmatpush1.bf16.msra.mxu0 %v2983
    %3106 = vmatprep.subr.bf16.mxu0 0
    %3107 = vmatpush1.bf16.msra.mxu0 %v2982
    %3108 = vmatprep.subr.bf16.mxu0 0
    %3109 = vmatpush1.bf16.msra.mxu0 %v2981
    %3110 = vmatprep.subr.bf16.mxu0 0
    %3111 = vmatpush1.bf16.msra.mxu0 %v2980
    %3112 = vmatprep.subr.bf16.mxu0 0
    %3113 = vmatpush1.bf16.msra.mxu0 %v2979
    %3114 = vmatprep.subr.bf16.mxu0 0
    %3115 = vmatpush1.bf16.msra.mxu0 %v2978
    %3116 = vmatprep.subr.bf16.mxu0 0
    %3117 = vmatpush1.bf16.msra.mxu0 %v2977
    %3118 = vmatprep.subr.bf16.mxu0 0
    %3119 = vmatpush1.bf16.msra.mxu0 %v2976
    %3120 = vmatprep.subr.bf16.mxu0 0
    %3121 = vmatpush2.bf16.msra.mxu0 %v2991
    %3122 = vmatprep.subr.bf16.mxu0 0
    %3123 = vmatpush2.bf16.msra.mxu0 %v2990
    %3124 = vmatprep.subr.bf16.mxu0 0
    %3125 = vmatpush2.bf16.msra.mxu0 %v2989
    %3126 = vmatprep.subr.bf16.mxu0 0
    %3127 = vmatpush2.bf16.msra.mxu0 %v2988
    %3128 = vmatprep.subr.bf16.mxu0 0
    %3129 = vmatpush2.bf16.msra.mxu0 %v2987
    %3130 = vmatprep.subr.bf16.mxu0 0
    %3131 = vmatpush2.bf16.msra.mxu0 %v2986
    %3132 = vmatprep.subr.bf16.mxu0 0
    %3133 = vmatpush2.bf16.msra.mxu0 %v2985
    %3134 = vmatprep.subr.bf16.mxu0 0
    %3135 = vmatpush2.bf16.msra.mxu0 %v2984
    %3136 = vmatprep.mubr.bf16.mxu0 %v2585
    %3137 = vmatmul.mubr.bf16.gmra.mxu0 %v2584
    %v3138 = vpop.f32.mrf.mxu0
    %v3139 = vadd.f32 0.0, %v3138
    %v3140 = vpop.f32.mrf.mxu0
    %v3141 = vpop.f32.mrf.mxu0
    %v3142 = vpop.f32.mrf.mxu0
    %3143 = vdwg.mxu0
    %3144 = vmatprep.subr.bf16.mxu0 0
    %3145 = vmatpush1.bf16.msra.mxu0 %v2999
    %3146 = vmatprep.subr.bf16.mxu0 0
    %3147 = vmatpush1.bf16.msra.mxu0 %v2998
    %3148 = vmatprep.subr.bf16.mxu0 0
    %3149 = vmatpush1.bf16.msra.mxu0 %v2997
    %3150 = vmatprep.subr.bf16.mxu0 0
    %3151 = vmatpush1.bf16.msra.mxu0 %v2996
    %3152 = vmatprep.subr.bf16.mxu0 0
    %3153 = vmatpush1.bf16.msra.mxu0 %v2995
    %3154 = vmatprep.subr.bf16.mxu0 0
    %3155 = vmatpush1.bf16.msra.mxu0 %v2994
    %3156 = vmatprep.subr.bf16.mxu0 0
    %3157 = vmatpush1.bf16.msra.mxu0 %v2993
    %3158 = vmatprep.subr.bf16.mxu0 0
    %3159 = vmatpush1.bf16.msra.mxu0 %v2992
    %3160 = vmatprep.subr.bf16.mxu0 0
    %3161 = vmatpush2.bf16.msra.mxu0 %v3007
    %3162 = vmatprep.subr.bf16.mxu0 0
    %3163 = vmatpush2.bf16.msra.mxu0 %v3006
    %3164 = vmatprep.subr.bf16.mxu0 0
    %3165 = vmatpush2.bf16.msra.mxu0 %v3005
    %3166 = vmatprep.subr.bf16.mxu0 0
    %3167 = vmatpush2.bf16.msra.mxu0 %v3004
    %3168 = vmatprep.subr.bf16.mxu0 0
    %3169 = vmatpush2.bf16.msra.mxu0 %v3003
    %3170 = vmatprep.subr.bf16.mxu0 0
    %3171 = vmatpush2.bf16.msra.mxu0 %v3002
    %3172 = vmatprep.subr.bf16.mxu0 0
    %3173 = vmatpush2.bf16.msra.mxu0 %v3001
    %3174 = vmatprep.subr.bf16.mxu0 0
    %3175 = vmatpush2.bf16.msra.mxu0 %v3000
    %3176 = vmatprep.mubr.bf16.mxu0 %v2587
    %3177 = vmatmul.mubr.bf16.gmra.mxu0 %v2586
    %v3178 = vpop.f32.mrf.mxu0
    %v3179 = vadd.f32 %v3139, %v3178
    %v3180 = vpop.f32.mrf.mxu0
    %v3181 = vpop.f32.mrf.mxu0
    %v3182 = vpop.f32.mrf.mxu0
    %3183 = vdwg.mxu0
    %3184 = vmatprep.subr.bf16.mxu0 0
    %3185 = vmatpush1.bf16.msra.mxu0 %v3015
    %3186 = vmatprep.subr.bf16.mxu0 0
    %3187 = vmatpush1.bf16.msra.mxu0 %v3014
    %3188 = vmatprep.subr.bf16.mxu0 0
    %3189 = vmatpush1.bf16.msra.mxu0 %v3013
    %3190 = vmatprep.subr.bf16.mxu0 0
    %3191 = vmatpush1.bf16.msra.mxu0 %v3012
    %3192 = vmatprep.subr.bf16.mxu0 0
    %3193 = vmatpush1.bf16.msra.mxu0 %v3011
    %3194 = vmatprep.subr.bf16.mxu0 0
    %3195 = vmatpush1.bf16.msra.mxu0 %v3010
    %3196 = vmatprep.subr.bf16.mxu0 0
    %3197 = vmatpush1.bf16.msra.mxu0 %v3009
    %3198 = vmatprep.subr.bf16.mxu0 0
    %3199 = vmatpush1.bf16.msra.mxu0 %v3008
    %3200 = vmatprep.subr.bf16.mxu0 0
    %3201 = vmatpush2.bf16.msra.mxu0 %v3023
    %3202 = vmatprep.subr.bf16.mxu0 0
    %3203 = vmatpush2.bf16.msra.mxu0 %v3022
    %3204 = vmatprep.subr.bf16.mxu0 0
    %3205 = vmatpush2.bf16.msra.mxu0 %v3021
    %3206 = vmatprep.subr.bf16.mxu0 0
    %3207 = vmatpush2.bf16.msra.mxu0 %v3020
    %3208 = vmatprep.subr.bf16.mxu0 0
    %3209 = vmatpush2.bf16.msra.mxu0 %v3019
    %3210 = vmatprep.subr.bf16.mxu0 0
    %3211 = vmatpush2.bf16.msra.mxu0 %v3018
    %3212 = vmatprep.subr.bf16.mxu0 0
    %3213 = vmatpush2.bf16.msra.mxu0 %v3017
    %3214 = vmatprep.subr.bf16.mxu0 0
    %3215 = vmatpush2.bf16.msra.mxu0 %v3016
    %3216 = vmatprep.mubr.bf16.mxu0 %v2589
    %3217 = vmatmul.mubr.bf16.gmra.mxu0 %v2588
    %v3218 = vpop.f32.mrf.mxu0
    %v3219 = vadd.f32 %v3179, %v3218
    %v3220 = vpop.f32.mrf.mxu0
    %v3221 = vpop.f32.mrf.mxu0
    %v3222 = vpop.f32.mrf.mxu0
    %3223 = vdwg.mxu0
    %3224 = vmatprep.subr.bf16.mxu0 0
    %3225 = vmatpush1.bf16.msra.mxu0 %v3031
    %3226 = vmatprep.subr.bf16.mxu0 0
    %3227 = vmatpush1.bf16.msra.mxu0 %v3030
    %3228 = vmatprep.subr.bf16.mxu0 0
    %3229 = vmatpush1.bf16.msra.mxu0 %v3029
    %3230 = vmatprep.subr.bf16.mxu0 0
    %3231 = vmatpush1.bf16.msra.mxu0 %v3028
    %3232 = vmatprep.subr.bf16.mxu0 0
    %3233 = vmatpush1.bf16.msra.mxu0 %v3027
    %3234 = vmatprep.subr.bf16.mxu0 0
    %3235 = vmatpush1.bf16.msra.mxu0 %v3026
    %3236 = vmatprep.subr.bf16.mxu0 0
    %3237 = vmatpush1.bf16.msra.mxu0 %v3025
    %3238 = vmatprep.subr.bf16.mxu0 0
    %3239 = vmatpush1.bf16.msra.mxu0 %v3024
    %3240 = vmatprep.subr.bf16.mxu0 0
    %3241 = vmatpush2.bf16.msra.mxu0 %v3039
    %3242 = vmatprep.subr.bf16.mxu0 0
    %3243 = vmatpush2.bf16.msra.mxu0 %v3038
    %3244 = vmatprep.subr.bf16.mxu0 0
    %3245 = vmatpush2.bf16.msra.mxu0 %v3037
    %3246 = vmatprep.subr.bf16.mxu0 0
    %3247 = vmatpush2.bf16.msra.mxu0 %v3036
    %3248 = vmatprep.subr.bf16.mxu0 0
    %3249 = vmatpush2.bf16.msra.mxu0 %v3035
    %3250 = vmatprep.subr.bf16.mxu0 0
    %3251 = vmatpush2.bf16.msra.mxu0 %v3034
    %3252 = vmatprep.subr.bf16.mxu0 0
    %3253 = vmatpush2.bf16.msra.mxu0 %v3033
    %3254 = vmatprep.subr.bf16.mxu0 0
    %3255 = vmatpush2.bf16.msra.mxu0 %v3032
    %3256 = vmatprep.mubr.bf16.mxu0 %v2591
    %3257 = vmatmul.mubr.bf16.gmra.mxu0 %v2590
    %v3258 = vpop.f32.mrf.mxu0
    %v3259 = vadd.f32 %v3219, %v3258
    %v3260 = vpop.f32.mrf.mxu0
    %v3261 = vpop.f32.mrf.mxu0
    %v3262 = vpop.f32.mrf.mxu0
    %3263 = vdwg.mxu0
    %v3264 = vadd.f32 %v2545, %v3259
    %v3266 = vrot.slane %v1099, 7
    %v3268 = vsel %vm1104, %v1098, %v3266
    %v3270 = vrot.slane %v1098, 1
    %v3272 = vsel %vm1104, %v3270, %v1099
    %v3273 = vrot.slane %v1098, 2
    %v3275 = vrot.slane %v1099, 1
    %v3277 = vsel %vm1104, %v3273, %v3275
    %v3278 = vrot.slane %v1098, 3
    %v3280 = vrot.slane %v1099, 2
    %v3282 = vsel %vm1104, %v3278, %v3280
    %v3283 = vrot.slane %v1098, 4
    %v3285 = vrot.slane %v1099, 3
    %v3287 = vsel %vm1104, %v3283, %v3285
    %v3288 = vrot.slane %v1098, 5
    %v3290 = vrot.slane %v1099, 4
    %v3292 = vsel %vm1104, %v3288, %v3290
    %v3293 = vrot.slane %v1098, 6
    %v3295 = vrot.slane %v1099, 5
    %v3297 = vsel %vm1104, %v3293, %v3295
    %v3298 = vrot.slane %v1098, 7
    %v3300 = vrot.slane %v1099, 6
    %v3302 = vsel %vm1104, %v3298, %v3300
    %v3303 = vpack.c.bf16 %v3268, %v3268
    %v3304 = vpack.c.bf16 %v3272, %v3272
    %v3305 = vpack.c.bf16 %v3277, %v3277
    %v3306 = vpack.c.bf16 %v3282, %v3282
    %v3307 = vpack.c.bf16 %v3287, %v3287
    %v3308 = vpack.c.bf16 %v3292, %v3292
    %v3309 = vpack.c.bf16 %v3297, %v3297
    %v3310 = vpack.c.bf16 %v3302, %v3302
    %v3311 = vld [vmem:[#allocation3 + $0x600] sm:$0xf]
    %v3312 = vld [vmem:[#allocation3 + $0x604] sm:$0xf]
    %v3313 = vld [vmem:[#allocation3 + $0x608] sm:$0xf]
    %v3314 = vld [vmem:[#allocation3 + $0x60c] sm:$0xf]
    %v3315 = vld [vmem:[#allocation3 + $0x610] sm:$0xf]
    %v3316 = vld [vmem:[#allocation3 + $0x614] sm:$0xf]
    %v3317 = vld [vmem:[#allocation3 + $0x618] sm:$0xf]
    %v3318 = vld [vmem:[#allocation3 + $0x61c] sm:$0xf]
    %v3319 = vld [vmem:[#allocation3 + $0x620] sm:$0xf]
    %v3320 = vld [vmem:[#allocation3 + $0x624] sm:$0xf]
    %v3321 = vld [vmem:[#allocation3 + $0x628] sm:$0xf]
    %v3322 = vld [vmem:[#allocation3 + $0x62c] sm:$0xf]
    %v3323 = vld [vmem:[#allocation3 + $0x630] sm:$0xf]
    %v3324 = vld [vmem:[#allocation3 + $0x634] sm:$0xf]
    %v3325 = vld [vmem:[#allocation3 + $0x638] sm:$0xf]
    %v3326 = vld [vmem:[#allocation3 + $0x63c] sm:$0xf]
    %v3327 = vld [vmem:[#allocation3 + $0x640] sm:$0xf]
    %v3328 = vld [vmem:[#allocation3 + $0x644] sm:$0xf]
    %v3329 = vld [vmem:[#allocation3 + $0x648] sm:$0xf]
    %v3330 = vld [vmem:[#allocation3 + $0x64c] sm:$0xf]
    %v3331 = vld [vmem:[#allocation3 + $0x650] sm:$0xf]
    %v3332 = vld [vmem:[#allocation3 + $0x654] sm:$0xf]
    %v3333 = vld [vmem:[#allocation3 + $0x658] sm:$0xf]
    %v3334 = vld [vmem:[#allocation3 + $0x65c] sm:$0xf]
    %v3335 = vld [vmem:[#allocation3 + $0x660] sm:$0xf]
    %v3336 = vld [vmem:[#allocation3 + $0x664] sm:$0xf]
    %v3337 = vld [vmem:[#allocation3 + $0x668] sm:$0xf]
    %v3338 = vld [vmem:[#allocation3 + $0x66c] sm:$0xf]
    %v3339 = vld [vmem:[#allocation3 + $0x670] sm:$0xf]
    %v3340 = vld [vmem:[#allocation3 + $0x674] sm:$0xf]
    %v3341 = vld [vmem:[#allocation3 + $0x678] sm:$0xf]
    %v3342 = vld [vmem:[#allocation3 + $0x67c] sm:$0xf]
    %v3343 = vld [vmem:[#allocation3 + $0x680] sm:$0xf]
    %v3344 = vld [vmem:[#allocation3 + $0x684] sm:$0xf]
    %v3345 = vld [vmem:[#allocation3 + $0x688] sm:$0xf]
    %v3346 = vld [vmem:[#allocation3 + $0x68c] sm:$0xf]
    %v3347 = vld [vmem:[#allocation3 + $0x690] sm:$0xf]
    %v3348 = vld [vmem:[#allocation3 + $0x694] sm:$0xf]
    %v3349 = vld [vmem:[#allocation3 + $0x698] sm:$0xf]
    %v3350 = vld [vmem:[#allocation3 + $0x69c] sm:$0xf]
    %v3351 = vld [vmem:[#allocation3 + $0x6a0] sm:$0xf]
    %v3352 = vld [vmem:[#allocation3 + $0x6a4] sm:$0xf]
    %v3353 = vld [vmem:[#allocation3 + $0x6a8] sm:$0xf]
    %v3354 = vld [vmem:[#allocation3 + $0x6ac] sm:$0xf]
    %v3355 = vld [vmem:[#allocation3 + $0x6b0] sm:$0xf]
    %v3356 = vld [vmem:[#allocation3 + $0x6b4] sm:$0xf]
    %v3357 = vld [vmem:[#allocation3 + $0x6b8] sm:$0xf]
    %v3358 = vld [vmem:[#allocation3 + $0x6bc] sm:$0xf]
    %v3359 = vld [vmem:[#allocation3 + $0x6c0] sm:$0xf]
    %v3360 = vld [vmem:[#allocation3 + $0x6c4] sm:$0xf]
    %v3361 = vld [vmem:[#allocation3 + $0x6c8] sm:$0xf]
    %v3362 = vld [vmem:[#allocation3 + $0x6cc] sm:$0xf]
    %v3363 = vld [vmem:[#allocation3 + $0x6d0] sm:$0xf]
    %v3364 = vld [vmem:[#allocation3 + $0x6d4] sm:$0xf]
    %v3365 = vld [vmem:[#allocation3 + $0x6d8] sm:$0xf]
    %v3366 = vld [vmem:[#allocation3 + $0x6dc] sm:$0xf]
    %v3367 = vld [vmem:[#allocation3 + $0x6e0] sm:$0xf]
    %v3368 = vld [vmem:[#allocation3 + $0x6e4] sm:$0xf]
    %v3369 = vld [vmem:[#allocation3 + $0x6e8] sm:$0xf]
    %v3370 = vld [vmem:[#allocation3 + $0x6ec] sm:$0xf]
    %v3371 = vld [vmem:[#allocation3 + $0x6f0] sm:$0xf]
    %v3372 = vld [vmem:[#allocation3 + $0x6f4] sm:$0xf]
    %v3373 = vld [vmem:[#allocation3 + $0x6f8] sm:$0xf]
    %v3374 = vld [vmem:[#allocation3 + $0x6fc] sm:$0xf]
    %v3375 = vld [vmem:[#allocation3 + $0x700] sm:$0xf]
    %v3376 = vld [vmem:[#allocation3 + $0x704] sm:$0xf]
    %v3377 = vld [vmem:[#allocation3 + $0x708] sm:$0xf]
    %v3378 = vld [vmem:[#allocation3 + $0x70c] sm:$0xf]
    %v3379 = vld [vmem:[#allocation3 + $0x710] sm:$0xf]
    %v3380 = vld [vmem:[#allocation3 + $0x714] sm:$0xf]
    %v3381 = vld [vmem:[#allocation3 + $0x718] sm:$0xf]
    %v3382 = vld [vmem:[#allocation3 + $0x71c] sm:$0xf]
    %v3383 = vld [vmem:[#allocation3 + $0x720] sm:$0xf]
    %v3384 = vld [vmem:[#allocation3 + $0x724] sm:$0xf]
    %v3385 = vld [vmem:[#allocation3 + $0x728] sm:$0xf]
    %v3386 = vld [vmem:[#allocation3 + $0x72c] sm:$0xf]
    %v3387 = vld [vmem:[#allocation3 + $0x730] sm:$0xf]
    %v3388 = vld [vmem:[#allocation3 + $0x734] sm:$0xf]
    %v3389 = vld [vmem:[#allocation3 + $0x738] sm:$0xf]
    %v3390 = vld [vmem:[#allocation3 + $0x73c] sm:$0xf]
    %v3391 = vld [vmem:[#allocation3 + $0x740] sm:$0xf]
    %v3392 = vld [vmem:[#allocation3 + $0x744] sm:$0xf]
    %v3393 = vld [vmem:[#allocation3 + $0x748] sm:$0xf]
    %v3394 = vld [vmem:[#allocation3 + $0x74c] sm:$0xf]
    %v3395 = vld [vmem:[#allocation3 + $0x750] sm:$0xf]
    %v3396 = vld [vmem:[#allocation3 + $0x754] sm:$0xf]
    %v3397 = vld [vmem:[#allocation3 + $0x758] sm:$0xf]
    %v3398 = vld [vmem:[#allocation3 + $0x75c] sm:$0xf]
    %v3399 = vld [vmem:[#allocation3 + $0x760] sm:$0xf]
    %v3400 = vld [vmem:[#allocation3 + $0x764] sm:$0xf]
    %v3401 = vld [vmem:[#allocation3 + $0x768] sm:$0xf]
    %v3402 = vld [vmem:[#allocation3 + $0x76c] sm:$0xf]
    %v3403 = vld [vmem:[#allocation3 + $0x770] sm:$0xf]
    %v3404 = vld [vmem:[#allocation3 + $0x774] sm:$0xf]
    %v3405 = vld [vmem:[#allocation3 + $0x778] sm:$0xf]
    %v3406 = vld [vmem:[#allocation3 + $0x77c] sm:$0xf]
    %v3407 = vld [vmem:[#allocation3 + $0x780] sm:$0xf]
    %v3408 = vld [vmem:[#allocation3 + $0x784] sm:$0xf]
    %v3409 = vld [vmem:[#allocation3 + $0x788] sm:$0xf]
    %v3410 = vld [vmem:[#allocation3 + $0x78c] sm:$0xf]
    %v3411 = vld [vmem:[#allocation3 + $0x790] sm:$0xf]
    %v3412 = vld [vmem:[#allocation3 + $0x794] sm:$0xf]
    %v3413 = vld [vmem:[#allocation3 + $0x798] sm:$0xf]
    %v3414 = vld [vmem:[#allocation3 + $0x79c] sm:$0xf]
    %v3415 = vld [vmem:[#allocation3 + $0x7a0] sm:$0xf]
    %v3416 = vld [vmem:[#allocation3 + $0x7a4] sm:$0xf]
    %v3417 = vld [vmem:[#allocation3 + $0x7a8] sm:$0xf]
    %v3418 = vld [vmem:[#allocation3 + $0x7ac] sm:$0xf]
    %v3419 = vld [vmem:[#allocation3 + $0x7b0] sm:$0xf]
    %v3420 = vld [vmem:[#allocation3 + $0x7b4] sm:$0xf]
    %v3421 = vld [vmem:[#allocation3 + $0x7b8] sm:$0xf]
    %v3422 = vld [vmem:[#allocation3 + $0x7bc] sm:$0xf]
    %v3423 = vld [vmem:[#allocation3 + $0x7c0] sm:$0xf]
    %v3424 = vld [vmem:[#allocation3 + $0x7c4] sm:$0xf]
    %v3425 = vld [vmem:[#allocation3 + $0x7c8] sm:$0xf]
    %v3426 = vld [vmem:[#allocation3 + $0x7cc] sm:$0xf]
    %v3427 = vld [vmem:[#allocation3 + $0x7d0] sm:$0xf]
    %v3428 = vld [vmem:[#allocation3 + $0x7d4] sm:$0xf]
    %v3429 = vld [vmem:[#allocation3 + $0x7d8] sm:$0xf]
    %v3430 = vld [vmem:[#allocation3 + $0x7dc] sm:$0xf]
    %v3431 = vld [vmem:[#allocation3 + $0x7e0] sm:$0xf]
    %v3432 = vld [vmem:[#allocation3 + $0x7e4] sm:$0xf]
    %v3433 = vld [vmem:[#allocation3 + $0x7e8] sm:$0xf]
    %v3434 = vld [vmem:[#allocation3 + $0x7ec] sm:$0xf]
    %v3435 = vld [vmem:[#allocation3 + $0x7f0] sm:$0xf]
    %v3436 = vld [vmem:[#allocation3 + $0x7f4] sm:$0xf]
    %v3437 = vld [vmem:[#allocation3 + $0x7f8] sm:$0xf]
    %v3438 = vld [vmem:[#allocation3 + $0x7fc] sm:$0xf]
    %v3567 = vunpack.c.l.b16 %v3311
    %v3568 = vunpack.c.l.b16 %v3312
    %v3569 = vunpack.c.l.b16 %v3313
    %v3570 = vunpack.c.l.b16 %v3314
    %v3571 = vunpack.c.l.b16 %v3315
    %v3572 = vunpack.c.l.b16 %v3316
    %v3573 = vunpack.c.l.b16 %v3317
    %v3574 = vunpack.c.l.b16 %v3318
    %v3575 = vunpack.c.l.b16 %v3319
    %v3576 = vunpack.c.l.b16 %v3320
    %v3577 = vunpack.c.l.b16 %v3321
    %v3578 = vunpack.c.l.b16 %v3322
    %v3579 = vunpack.c.l.b16 %v3323
    %v3580 = vunpack.c.l.b16 %v3324
    %v3581 = vunpack.c.l.b16 %v3325
    %v3582 = vunpack.c.l.b16 %v3326
    %v3583 = vunpack.c.l.b16 %v3327
    %v3584 = vunpack.c.l.b16 %v3328
    %v3585 = vunpack.c.l.b16 %v3329
    %v3586 = vunpack.c.l.b16 %v3330
    %v3587 = vunpack.c.l.b16 %v3331
    %v3588 = vunpack.c.l.b16 %v3332
    %v3589 = vunpack.c.l.b16 %v3333
    %v3590 = vunpack.c.l.b16 %v3334
    %v3591 = vunpack.c.l.b16 %v3335
    %v3592 = vunpack.c.l.b16 %v3336
    %v3593 = vunpack.c.l.b16 %v3337
    %v3594 = vunpack.c.l.b16 %v3338
    %v3595 = vunpack.c.l.b16 %v3339
    %v3596 = vunpack.c.l.b16 %v3340
    %v3597 = vunpack.c.l.b16 %v3341
    %v3598 = vunpack.c.l.b16 %v3342
    %v3599 = vunpack.c.l.b16 %v3343
    %v3600 = vunpack.c.l.b16 %v3344
    %v3601 = vunpack.c.l.b16 %v3345
    %v3602 = vunpack.c.l.b16 %v3346
    %v3603 = vunpack.c.l.b16 %v3347
    %v3604 = vunpack.c.l.b16 %v3348
    %v3605 = vunpack.c.l.b16 %v3349
    %v3606 = vunpack.c.l.b16 %v3350
    %v3607 = vunpack.c.l.b16 %v3351
    %v3608 = vunpack.c.l.b16 %v3352
    %v3609 = vunpack.c.l.b16 %v3353
    %v3610 = vunpack.c.l.b16 %v3354
    %v3611 = vunpack.c.l.b16 %v3355
    %v3612 = vunpack.c.l.b16 %v3356
    %v3613 = vunpack.c.l.b16 %v3357
    %v3614 = vunpack.c.l.b16 %v3358
    %v3615 = vunpack.c.l.b16 %v3359
    %v3616 = vunpack.c.l.b16 %v3360
    %v3617 = vunpack.c.l.b16 %v3361
    %v3618 = vunpack.c.l.b16 %v3362
    %v3619 = vunpack.c.l.b16 %v3363
    %v3620 = vunpack.c.l.b16 %v3364
    %v3621 = vunpack.c.l.b16 %v3365
    %v3622 = vunpack.c.l.b16 %v3366
    %v3623 = vunpack.c.l.b16 %v3367
    %v3624 = vunpack.c.l.b16 %v3368
    %v3625 = vunpack.c.l.b16 %v3369
    %v3626 = vunpack.c.l.b16 %v3370
    %v3627 = vunpack.c.l.b16 %v3371
    %v3628 = vunpack.c.l.b16 %v3372
    %v3629 = vunpack.c.l.b16 %v3373
    %v3630 = vunpack.c.l.b16 %v3374
    %v3631 = vunpack.c.l.b16 %v3375
    %v3632 = vunpack.c.l.b16 %v3376
    %v3633 = vunpack.c.l.b16 %v3377
    %v3634 = vunpack.c.l.b16 %v3378
    %v3635 = vunpack.c.l.b16 %v3379
    %v3636 = vunpack.c.l.b16 %v3380
    %v3637 = vunpack.c.l.b16 %v3381
    %v3638 = vunpack.c.l.b16 %v3382
    %v3639 = vunpack.c.l.b16 %v3383
    %v3640 = vunpack.c.l.b16 %v3384
    %v3641 = vunpack.c.l.b16 %v3385
    %v3642 = vunpack.c.l.b16 %v3386
    %v3643 = vunpack.c.l.b16 %v3387
    %v3644 = vunpack.c.l.b16 %v3388
    %v3645 = vunpack.c.l.b16 %v3389
    %v3646 = vunpack.c.l.b16 %v3390
    %v3647 = vunpack.c.l.b16 %v3391
    %v3648 = vunpack.c.l.b16 %v3392
    %v3649 = vunpack.c.l.b16 %v3393
    %v3650 = vunpack.c.l.b16 %v3394
    %v3651 = vunpack.c.l.b16 %v3395
    %v3652 = vunpack.c.l.b16 %v3396
    %v3653 = vunpack.c.l.b16 %v3397
    %v3654 = vunpack.c.l.b16 %v3398
    %v3655 = vunpack.c.l.b16 %v3399
    %v3656 = vunpack.c.l.b16 %v3400
    %v3657 = vunpack.c.l.b16 %v3401
    %v3658 = vunpack.c.l.b16 %v3402
    %v3659 = vunpack.c.l.b16 %v3403
    %v3660 = vunpack.c.l.b16 %v3404
    %v3661 = vunpack.c.l.b16 %v3405
    %v3662 = vunpack.c.l.b16 %v3406
    %v3663 = vunpack.c.l.b16 %v3407
    %v3664 = vunpack.c.l.b16 %v3408
    %v3665 = vunpack.c.l.b16 %v3409
    %v3666 = vunpack.c.l.b16 %v3410
    %v3667 = vunpack.c.l.b16 %v3411
    %v3668 = vunpack.c.l.b16 %v3412
    %v3669 = vunpack.c.l.b16 %v3413
    %v3670 = vunpack.c.l.b16 %v3414
    %v3671 = vunpack.c.l.b16 %v3415
    %v3672 = vunpack.c.l.b16 %v3416
    %v3673 = vunpack.c.l.b16 %v3417
    %v3674 = vunpack.c.l.b16 %v3418
    %v3675 = vunpack.c.l.b16 %v3419
    %v3676 = vunpack.c.l.b16 %v3420
    %v3677 = vunpack.c.l.b16 %v3421
    %v3678 = vunpack.c.l.b16 %v3422
    %v3679 = vunpack.c.l.b16 %v3423
    %v3680 = vunpack.c.l.b16 %v3424
    %v3681 = vunpack.c.l.b16 %v3425
    %v3682 = vunpack.c.l.b16 %v3426
    %v3683 = vunpack.c.l.b16 %v3427
    %v3684 = vunpack.c.l.b16 %v3428
    %v3685 = vunpack.c.l.b16 %v3429
    %v3686 = vunpack.c.l.b16 %v3430
    %v3687 = vunpack.c.l.b16 %v3431
    %v3688 = vunpack.c.l.b16 %v3432
    %v3689 = vunpack.c.l.b16 %v3433
    %v3690 = vunpack.c.l.b16 %v3434
    %v3691 = vunpack.c.l.b16 %v3435
    %v3692 = vunpack.c.l.b16 %v3436
    %v3693 = vunpack.c.l.b16 %v3437
    %v3694 = vunpack.c.l.b16 %v3438
    %v3695 = vpack.c.b16 %v3568, %v3567
    %v3696 = vpack.c.b16 %v3570, %v3569
    %v3697 = vpack.c.b16 %v3572, %v3571
    %v3698 = vpack.c.b16 %v3574, %v3573
    %v3699 = vpack.c.b16 %v3576, %v3575
    %v3700 = vpack.c.b16 %v3578, %v3577
    %v3701 = vpack.c.b16 %v3580, %v3579
    %v3702 = vpack.c.b16 %v3582, %v3581
    %v3703 = vpack.c.b16 %v3584, %v3583
    %v3704 = vpack.c.b16 %v3586, %v3585
    %v3705 = vpack.c.b16 %v3588, %v3587
    %v3706 = vpack.c.b16 %v3590, %v3589
    %v3707 = vpack.c.b16 %v3592, %v3591
    %v3708 = vpack.c.b16 %v3594, %v3593
    %v3709 = vpack.c.b16 %v3596, %v3595
    %v3710 = vpack.c.b16 %v3598, %v3597
    %v3711 = vpack.c.b16 %v3600, %v3599
    %v3712 = vpack.c.b16 %v3602, %v3601
    %v3713 = vpack.c.b16 %v3604, %v3603
    %v3714 = vpack.c.b16 %v3606, %v3605
    %v3715 = vpack.c.b16 %v3608, %v3607
    %v3716 = vpack.c.b16 %v3610, %v3609
    %v3717 = vpack.c.b16 %v3612, %v3611
    %v3718 = vpack.c.b16 %v3614, %v3613
    %v3719 = vpack.c.b16 %v3616, %v3615
    %v3720 = vpack.c.b16 %v3618, %v3617
    %v3721 = vpack.c.b16 %v3620, %v3619
    %v3722 = vpack.c.b16 %v3622, %v3621
    %v3723 = vpack.c.b16 %v3624, %v3623
    %v3724 = vpack.c.b16 %v3626, %v3625
    %v3725 = vpack.c.b16 %v3628, %v3627
    %v3726 = vpack.c.b16 %v3630, %v3629
    %v3727 = vpack.c.b16 %v3632, %v3631
    %v3728 = vpack.c.b16 %v3634, %v3633
    %v3729 = vpack.c.b16 %v3636, %v3635
    %v3730 = vpack.c.b16 %v3638, %v3637
    %v3731 = vpack.c.b16 %v3640, %v3639
    %v3732 = vpack.c.b16 %v3642, %v3641
    %v3733 = vpack.c.b16 %v3644, %v3643
    %v3734 = vpack.c.b16 %v3646, %v3645
    %v3735 = vpack.c.b16 %v3648, %v3647
    %v3736 = vpack.c.b16 %v3650, %v3649
    %v3737 = vpack.c.b16 %v3652, %v3651
    %v3738 = vpack.c.b16 %v3654, %v3653
    %v3739 = vpack.c.b16 %v3656, %v3655
    %v3740 = vpack.c.b16 %v3658, %v3657
    %v3741 = vpack.c.b16 %v3660, %v3659
    %v3742 = vpack.c.b16 %v3662, %v3661
    %v3743 = vpack.c.b16 %v3664, %v3663
    %v3744 = vpack.c.b16 %v3666, %v3665
    %v3745 = vpack.c.b16 %v3668, %v3667
    %v3746 = vpack.c.b16 %v3670, %v3669
    %v3747 = vpack.c.b16 %v3672, %v3671
    %v3748 = vpack.c.b16 %v3674, %v3673
    %v3749 = vpack.c.b16 %v3676, %v3675
    %v3750 = vpack.c.b16 %v3678, %v3677
    %v3751 = vpack.c.b16 %v3680, %v3679
    %v3752 = vpack.c.b16 %v3682, %v3681
    %v3753 = vpack.c.b16 %v3684, %v3683
    %v3754 = vpack.c.b16 %v3686, %v3685
    %v3755 = vpack.c.b16 %v3688, %v3687
    %v3756 = vpack.c.b16 %v3690, %v3689
    %v3757 = vpack.c.b16 %v3692, %v3691
    %v3758 = vpack.c.b16 %v3694, %v3693
    %3823 = vmatprep.subr.bf16.mxu0 0
    %3824 = vmatpush1.bf16.msra.mxu0 %v3702
    %3825 = vmatprep.subr.bf16.mxu0 0
    %3826 = vmatpush1.bf16.msra.mxu0 %v3701
    %3827 = vmatprep.subr.bf16.mxu0 0
    %3828 = vmatpush1.bf16.msra.mxu0 %v3700
    %3829 = vmatprep.subr.bf16.mxu0 0
    %3830 = vmatpush1.bf16.msra.mxu0 %v3699
    %3831 = vmatprep.subr.bf16.mxu0 0
    %3832 = vmatpush1.bf16.msra.mxu0 %v3698
    %3833 = vmatprep.subr.bf16.mxu0 0
    %3834 = vmatpush1.bf16.msra.mxu0 %v3697
    %3835 = vmatprep.subr.bf16.mxu0 0
    %3836 = vmatpush1.bf16.msra.mxu0 %v3696
    %3837 = vmatprep.subr.bf16.mxu0 0
    %3838 = vmatpush1.bf16.msra.mxu0 %v3695
    %3839 = vmatprep.subr.bf16.mxu0 0
    %3840 = vmatpush2.bf16.msra.mxu0 %v3710
    %3841 = vmatprep.subr.bf16.mxu0 0
    %3842 = vmatpush2.bf16.msra.mxu0 %v3709
    %3843 = vmatprep.subr.bf16.mxu0 0
    %3844 = vmatpush2.bf16.msra.mxu0 %v3708
    %3845 = vmatprep.subr.bf16.mxu0 0
    %3846 = vmatpush2.bf16.msra.mxu0 %v3707
    %3847 = vmatprep.subr.bf16.mxu0 0
    %3848 = vmatpush2.bf16.msra.mxu0 %v3706
    %3849 = vmatprep.subr.bf16.mxu0 0
    %3850 = vmatpush2.bf16.msra.mxu0 %v3705
    %3851 = vmatprep.subr.bf16.mxu0 0
    %3852 = vmatpush2.bf16.msra.mxu0 %v3704
    %3853 = vmatprep.subr.bf16.mxu0 0
    %3854 = vmatpush2.bf16.msra.mxu0 %v3703
    %3855 = vmatprep.mubr.bf16.mxu0 %v3304
    %3856 = vmatmul.mubr.bf16.gmra.mxu0 %v3303
    %v3857 = vpop.f32.mrf.mxu0
    %v3858 = vadd.f32 0.0, %v3857
    %v3859 = vpop.f32.mrf.mxu0
    %v3860 = vpop.f32.mrf.mxu0
    %v3861 = vpop.f32.mrf.mxu0
    %3862 = vdwg.mxu0
    %3863 = vmatprep.subr.bf16.mxu0 0
    %3864 = vmatpush1.bf16.msra.mxu0 %v3718
    %3865 = vmatprep.subr.bf16.mxu0 0
    %3866 = vmatpush1.bf16.msra.mxu0 %v3717
    %3867 = vmatprep.subr.bf16.mxu0 0
    %3868 = vmatpush1.bf16.msra.mxu0 %v3716
    %3869 = vmatprep.subr.bf16.mxu0 0
    %3870 = vmatpush1.bf16.msra.mxu0 %v3715
    %3871 = vmatprep.subr.bf16.mxu0 0
    %3872 = vmatpush1.bf16.msra.mxu0 %v3714
    %3873 = vmatprep.subr.bf16.mxu0 0
    %3874 = vmatpush1.bf16.msra.mxu0 %v3713
    %3875 = vmatprep.subr.bf16.mxu0 0
    %3876 = vmatpush1.bf16.msra.mxu0 %v3712
    %3877 = vmatprep.subr.bf16.mxu0 0
    %3878 = vmatpush1.bf16.msra.mxu0 %v3711
    %3879 = vmatprep.subr.bf16.mxu0 0
    %3880 = vmatpush2.bf16.msra.mxu0 %v3726
    %3881 = vmatprep.subr.bf16.mxu0 0
    %3882 = vmatpush2.bf16.msra.mxu0 %v3725
    %3883 = vmatprep.subr.bf16.mxu0 0
    %3884 = vmatpush2.bf16.msra.mxu0 %v3724
    %3885 = vmatprep.subr.bf16.mxu0 0
    %3886 = vmatpush2.bf16.msra.mxu0 %v3723
    %3887 = vmatprep.subr.bf16.mxu0 0
    %3888 = vmatpush2.bf16.msra.mxu0 %v3722
    %3889 = vmatprep.subr.bf16.mxu0 0
    %3890 = vmatpush2.bf16.msra.mxu0 %v3721
    %3891 = vmatprep.subr.bf16.mxu0 0
    %3892 = vmatpush2.bf16.msra.mxu0 %v3720
    %3893 = vmatprep.subr.bf16.mxu0 0
    %3894 = vmatpush2.bf16.msra.mxu0 %v3719
    %3895 = vmatprep.mubr.bf16.mxu0 %v3306
    %3896 = vmatmul.mubr.bf16.gmra.mxu0 %v3305
    %v3897 = vpop.f32.mrf.mxu0
    %v3898 = vadd.f32 %v3858, %v3897
    %v3899 = vpop.f32.mrf.mxu0
    %v3900 = vpop.f32.mrf.mxu0
    %v3901 = vpop.f32.mrf.mxu0
    %3902 = vdwg.mxu0
    %3903 = vmatprep.subr.bf16.mxu0 0
    %3904 = vmatpush1.bf16.msra.mxu0 %v3734
    %3905 = vmatprep.subr.bf16.mxu0 0
    %3906 = vmatpush1.bf16.msra.mxu0 %v3733
    %3907 = vmatprep.subr.bf16.mxu0 0
    %3908 = vmatpush1.bf16.msra.mxu0 %v3732
    %3909 = vmatprep.subr.bf16.mxu0 0
    %3910 = vmatpush1.bf16.msra.mxu0 %v3731
    %3911 = vmatprep.subr.bf16.mxu0 0
    %3912 = vmatpush1.bf16.msra.mxu0 %v3730
    %3913 = vmatprep.subr.bf16.mxu0 0
    %3914 = vmatpush1.bf16.msra.mxu0 %v3729
    %3915 = vmatprep.subr.bf16.mxu0 0
    %3916 = vmatpush1.bf16.msra.mxu0 %v3728
    %3917 = vmatprep.subr.bf16.mxu0 0
    %3918 = vmatpush1.bf16.msra.mxu0 %v3727
    %3919 = vmatprep.subr.bf16.mxu0 0
    %3920 = vmatpush2.bf16.msra.mxu0 %v3742
    %3921 = vmatprep.subr.bf16.mxu0 0
    %3922 = vmatpush2.bf16.msra.mxu0 %v3741
    %3923 = vmatprep.subr.bf16.mxu0 0
    %3924 = vmatpush2.bf16.msra.mxu0 %v3740
    %3925 = vmatprep.subr.bf16.mxu0 0
    %3926 = vmatpush2.bf16.msra.mxu0 %v3739
    %3927 = vmatprep.subr.bf16.mxu0 0
    %3928 = vmatpush2.bf16.msra.mxu0 %v3738
    %3929 = vmatprep.subr.bf16.mxu0 0
    %3930 = vmatpush2.bf16.msra.mxu0 %v3737
    %3931 = vmatprep.subr.bf16.mxu0 0
    %3932 = vmatpush2.bf16.msra.mxu0 %v3736
    %3933 = vmatprep.subr.bf16.mxu0 0
    %3934 = vmatpush2.bf16.msra.mxu0 %v3735
    %3935 = vmatprep.mubr.bf16.mxu0 %v3308
    %3936 = vmatmul.mubr.bf16.gmra.mxu0 %v3307
    %v3937 = vpop.f32.mrf.mxu0
    %v3938 = vadd.f32 %v3898, %v3937
    %v3939 = vpop.f32.mrf.mxu0
    %v3940 = vpop.f32.mrf.mxu0
    %v3941 = vpop.f32.mrf.mxu0
    %3942 = vdwg.mxu0
    %3943 = vmatprep.subr.bf16.mxu0 0
    %3944 = vmatpush1.bf16.msra.mxu0 %v3750
    %3945 = vmatprep.subr.bf16.mxu0 0
    %3946 = vmatpush1.bf16.msra.mxu0 %v3749
    %3947 = vmatprep.subr.bf16.mxu0 0
    %3948 = vmatpush1.bf16.msra.mxu0 %v3748
    %3949 = vmatprep.subr.bf16.mxu0 0
    %3950 = vmatpush1.bf16.msra.mxu0 %v3747
    %3951 = vmatprep.subr.bf16.mxu0 0
    %3952 = vmatpush1.bf16.msra.mxu0 %v3746
    %3953 = vmatprep.subr.bf16.mxu0 0
    %3954 = vmatpush1.bf16.msra.mxu0 %v3745
    %3955 = vmatprep.subr.bf16.mxu0 0
    %3956 = vmatpush1.bf16.msra.mxu0 %v3744
    %3957 = vmatprep.subr.bf16.mxu0 0
    %3958 = vmatpush1.bf16.msra.mxu0 %v3743
    %3959 = vmatprep.subr.bf16.mxu0 0
    %3960 = vmatpush2.bf16.msra.mxu0 %v3758
    %3961 = vmatprep.subr.bf16.mxu0 0
    %3962 = vmatpush2.bf16.msra.mxu0 %v3757
    %3963 = vmatprep.subr.bf16.mxu0 0
    %3964 = vmatpush2.bf16.msra.mxu0 %v3756
    %3965 = vmatprep.subr.bf16.mxu0 0
    %3966 = vmatpush2.bf16.msra.mxu0 %v3755
    %3967 = vmatprep.subr.bf16.mxu0 0
    %3968 = vmatpush2.bf16.msra.mxu0 %v3754
    %3969 = vmatprep.subr.bf16.mxu0 0
    %3970 = vmatpush2.bf16.msra.mxu0 %v3753
    %3971 = vmatprep.subr.bf16.mxu0 0
    %3972 = vmatpush2.bf16.msra.mxu0 %v3752
    %3973 = vmatprep.subr.bf16.mxu0 0
    %3974 = vmatpush2.bf16.msra.mxu0 %v3751
    %3975 = vmatprep.mubr.bf16.mxu0 %v3310
    %3976 = vmatmul.mubr.bf16.gmra.mxu0 %v3309
    %v3977 = vpop.f32.mrf.mxu0
    %v3978 = vadd.f32 %v3938, %v3977
    %v3979 = vpop.f32.mrf.mxu0
    %v3980 = vpop.f32.mrf.mxu0
    %v3981 = vpop.f32.mrf.mxu0
    %3982 = vdwg.mxu0
    %v3983 = vadd.f32 %v3264, %v3978
    %v3984 = vmax.f32 %v3983, 0.0
    %vm3985 = vcmask 1041408
    %v3986 = vsel %vm3985, %v3984, -inf
    %3987 = vmax.xlane.f32.xlu0 %v3986
    %v3988 = vpop.xlane.xlu0 %3987
    %v3989 = vsub.f32 %v3984, %v3988
    %v3990 = vmul.f32 %v3989, 1.442695
    %v3991 = vpow.pop %v3990
    %vm3992 = vcmp.lt.s32.totalorder %v49, 100
    %v3993 = vsel %vm3992, 1, 0
    %vm3994 = vcmp.eq.s32.totalorder %v3993, 1
    %v3995 = vsel %vm3994, %v3991, 0.0
    %v3996 = vsel %vm3985, %v3995, 0.0
    %3997 = vadd.xlane.f32.xlu0 %v3996
    %v3998 = vpop.xlane.xlu0 %3997
    %v3999 = vrcp.pop %v3998
    %v4000 = vmul.f32 %v3995, %v3999
    %4001 = vst [vmem:[#allocation6] sm:$0x3] %v4000
    // Predicated region
    $region42: #{simple1dconvnet_forward.1} parent=1 // pred_check
      _
    $region43: #{simple1dconvnet_forward.1} parent=1 // pred_check_branch
      %4003 = sbr.rel (0) target = $region45
    $region44: #{simple1dconvnet_forward.1} parent=1 // pred_region
      %s4005 = ssub.s32 32, 32
      %4006 = vsyncadd [#allocation5], %s4005
      %s4008 = sshll.u32 [#allocation6], 4
      %s4009 = int_to_ptr.vmem [resolvable:$true] %s4008
      %4011 = dma.vmem_to_hbm [thread:$0]  %s4009, 32, %s9, [#allocation5]
    $region45: #{simple1dconvnet_forward.1} parent=1 // pred_fallthru
      _
    // Predicated region
    $region46: #{simple1dconvnet_forward.1} parent=1 // pred_check
      _
    $region47: #{simple1dconvnet_forward.1} parent=1 // pred_check_branch
      %4013 = sbr.rel (0) target = $region49
    $region48: #{simple1dconvnet_forward.1} parent=1 // pred_region
      %4014 = dma.done [#allocation5], 32
    $region49: #{simple1dconvnet_forward.1} parent=1 // pred_fallthru
      _
    %4015 = vsyncpa [#allocation4], 1
    %4016 = vsyncpa [#allocation5], 1

</llo_original>
